<compile_context>
chip_gen: v5e
topology: v5e:2x2
jax: 0.10.0
libtpu: 0.0.40
codegen_flags: <defaults>
</compile_context>

<pallas_src>
import functools

import jax
import jax.numpy as jnp
from jax.experimental import pallas as pl
from jax.experimental.pallas import tpu as pltpu


def _window_attn_kernel(x_ref, wqkv_ref, bqkv_ref, bias_ref, wp_ref, bp_ref,
                        o_ref, *, tb, n_tok, num_heads, head_dim):
    C = num_heads * head_dim

    # (tb*N, C) tile of token rows; cast once so all MXU feeds are bf16.
    xb = x_ref[...].astype(jnp.bfloat16)

    # Fused Q/K/V projection across ALL heads: one (tb*N, C) x (C, 3C) MXU op.
    # Softmax scale is already folded into the Q columns (wrapper).
    qkv = jnp.dot(xb, wqkv_ref[...],
                  preferred_element_type=jnp.float32) + bqkv_ref[...]

    def split_heads(cols_bf16):
        # (tb*N, C) -> (tb*nH, N, hd): head-major batch for the attention einsums.
        h4 = cols_bf16.reshape(tb, n_tok, num_heads, head_dim)
        return jnp.transpose(h4, (0, 2, 1, 3)).reshape(
            tb * num_heads, n_tok, head_dim)

    q = split_heads(qkv[:, :C].astype(jnp.bfloat16))
    k = split_heads(qkv[:, C:2 * C].astype(jnp.bfloat16))
    v = split_heads(qkv[:, 2 * C:].astype(jnp.bfloat16))

    # Scores for all (window, head) pairs in one batched einsum (single leading
    # batch dim -> known-good dot_general lowering).
    s = jnp.einsum('bqd,bkd->bqk', q, k,
                   preferred_element_type=jnp.float32)          # (tb*nH, N, N)
    s = s.reshape(tb, num_heads, n_tok, n_tok) + bias_ref[...][None]

    # Numerically stable softmax; denominator via EUP approx reciprocal.
    s = s - jnp.max(s, axis=-1, keepdims=True)
    p = jnp.exp(s)
    p = p * pl.reciprocal(jnp.sum(p, axis=-1, keepdims=True), approx=True)
    p = p.reshape(tb * num_heads, n_tok, n_tok).astype(jnp.bfloat16)

    out_h = jnp.einsum('bqk,bkd->bqd', p, v,
                       preferred_element_type=jnp.float32)      # (tb*nH, N, hd)
    out_h = out_h.reshape(tb, num_heads, n_tok, head_dim)
    out_h = jnp.transpose(out_h, (0, 2, 1, 3)).reshape(tb * n_tok, C)

    # Head concat folded into one (tb*N, C) x (C, C) output projection.
    y = jnp.dot(out_h.astype(jnp.bfloat16), wp_ref[...],
                preferred_element_type=jnp.float32) + bp_ref[...]
    o_ref[...] = y.astype(o_ref.dtype)


def _choose_tb(B_, target):
    """Windows per grid step. Cap at `target`; keep >= 2 blocks so the
    'parallel' window axis can shard across both v7x TensorCores. Awkward B_
    is handled by padding in the wrapper, not by shrinking tb to 1."""
    if B_ >= 2 * target:
        return target
    if B_ >= 2:
        return -(-B_ // 2)          # ceil(B_/2) -> exactly 2 blocks after pad
    return 1


def window_attention(x, wq, bq, wkv, bkv, rel_bias, wproj, bproj,
                     *, num_heads, window_block=256):
    """x: (B_, N, C) float32. Weights stored (in_features, out_features).
    rel_bias: (num_heads, N, N)."""
    B_, N, C = x.shape
    hd = C // num_heads
    scale = hd ** -0.5

    # --- one-time wrapper-side weight prep (free relative to the kernel) ---
    wq_s, bq_s = wq * scale, bq * scale                  # fold softmax scale
    wk, wv = wkv[:, :C], wkv[:, C:]                      # split fused KV
    bk, bv = bkv[:C], bkv[C:]
    w_qkv = jnp.concatenate([wq_s, wk, wv], axis=1).astype(jnp.bfloat16)  # (C, 3C)
    b_qkv = jnp.concatenate([bq_s, bk, bv]).reshape(1, 3 * C).astype(jnp.float32)
    w_p = wproj.astype(jnp.bfloat16)                     # (C, C)
    b_p = bproj.reshape(1, C).astype(jnp.float32)
    bias = rel_bias.astype(jnp.float32)                  # (nH, N, N), tiny

    # --- window tiling: large tb, pad B_ up to a multiple instead of shrinking ---
    tb = _choose_tb(B_, window_block)
    n_blocks = pl.cdiv(B_, tb)
    B_pad = n_blocks * tb

    # Present tokens as a lane-dense-as-possible 2-D slab of rows (tb*N, C) per step.
    x2 = x.reshape(B_ * N, C)
    if B_pad != B_:
        x2 = jnp.pad(x2, ((0, (B_pad - B_) * N), (0, 0)))

    # VMEM at tb=256, N=16, C=32 (f32/bf16): x 0.5 MiB + out 0.5 MiB (x2 buffered)
    # + qkv 1.5 MiB + scores 1 MiB + q/k/v/p ~1.5 MiB  =>  ~6 MiB, far under the
    # 32 MiB scoped default on v5e/v6e/v7x.
    kernel = functools.partial(_window_attn_kernel, tb=tb, n_tok=N,
                               num_heads=num_heads, head_dim=hd)

    grid_spec = pltpu.PrefetchScalarGridSpec(
        num_scalar_prefetch=0,
        grid=(n_blocks,),
        in_specs=[
            pl.BlockSpec((tb * N, C), lambda b: (b, 0)),            # x rows
            pl.BlockSpec((C, 3 * C), lambda b: (0, 0)),             # fused Wqkv (bf16)
            pl.BlockSpec((1, 3 * C), lambda b: (0, 0)),             # fused bqkv
            pl.BlockSpec((num_heads, N, N), lambda b: (0, 0, 0)),   # rel-pos bias
            pl.BlockSpec((C, C), lambda b: (0, 0)),                 # Wproj (bf16)
            pl.BlockSpec((1, C), lambda b: (0, 0)),                 # bproj
        ],
        out_specs=pl.BlockSpec((tb * N, C), lambda b: (b, 0)),
    )

    out = pl.pallas_call(
        kernel,
        out_shape=jax.ShapeDtypeStruct((B_pad * N, C), x.dtype),
        grid_spec=grid_spec,
        compiler_params=pltpu.CompilerParams(
            dimension_semantics=("parallel",),
            vmem_limit_bytes=32 * 1024 * 1024,
        ),
    )(x2, w_qkv, b_qkv, bias, w_p, b_p)

    return out[:B_ * N].reshape(B_, N, C)


def make_relative_position_bias(table, win_size):
    """table: ((2*wh-1)*(2*ww-1), num_heads)  ->  (num_heads, N, N)."""
    wh, ww = win_size
    coords_h = jnp.arange(wh)
    coords_w = jnp.arange(ww)
    coords = jnp.stack(jnp.meshgrid(coords_h, coords_w, indexing="ij"))   # (2, wh, ww)
    coords_flatten = coords.reshape(2, -1)                                # (2, N)
    rel = coords_flatten[:, :, None] - coords_flatten[:, None, :]         # (2, N, N)
    rel = rel.transpose(1, 2, 0)                                          # (N, N, 2)
    r0 = (rel[..., 0] + wh - 1) * (2 * ww - 1)
    r1 = rel[..., 1] + ww - 1
    rel_index = (r0 + r1).reshape(-1)                                     # (N*N,)
    N = wh * ww
    bias = table[rel_index].reshape(N, N, -1)                             # (N, N, nH)
    return jnp.transpose(bias, (2, 0, 1))                                 # (nH, N, N)


def reference_window_attention(x, wq, bq, wkv, bkv, rel_bias, wproj, bproj, *, num_heads):
    B_, N, C = x.shape
    hd = C // num_heads
    scale = hd ** -0.5
    q = x @ wq + bq
    kv = x @ wkv + bkv
    k, v = kv[..., :C], kv[..., C:]
    q = q.reshape(B_, N, num_heads, hd).transpose(0, 2, 1, 3)
    k = k.reshape(B_, N, num_heads, hd).transpose(0, 2, 1, 3)
    v = v.reshape(B_, N, num_heads, hd).transpose(0, 2, 1, 3)
    attn = (q * scale) @ jnp.swapaxes(k, -2, -1) + rel_bias[None]
    attn = jax.nn.softmax(attn, axis=-1)
    out = (attn @ v).transpose(0, 2, 1, 3).reshape(B_, N, C)
    return out @ wproj + bproj


if __name__ == "__main__":
    # Small configuration consistent with the module:
    # dim=32, num_heads=4, win_size=(4,4) -> N=16 tokens per window,
    # B_=8 windows (e.g. batch of 2 images x 4 windows each).
    dim = 32
    num_heads = 4
    win_size = (4, 4)
    N = win_size[0] * win_size[1]
    B_ = 8

    key = jax.random.PRNGKey(0)
    ks = jax.random.split(key, 8)

    x = jax.random.normal(ks[0], (B_, N, dim), jnp.float32)

    # Deterministic synthetic parameters (weights stored (in, out)).
    wq = jax.random.normal(ks[1], (dim, dim), jnp.float32) * 0.05
    bq = jax.random.normal(ks[2], (dim,), jnp.float32) * 0.05
    wkv = jax.random.normal(ks[3], (dim, 2 * dim), jnp.float32) * 0.05
    bkv = jax.random.normal(ks[4], (2 * dim,), jnp.float32) * 0.05
    wproj = jax.random.normal(ks[5], (dim, dim), jnp.float32) * 0.05
    bproj = jax.random.normal(ks[6], (dim,), jnp.float32) * 0.05

    # relative_position_bias_table ~ trunc_normal(std=0.02)
    table_size = (2 * win_size[0] - 1) * (2 * win_size[1] - 1)
    rel_table = 0.02 * jax.random.truncated_normal(
        ks[7], -2.0, 2.0, (table_size, num_heads), jnp.float32)
    rel_bias = make_relative_position_bias(rel_table, win_size)   # (nH, N, N)

    out = window_attention(x, wq, bq, wkv, bkv, rel_bias, wproj, bproj,
                           num_heads=num_heads)
    out = jax.block_until_ready(out)

    ref = reference_window_attention(x, wq, bq, wkv, bkv, rel_bias, wproj, bproj,
                                     num_heads=num_heads)
    ref = jax.block_until_ready(ref)

    assert out.shape == (B_, N, dim)
    assert jnp.allclose(out, ref, atol=2e-2, rtol=2e-2), "mismatch vs JAX reference"

    print("KERNEL_OK")
</pallas_src>

<mosaic_0001>
module attributes {stable_mosaic.version = 11 : i64} {
  func.func @_window_attn_kernel(%arg0: i32, %arg1: memref<64x32xf32, #tpu.memory_space<vmem>>, %arg2: memref<32x96xbf16, #tpu.memory_space<vmem>>, %arg3: memref<1x96xf32, #tpu.memory_space<vmem>>, %arg4: memref<4x16x16xf32, #tpu.memory_space<vmem>>, %arg5: memref<32x32xbf16, #tpu.memory_space<vmem>>, %arg6: memref<1x32xf32, #tpu.memory_space<vmem>>, %arg7: memref<64x32xf32, #tpu.memory_space<vmem>>) attributes {dimension_semantics = [#tpu.dimension_semantics<parallel>], iteration_bounds = array<i64: 2>, scalar_prefetch = 0 : i64, scratch_operands = 0 : i64, tpu.core_type = #tpu.core_type<tc>, window_params = [{transform_indices = @transform_0, window_bounds = array<i64: 64, 32>}, {pipeline_mode = #tpu.pipeline_mode<synchronous>, transform_indices = @transform_1, window_bounds = array<i64: 32, 96>}, {pipeline_mode = #tpu.pipeline_mode<synchronous>, transform_indices = @transform_2, window_bounds = array<i64: 1, 96>}, {pipeline_mode = #tpu.pipeline_mode<synchronous>, transform_indices = @transform_3, window_bounds = array<i64: 4, 16, 16>}, {pipeline_mode = #tpu.pipeline_mode<synchronous>, transform_indices = @transform_4, window_bounds = array<i64: 32, 32>}, {pipeline_mode = #tpu.pipeline_mode<synchronous>, transform_indices = @transform_5, window_bounds = array<i64: 1, 32>}, {transform_indices = @transform_6, window_bounds = array<i64: 64, 32>}]} {
    %c0 = arith.constant 0 : index
    %c0_0 = arith.constant 0 : index
    %0 = vector.load %arg1[%c0, %c0_0] : memref<64x32xf32, #tpu.memory_space<vmem>>, vector<64x32xf32>
    %1 = arith.truncf %0 : vector<64x32xf32> to vector<64x32xbf16>
    %c0_1 = arith.constant 0 : index
    %c0_2 = arith.constant 0 : index
    %2 = vector.load %arg2[%c0_1, %c0_2] : memref<32x96xbf16, #tpu.memory_space<vmem>>, vector<32x96xbf16>
    %cst = arith.constant dense<0.000000e+00> : vector<64x96xf32>
    %3 = tpu.matmul %1, %2, %cst {dimension_numbers = #tpu.dot_dimension_numbers<[1], [0], [0], [1], [0, 0, 1, 1], [], []>} : vector<64x32xbf16>, vector<32x96xbf16>, vector<64x96xf32> -> vector<64x96xf32>
    %c0_3 = arith.constant 0 : index
    %c0_4 = arith.constant 0 : index
    %4 = vector.load %arg3[%c0_3, %c0_4] : memref<1x96xf32, #tpu.memory_space<vmem>>, vector<1x96xf32>
    %5 = vector.broadcast %4 : vector<1x96xf32> to vector<64x96xf32>
    %6 = arith.addf %3, %5 : vector<64x96xf32>
    %7 = vector.extract_strided_slice %6 {offsets = [0, 0], sizes = [64, 32], strides = [1, 1]} : vector<64x96xf32> to vector<64x32xf32>
    %8 = arith.truncf %7 : vector<64x32xf32> to vector<64x32xbf16>
    %9 = vector.shape_cast %8 : vector<64x32xbf16> to vector<4x16x4x8xbf16>
    %10 = tpu.transpose %9, [0, 2, 1, 3] : vector<4x16x4x8xbf16> -> vector<4x4x16x8xbf16>
    %11 = vector.shape_cast %10 : vector<4x4x16x8xbf16> to vector<16x16x8xbf16>
    %12 = vector.extract_strided_slice %6 {offsets = [0, 32], sizes = [64, 32], strides = [1, 1]} : vector<64x96xf32> to vector<64x32xf32>
    %13 = arith.truncf %12 : vector<64x32xf32> to vector<64x32xbf16>
    %14 = vector.shape_cast %13 : vector<64x32xbf16> to vector<4x16x4x8xbf16>
    %15 = tpu.transpose %14, [0, 2, 1, 3] : vector<4x16x4x8xbf16> -> vector<4x4x16x8xbf16>
    %16 = vector.shape_cast %15 : vector<4x4x16x8xbf16> to vector<16x16x8xbf16>
    %17 = vector.extract_strided_slice %6 {offsets = [0, 64], sizes = [64, 32], strides = [1, 1]} : vector<64x96xf32> to vector<64x32xf32>
    %18 = arith.truncf %17 : vector<64x32xf32> to vector<64x32xbf16>
    %19 = vector.shape_cast %18 : vector<64x32xbf16> to vector<4x16x4x8xbf16>
    %20 = tpu.transpose %19, [0, 2, 1, 3] : vector<4x16x4x8xbf16> -> vector<4x4x16x8xbf16>
    %21 = vector.shape_cast %20 : vector<4x4x16x8xbf16> to vector<16x16x8xbf16>
    "tpu.trace_start"() <{level = 10 : i32, message = "bqd,bkd->bqk"}> : () -> ()
    %cst_5 = arith.constant dense<0.000000e+00> : vector<16x16x16xf32>
    %22 = tpu.matmul %11, %16, %cst_5 {dimension_numbers = #tpu.dot_dimension_numbers<[2], [2], [1], [1], [0, 0, 0, 1, 1, 1], [0], [0]>} : vector<16x16x8xbf16>, vector<16x16x8xbf16>, vector<16x16x16xf32> -> vector<16x16x16xf32>
    "tpu.trace_stop"() : () -> ()
    %23 = vector.shape_cast %22 : vector<16x16x16xf32> to vector<4x4x16x16xf32>
    %c0_6 = arith.constant 0 : index
    %c0_7 = arith.constant 0 : index
    %c0_8 = arith.constant 0 : index
    %24 = vector.load %arg4[%c0_6, %c0_7, %c0_8] : memref<4x16x16xf32, #tpu.memory_space<vmem>>, vector<4x16x16xf32>
    %25 = vector.shape_cast %24 : vector<4x16x16xf32> to vector<1x4x16x16xf32>
    %26 = vector.broadcast %25 : vector<1x4x16x16xf32> to vector<4x4x16x16xf32>
    %27 = arith.addf %23, %26 : vector<4x4x16x16xf32>
    %cst_9 = arith.constant dense<0xFF800000> : vector<4x4x16xf32>
    %28 = vector.multi_reduction <maximumf>, %27, %cst_9 [3] : vector<4x4x16x16xf32> to vector<4x4x16xf32>
    %29 = vector.shape_cast %28 : vector<4x4x16xf32> to vector<4x4x16x1xf32>
    %30 = vector.broadcast %29 : vector<4x4x16x1xf32> to vector<4x4x16x16xf32>
    %31 = arith.subf %27, %30 : vector<4x4x16x16xf32>
    %32 = math.exp %31 : vector<4x4x16x16xf32>
    %cst_10 = arith.constant dense<0.000000e+00> : vector<4x4x16xf32>
    %33 = vector.multi_reduction <add>, %32, %cst_10 [3] : vector<4x4x16x16xf32> to vector<4x4x16xf32>
    %34 = vector.shape_cast %33 : vector<4x4x16xf32> to vector<4x4x16x1xf32>
    %35 = tpu.reciprocal %34 {approx = true} : vector<4x4x16x1xf32> -> vector<4x4x16x1xf32>
    %36 = vector.broadcast %35 : vector<4x4x16x1xf32> to vector<4x4x16x16xf32>
    %37 = arith.mulf %32, %36 : vector<4x4x16x16xf32>
    %38 = vector.shape_cast %37 : vector<4x4x16x16xf32> to vector<16x16x16xf32>
    %39 = arith.truncf %38 : vector<16x16x16xf32> to vector<16x16x16xbf16>
    "tpu.trace_start"() <{level = 10 : i32, message = "bqk,bkd->bqd"}> : () -> ()
    %cst_11 = arith.constant dense<0.000000e+00> : vector<16x16x8xf32>
    %40 = tpu.matmul %39, %21, %cst_11 {dimension_numbers = #tpu.dot_dimension_numbers<[2], [1], [1], [2], [0, 0, 0, 1, 1, 2], [0], [0]>} : vector<16x16x16xbf16>, vector<16x16x8xbf16>, vector<16x16x8xf32> -> vector<16x16x8xf32>
    "tpu.trace_stop"() : () -> ()
    %41 = vector.shape_cast %40 : vector<16x16x8xf32> to vector<4x4x16x8xf32>
    %42 = tpu.transpose %41, [0, 2, 1, 3] : vector<4x4x16x8xf32> -> vector<4x16x4x8xf32>
    %43 = vector.shape_cast %42 : vector<4x16x4x8xf32> to vector<64x32xf32>
    %44 = arith.truncf %43 : vector<64x32xf32> to vector<64x32xbf16>
    %c0_12 = arith.constant 0 : index
    %c0_13 = arith.constant 0 : index
    %45 = vector.load %arg5[%c0_12, %c0_13] : memref<32x32xbf16, #tpu.memory_space<vmem>>, vector<32x32xbf16>
    %cst_14 = arith.constant dense<0.000000e+00> : vector<64x32xf32>
    %46 = tpu.matmul %44, %45, %cst_14 {dimension_numbers = #tpu.dot_dimension_numbers<[1], [0], [0], [1], [0, 0, 1, 1], [], []>} : vector<64x32xbf16>, vector<32x32xbf16>, vector<64x32xf32> -> vector<64x32xf32>
    %c0_15 = arith.constant 0 : index
    %c0_16 = arith.constant 0 : index
    %47 = vector.load %arg6[%c0_15, %c0_16] : memref<1x32xf32, #tpu.memory_space<vmem>>, vector<1x32xf32>
    %48 = vector.broadcast %47 : vector<1x32xf32> to vector<64x32xf32>
    %49 = arith.addf %46, %48 : vector<64x32xf32>
    %c0_17 = arith.constant 0 : index
    %c0_18 = arith.constant 0 : index
    %50 = vector.load %arg7[%c0_17, %c0_18] : memref<64x32xf32, #tpu.memory_space<vmem>>, vector<64x32xf32>
    tpu.vector_store %arg7[%c0_17, %c0_18], %49 {strides = array<i32>} : memref<64x32xf32, #tpu.memory_space<vmem>>, vector<64x32xf32>,
    return
  }
  func.func @transform_0(%arg0: i32) -> (i32, i32) {
    %c0_i32 = arith.constant 0 : i32
    %c0_i32_0 = arith.constant 0 : i32
    return %arg0, %c0_i32 : i32, i32
  }
  func.func @transform_1(%arg0: i32) -> (i32, i32) {
    %c0_i32 = arith.constant 0 : i32
    %c0_i32_0 = arith.constant 0 : i32
    %c0_i32_1 = arith.constant 0 : i32
    return %c0_i32, %c0_i32_0 : i32, i32
  }
  func.func @transform_2(%arg0: i32) -> (i32, i32) {
    %c0_i32 = arith.constant 0 : i32
    %c0_i32_0 = arith.constant 0 : i32
    %c0_i32_1 = arith.constant 0 : i32
    return %c0_i32, %c0_i32_0 : i32, i32
  }
  func.func @transform_3(%arg0: i32) -> (i32, i32, i32) {
    %c0_i32 = arith.constant 0 : i32
    %c0_i32_0 = arith.constant 0 : i32
    %c0_i32_1 = arith.constant 0 : i32
    %c0_i32_2 = arith.constant 0 : i32
    return %c0_i32, %c0_i32_0, %c0_i32_1 : i32, i32, i32
  }
  func.func @transform_4(%arg0: i32) -> (i32, i32) {
    %c0_i32 = arith.constant 0 : i32
    %c0_i32_0 = arith.constant 0 : i32
    %c0_i32_1 = arith.constant 0 : i32
    return %c0_i32, %c0_i32_0 : i32, i32
  }
  func.func @transform_5(%arg0: i32) -> (i32, i32) {
    %c0_i32 = arith.constant 0 : i32
    %c0_i32_0 = arith.constant 0 : i32
    %c0_i32_1 = arith.constant 0 : i32
    return %c0_i32, %c0_i32_0 : i32, i32
  }
  func.func @transform_6(%arg0: i32) -> (i32, i32) {
    %c0_i32 = arith.constant 0 : i32
    %c0_i32_0 = arith.constant 0 : i32
    return %arg0, %c0_i32 : i32, i32
  }
}

</mosaic_0001>

<llo_original>
// kernel: tpu_custom_call.1
$region0: #{tpu_custom_call.1}
  #allocation0 [shape = 'u32[]', space=smem, size = 0x4, offset = 0x4, fixed_abs, tag = 'smem constant byte address 0x4 - core index']
  #allocation1 [shape = 'u32[72,128]{1,0:T(1,128)}', space=vmem, size = 0x9000, scoped, tag = 'internal scratch']
  %s0 = inlined_call_operand.vmem [shape: f32[128,32], index: 0, kind: input, shape index: {}]
  %s1 = inlined_call_operand.vmem [shape: bf16[32,96], index: 1, kind: input, shape index: {}]
  %s2 = inlined_call_operand.vmem [shape: f32[1,96], index: 2, kind: input, shape index: {}]
  %s3 = inlined_call_operand.vmem [shape: f32[4,16,16], index: 3, kind: input, shape index: {}]
  %s4 = inlined_call_operand.vmem [shape: bf16[32,32], index: 4, kind: input, shape index: {}]
  %s5 = inlined_call_operand.vmem [shape: f32[1,32], index: 5, kind: input, shape index: {}]
  %s6 = inlined_call_operand.vmem [shape: f32[128,32], index: 6, kind: output, shape index: {}]
  %s7 = sld [smem:[#allocation0]]
  $region57: #{tpu_custom_call.1} parent=0
    _
  %s9 = ssub.s32 1, %s7
  %s10 = scalar_select 0, %s9, %s7
  loop: start=0, step=1, limit=4
  $region2: #{tpu_custom_call.1} parent=0 // loop_pre_header
    _
  $region3: #{tpu_custom_call.1} parent=0 // loop_header
    %s12 = sphi 0, %s16
    %p13 = scmp.ge.s32.totalorder %s12, 4
    %s22 = sphi 0, %s24
    %s25 = sphi 0, %s22
    %s26 = sphi 0, %s25
    %s42 = sphi 0, %s26
    %s46 = sphi 0, %s46
    %s48 = sphi 0, %s46
    %s49 = sphi 0, %s48
    %s63 = sphi 0, %s49
    %s67 = sphi 0, %s67
    %s69 = sphi 0, %s67
    %s70 = sphi 0, %s69
    %s84 = sphi 0, %s70
    %s88 = sphi 0, %s88
    %s90 = sphi 0, %s88
    %s91 = sphi 0, %s90
    %s105 = sphi 0, %s91
    %s109 = sphi 0, %s109
    %s111 = sphi 0, %s109
    %s112 = sphi 0, %s111
    %s126 = sphi 0, %s112
    %s130 = sphi 0, %s130
    %s132 = sphi 0, %s130
    %s133 = sphi 0, %s132
    %s147 = sphi 0, %s133
    %s153 = sphi 0, %s155
    %s156 = sphi 0, %s153
    %s157 = sphi 0, %s156
    %s173 = sphi 0, %s157
  $region4: #{tpu_custom_call.1} parent=0 // loop_header_branch
    %15 = sbr.rel (%p13) target = $region8
  $region5: #{tpu_custom_call.1} parent=0 // loop_body
    %s17 = ssub.s32 %s12, 1
    %s18 = ssub.s32 %s12, 2
    %s19 = sadd.s32 %s12, 1
    %s20 = ssub.s32 %s12, %s19
    %p21 = scmp.eq.s32.totalorder %s20, 0
    %s23 = sadd.s32 %s22, 1
    %s24 = scalar_select %p21, %s22, %s23
    %p27 = pneg %p21
    %p28 = scmp.eq.s32.totalorder %s12, 1
    %p29 = por %p27, %p28
    %p30 = scmp.ne.s32.totalorder %s22, %s25
    %p31 = scmp.eq.s32.totalorder %s12, 0
    %p32 = por %p30, %p31
    %p33 = scmp.ne.s32.totalorder %s22, %s25
    %p34 = scmp.eq.s32.totalorder %s17, 1
    %p35 = por %p33, %p34
    %p36 = scmp.ne.s32.totalorder %s25, %s26
    %p37 = scmp.eq.s32.totalorder %s17, 0
    %p38 = por %p36, %p37
    %p39 = scmp.ne.s32.totalorder %s25, %s26
    %p40 = scmp.eq.s32.totalorder %s18, 1
    %p41 = por %p39, %p40
    %p43 = scmp.ne.s32.totalorder %s26, %s42
    %p44 = scmp.eq.s32.totalorder %s18, 0
    %p45 = por %p43, %p44
    %s47 = sadd.s32 %s46, 1
    %p50 = scmp.eq.s32.totalorder %s12, 1
    %p51 = scmp.ne.s32.totalorder %s46, %s48
    %p52 = scmp.eq.s32.totalorder %s12, 0
    %p53 = por %p51, %p52
    %p54 = scmp.ne.s32.totalorder %s46, %s48
    %p55 = scmp.eq.s32.totalorder %s17, 1
    %p56 = por %p54, %p55
    %p57 = scmp.ne.s32.totalorder %s48, %s49
    %p58 = scmp.eq.s32.totalorder %s17, 0
    %p59 = por %p57, %p58
    %p60 = scmp.ne.s32.totalorder %s48, %s49
    %p61 = scmp.eq.s32.totalorder %s18, 1
    %p62 = por %p60, %p61
    %p64 = scmp.ne.s32.totalorder %s49, %s63
    %p65 = scmp.eq.s32.totalorder %s18, 0
    %p66 = por %p64, %p65
    %s68 = sadd.s32 %s67, 1
    %p71 = scmp.eq.s32.totalorder %s12, 1
    %p72 = scmp.ne.s32.totalorder %s67, %s69
    %p73 = scmp.eq.s32.totalorder %s12, 0
    %p74 = por %p72, %p73
    %p75 = scmp.ne.s32.totalorder %s67, %s69
    %p76 = scmp.eq.s32.totalorder %s17, 1
    %p77 = por %p75, %p76
    %p78 = scmp.ne.s32.totalorder %s69, %s70
    %p79 = scmp.eq.s32.totalorder %s17, 0
    %p80 = por %p78, %p79
    %p81 = scmp.ne.s32.totalorder %s69, %s70
    %p82 = scmp.eq.s32.totalorder %s18, 1
    %p83 = por %p81, %p82
    %p85 = scmp.ne.s32.totalorder %s70, %s84
    %p86 = scmp.eq.s32.totalorder %s18, 0
    %p87 = por %p85, %p86
    %s89 = sadd.s32 %s88, 1
    %p92 = scmp.eq.s32.totalorder %s12, 1
    %p93 = scmp.ne.s32.totalorder %s88, %s90
    %p94 = scmp.eq.s32.totalorder %s12, 0
    %p95 = por %p93, %p94
    %p96 = scmp.ne.s32.totalorder %s88, %s90
    %p97 = scmp.eq.s32.totalorder %s17, 1
    %p98 = por %p96, %p97
    %p99 = scmp.ne.s32.totalorder %s90, %s91
    %p100 = scmp.eq.s32.totalorder %s17, 0
    %p101 = por %p99, %p100
    %p102 = scmp.ne.s32.totalorder %s90, %s91
    %p103 = scmp.eq.s32.totalorder %s18, 1
    %p104 = por %p102, %p103
    %p106 = scmp.ne.s32.totalorder %s91, %s105
    %p107 = scmp.eq.s32.totalorder %s18, 0
    %p108 = por %p106, %p107
    %s110 = sadd.s32 %s109, 1
    %p113 = scmp.eq.s32.totalorder %s12, 1
    %p114 = scmp.ne.s32.totalorder %s109, %s111
    %p115 = scmp.eq.s32.totalorder %s12, 0
    %p116 = por %p114, %p115
    %p117 = scmp.ne.s32.totalorder %s109, %s111
    %p118 = scmp.eq.s32.totalorder %s17, 1
    %p119 = por %p117, %p118
    %p120 = scmp.ne.s32.totalorder %s111, %s112
    %p121 = scmp.eq.s32.totalorder %s17, 0
    %p122 = por %p120, %p121
    %p123 = scmp.ne.s32.totalorder %s111, %s112
    %p124 = scmp.eq.s32.totalorder %s18, 1
    %p125 = por %p123, %p124
    %p127 = scmp.ne.s32.totalorder %s112, %s126
    %p128 = scmp.eq.s32.totalorder %s18, 0
    %p129 = por %p127, %p128
    %s131 = sadd.s32 %s130, 1
    %p134 = scmp.eq.s32.totalorder %s12, 1
    %p135 = scmp.ne.s32.totalorder %s130, %s132
    %p136 = scmp.eq.s32.totalorder %s12, 0
    %p137 = por %p135, %p136
    %p138 = scmp.ne.s32.totalorder %s130, %s132
    %p139 = scmp.eq.s32.totalorder %s17, 1
    %p140 = por %p138, %p139
    %p141 = scmp.ne.s32.totalorder %s132, %s133
    %p142 = scmp.eq.s32.totalorder %s17, 0
    %p143 = por %p141, %p142
    %p144 = scmp.ne.s32.totalorder %s132, %s133
    %p145 = scmp.eq.s32.totalorder %s18, 1
    %p146 = por %p144, %p145
    %p148 = scmp.ne.s32.totalorder %s133, %s147
    %p149 = scmp.eq.s32.totalorder %s18, 0
    %p150 = por %p148, %p149
    %s151 = ssub.s32 %s12, %s19
    %p152 = scmp.eq.s32.totalorder %s151, 0
    %s154 = sadd.s32 %s153, 1
    %s155 = scalar_select %p152, %s153, %s154
    %p158 = pneg %p152
    %p159 = scmp.eq.s32.totalorder %s12, 1
    %p160 = por %p158, %p159
    %p161 = scmp.ne.s32.totalorder %s153, %s156
    %p162 = scmp.eq.s32.totalorder %s12, 0
    %p163 = por %p161, %p162
    %p164 = scmp.ne.s32.totalorder %s153, %s156
    %p165 = scmp.eq.s32.totalorder %s17, 1
    %p166 = por %p164, %p165
    %p167 = scmp.ne.s32.totalorder %s156, %s157
    %p168 = scmp.eq.s32.totalorder %s17, 0
    %p169 = por %p167, %p168
    %p170 = scmp.ne.s32.totalorder %s156, %s157
    %p171 = scmp.eq.s32.totalorder %s18, 1
    %p172 = por %p170, %p171
    %p174 = scmp.ne.s32.totalorder %s157, %s173
    %p175 = scmp.eq.s32.totalorder %s18, 0
    %p176 = por %p174, %p175
    %p177 = scmp.le.s32.totalorder 1, %s12
    %p178 = scmp.lt.s32.totalorder %s12, 3
    %p179 = pnand %p177, %p178
    %p180 = pneg %p179
    // Predicated region
    $region9: #{tpu_custom_call.1} parent=5 // pred_check
      _
    $region10: #{tpu_custom_call.1} parent=5 // pred_check_branch
      %182 = sbr.rel (%p179) target = $region12
    $region11: #{tpu_custom_call.1} parent=5 // pred_region
      %s183 = ssub.s32 %s12, 1
      // Predicated region
      $region13: #{tpu_custom_call.1} parent=11 // pred_check
        %p184 = pneg %p59
      $region14: #{tpu_custom_call.1} parent=11 // pred_check_branch
        %186 = sbr.rel (%p184) target = $region16
      $region15: #{tpu_custom_call.1} parent=11 // pred_region
        _
      $region16: #{tpu_custom_call.1} parent=11 // pred_fallthru
        _
      // Predicated region
      $region17: #{tpu_custom_call.1} parent=11 // pred_check
        %p187 = pneg %p80
      $region18: #{tpu_custom_call.1} parent=11 // pred_check_branch
        %189 = sbr.rel (%p187) target = $region20
      $region19: #{tpu_custom_call.1} parent=11 // pred_region
        _
      $region20: #{tpu_custom_call.1} parent=11 // pred_fallthru
        _
      // Predicated region
      $region21: #{tpu_custom_call.1} parent=11 // pred_check
        %p190 = pneg %p101
      $region22: #{tpu_custom_call.1} parent=11 // pred_check_branch
        %192 = sbr.rel (%p190) target = $region24
      $region23: #{tpu_custom_call.1} parent=11 // pred_region
        _
      $region24: #{tpu_custom_call.1} parent=11 // pred_fallthru
        _
      // Predicated region
      $region25: #{tpu_custom_call.1} parent=11 // pred_check
        %p193 = pneg %p122
      $region26: #{tpu_custom_call.1} parent=11 // pred_check_branch
        %195 = sbr.rel (%p193) target = $region28
      $region27: #{tpu_custom_call.1} parent=11 // pred_region
        _
      $region28: #{tpu_custom_call.1} parent=11 // pred_fallthru
        _
      // Predicated region
      $region29: #{tpu_custom_call.1} parent=11 // pred_check
        %p196 = pneg %p143
      $region30: #{tpu_custom_call.1} parent=11 // pred_check_branch
        %198 = sbr.rel (%p196) target = $region32
      $region31: #{tpu_custom_call.1} parent=11 // pred_region
        _
      $region32: #{tpu_custom_call.1} parent=11 // pred_fallthru
        _
    $region12: #{tpu_custom_call.1} parent=5 // pred_fallthru
      _
    %p199 = scmp.lt.s32.totalorder %s12, 2
    // Predicated region
    $region33: #{tpu_custom_call.1} parent=5 // pred_check
      %p200 = pneg %p199
    $region34: #{tpu_custom_call.1} parent=5 // pred_check_branch
      %202 = sbr.rel (%p200) target = $region36
    $region35: #{tpu_custom_call.1} parent=5 // pred_region
      // Predicated region
      $region37: #{tpu_custom_call.1} parent=35 // pred_check
        %p203 = pneg %p32
      $region38: #{tpu_custom_call.1} parent=35 // pred_check_branch
        %205 = sbr.rel (%p203) target = $region40
      $region39: #{tpu_custom_call.1} parent=35 // pred_region
        %s206 = smul.u32 8, %s12
        %p207 = scmp.lt.s32.totalorder %s206, 15
        %s208 = scalar_select %p207, %s206, 15
        %s209 = smul.addr %s208, 8
        %s210 = scalar_lea.vmem %s0, %s209
        %s211 = smul.u32 8, %s12
      $region40: #{tpu_custom_call.1} parent=35 // pred_fallthru
        _
    $region36: #{tpu_custom_call.1} parent=5 // pred_fallthru
      _
    %p212 = scmp.le.s32.totalorder 1, %s12
    %p213 = scmp.lt.s32.totalorder %s12, 3
    %p214 = pnand %p212, %p213
    %p215 = pneg %p214
    // Predicated region
    $region41: #{tpu_custom_call.1} parent=5 // pred_check
      _
    $region42: #{tpu_custom_call.1} parent=5 // pred_check_branch
      %217 = sbr.rel (%p214) target = $region44
    $region43: #{tpu_custom_call.1} parent=5 // pred_region
      %s218 = ssub.s32 %s12, 1
      %s219 = smul.u32 8, %s17
      %p220 = scmp.lt.s32.totalorder %s219, 15
      %s221 = scalar_select %p220, %s219, 15
      %s222 = smul.addr %s221, 8
      %s223 = scalar_lea.vmem %s0, %s222
      %p224 = pneg %p38
      %p225 = pneg %p35
      %p226 = pneg %p59
      %p227 = pneg %p56
      %p228 = pneg %p80
      %p229 = pneg %p77
      %p230 = pneg %p101
      %p231 = pneg %p98
      %p232 = pneg %p122
      %p233 = pneg %p119
      %p234 = pneg %p143
      %p235 = pneg %p140
      %p236 = pneg %p169
      %p237 = pneg %p166
      %s238 = smul.u32 8, %s17
      %p239 = scmp.lt.s32.totalorder %s238, 15
      %s240 = scalar_select %p239, %s238, 15
      %s241 = smul.addr %s240, 8
      %s242 = scalar_lea.vmem %s6, %s241
      %s243 = smul.u32 8, %s17
      %p244 = scmp.lt.s32.totalorder %s243, 15
      %s245 = scalar_select %p244, %s243, 15
      %s246 = smul.addr %s245, 8
      %s247 = scalar_lea.vmem %s0, %s246
      %s248 = smul.u32 8, %s17
      %s249 = smul.u32 8, %s17
      %p250 = scmp.lt.s32.totalorder %s249, 15
      %s251 = scalar_select %p250, %s249, 15
      %s252 = smul.addr %s251, 8
      %s253 = scalar_lea.vmem %s6, %s252
      %s254 = smul.u32 8, %s17
      %v256 = vld [vmem:[%s247] sm:$0xff]
      %v257 = vld [vmem:[%s247 + $0x8] sm:$0xff]
      %v258 = vld [vmem:[%s247 + $0x10] sm:$0xff]
      %v259 = vld [vmem:[%s247 + $0x18] sm:$0xff]
      %v260 = vld [vmem:[%s247 + $0x20] sm:$0xff]
      %v261 = vld [vmem:[%s247 + $0x28] sm:$0xff]
      %v262 = vld [vmem:[%s247 + $0x30] sm:$0xff]
      %v263 = vld [vmem:[%s247 + $0x38] sm:$0xff]
      %v264 = vpack.c.bf16 %v257, %v256
      %v265 = vpack.c.bf16 %v259, %v258
      %v266 = vpack.c.bf16 %v261, %v260
      %v267 = vpack.c.bf16 %v263, %v262
      %v268 = vld [vmem:[%s1] sm:$0xf]
      %v269 = vld [vmem:[%s1 + $0x4] sm:$0xf]
      %v270 = vld [vmem:[%s1 + $0x8] sm:$0xf]
      %v271 = vld [vmem:[%s1 + $0xc] sm:$0xf]
      %v272 = vld [vmem:[%s2] sm:$0x1]
      %v274 = vperm.slane %v272, 0
      %v280 = vunpack.c.l.b16 %v268
      %v281 = vunpack.c.l.b16 %v269
      %v282 = vunpack.c.l.b16 %v270
      %v283 = vunpack.c.l.b16 %v271
      %v284 = vpack.c.b16 %v281, %v280
      %v285 = vpack.c.b16 %v283, %v282
      %vm288 = vcmask 261120
      %v290 = vsel %vm288, %v264, 0
      %v293 = vsel %vm288, %v265, 0
      %v296 = vsel %vm288, %v266, 0
      %v299 = vsel %vm288, %v267, 0
      %301 = vmatpush.bf16.msra.mxu0 0
      %302 = vmatpush.bf16.msra.mxu0 0
      %303 = vmatpush.bf16.msra.mxu0 0
      %304 = vmatpush.bf16.msra.mxu0 0
      %305 = vmatpush.bf16.msra.mxu0 0
      %306 = vmatpush.bf16.msra.mxu0 0
      %307 = vmatpush.bf16.msra.mxu0 %v285
      %308 = vmatpush.bf16.msra.mxu0 %v284
      %309 = vmatmul.bf16.gmra.mxu0 %v290
      %v310 = vpop.f32.mrf.mxu0
      %v311 = vadd.f32 %v274, %v310
      %v312 = vpop.f32.mrf.mxu0
      %v313 = vadd.f32 %v274, %v312
      %314 = vmatmul.bf16.gmra.mxu0 %v293
      %v315 = vpop.f32.mrf.mxu0
      %v316 = vadd.f32 %v274, %v315
      %v317 = vpop.f32.mrf.mxu0
      %v318 = vadd.f32 %v274, %v317
      %319 = vmatmul.bf16.gmra.mxu0 %v296
      %v320 = vpop.f32.mrf.mxu0
      %v321 = vadd.f32 %v274, %v320
      %v322 = vpop.f32.mrf.mxu0
      %v323 = vadd.f32 %v274, %v322
      %324 = vmatmul.bf16.gmra.mxu0 %v299
      %v325 = vpop.f32.mrf.mxu0
      %v326 = vadd.f32 %v274, %v325
      %v327 = vpop.f32.mrf.mxu0
      %v328 = vadd.f32 %v274, %v327
      %329 = vdwg.mxu0
      %v330 = vpack.c.bf16 %v311, %v311
      %v331 = vpack.c.bf16 %v313, %v313
      %v332 = vpack.c.bf16 %v316, %v316
      %v333 = vpack.c.bf16 %v318, %v318
      %v334 = vpack.c.bf16 %v321, %v321
      %v335 = vpack.c.bf16 %v323, %v323
      %v336 = vpack.c.bf16 %v326, %v326
      %v337 = vpack.c.bf16 %v328, %v328
      %346 = vrot.lane.b32.xlu0 %v330, 120
      %v347 = vpop.permute.xlu0 %346
      %348 = vrot.lane.b32.xlu0 %v331, 120
      %v349 = vpop.permute.xlu0 %348
      %350 = vrot.lane.b32.xlu0 %v332, 120
      %v351 = vpop.permute.xlu0 %350
      %352 = vrot.lane.b32.xlu0 %v333, 120
      %v353 = vpop.permute.xlu0 %352
      %354 = vrot.lane.b32.xlu0 %v334, 120
      %v355 = vpop.permute.xlu0 %354
      %356 = vrot.lane.b32.xlu0 %v335, 120
      %v357 = vpop.permute.xlu0 %356
      %358 = vrot.lane.b32.xlu0 %v336, 120
      %v359 = vpop.permute.xlu0 %358
      %360 = vrot.lane.b32.xlu0 %v337, 120
      %v361 = vpop.permute.xlu0 %360
      %362 = vrot.lane.b32.xlu0 %v330, 112
      %v363 = vpop.permute.xlu0 %362
      %364 = vrot.lane.b32.xlu0 %v331, 112
      %v365 = vpop.permute.xlu0 %364
      %366 = vrot.lane.b32.xlu0 %v332, 112
      %v367 = vpop.permute.xlu0 %366
      %368 = vrot.lane.b32.xlu0 %v333, 112
      %v369 = vpop.permute.xlu0 %368
      %370 = vrot.lane.b32.xlu0 %v334, 112
      %v371 = vpop.permute.xlu0 %370
      %372 = vrot.lane.b32.xlu0 %v335, 112
      %v373 = vpop.permute.xlu0 %372
      %374 = vrot.lane.b32.xlu0 %v336, 112
      %v375 = vpop.permute.xlu0 %374
      %376 = vrot.lane.b32.xlu0 %v337, 112
      %v377 = vpop.permute.xlu0 %376
      %378 = vrot.lane.b32.xlu0 %v330, 104
      %v379 = vpop.permute.xlu0 %378
      %380 = vrot.lane.b32.xlu0 %v331, 104
      %v381 = vpop.permute.xlu0 %380
      %382 = vrot.lane.b32.xlu0 %v332, 104
      %v383 = vpop.permute.xlu0 %382
      %384 = vrot.lane.b32.xlu0 %v333, 104
      %v385 = vpop.permute.xlu0 %384
      %386 = vrot.lane.b32.xlu0 %v334, 104
      %v387 = vpop.permute.xlu0 %386
      %388 = vrot.lane.b32.xlu0 %v335, 104
      %v389 = vpop.permute.xlu0 %388
      %390 = vrot.lane.b32.xlu0 %v336, 104
      %v391 = vpop.permute.xlu0 %390
      %392 = vrot.lane.b32.xlu0 %v337, 104
      %v393 = vpop.permute.xlu0 %392
      %v396 = vpack.i.b16 %v347, %v330
      %v397 = vshrl.u32 %v330, 16
      %v398 = vshrl.u32 %v347, 16
      %v399 = vpack.i.b16 %v398, %v397
      %v402 = vpack.i.b16 %v379, %v363
      %v403 = vshrl.u32 %v363, 16
      %v404 = vshrl.u32 %v379, 16
      %v405 = vpack.i.b16 %v404, %v403
      %v408 = vpack.i.b16 %v349, %v331
      %v409 = vshrl.u32 %v331, 16
      %v410 = vshrl.u32 %v349, 16
      %v411 = vpack.i.b16 %v410, %v409
      %v414 = vpack.i.b16 %v381, %v365
      %v415 = vshrl.u32 %v365, 16
      %v416 = vshrl.u32 %v381, 16
      %v417 = vpack.i.b16 %v416, %v415
      %v420 = vpack.i.b16 %v351, %v332
      %v421 = vshrl.u32 %v332, 16
      %v422 = vshrl.u32 %v351, 16
      %v423 = vpack.i.b16 %v422, %v421
      %v426 = vpack.i.b16 %v383, %v367
      %v427 = vshrl.u32 %v367, 16
      %v428 = vshrl.u32 %v383, 16
      %v429 = vpack.i.b16 %v428, %v427
      %v432 = vpack.i.b16 %v353, %v333
      %v433 = vshrl.u32 %v333, 16
      %v434 = vshrl.u32 %v353, 16
      %v435 = vpack.i.b16 %v434, %v433
      %v438 = vpack.i.b16 %v385, %v369
      %v439 = vshrl.u32 %v369, 16
      %v440 = vshrl.u32 %v385, 16
      %v441 = vpack.i.b16 %v440, %v439
      %v444 = vpack.i.b16 %v355, %v334
      %v445 = vshrl.u32 %v334, 16
      %v446 = vshrl.u32 %v355, 16
      %v447 = vpack.i.b16 %v446, %v445
      %v450 = vpack.i.b16 %v387, %v371
      %v451 = vshrl.u32 %v371, 16
      %v452 = vshrl.u32 %v387, 16
      %v453 = vpack.i.b16 %v452, %v451
      %v456 = vpack.i.b16 %v357, %v335
      %v457 = vshrl.u32 %v335, 16
      %v458 = vshrl.u32 %v357, 16
      %v459 = vpack.i.b16 %v458, %v457
      %v462 = vpack.i.b16 %v389, %v373
      %v463 = vshrl.u32 %v373, 16
      %v464 = vshrl.u32 %v389, 16
      %v465 = vpack.i.b16 %v464, %v463
      %v468 = vpack.i.b16 %v359, %v336
      %v469 = vshrl.u32 %v336, 16
      %v470 = vshrl.u32 %v359, 16
      %v471 = vpack.i.b16 %v470, %v469
      %v474 = vpack.i.b16 %v391, %v375
      %v475 = vshrl.u32 %v375, 16
      %v476 = vshrl.u32 %v391, 16
      %v477 = vpack.i.b16 %v476, %v475
      %v480 = vpack.i.b16 %v361, %v337
      %v481 = vshrl.u32 %v337, 16
      %v482 = vshrl.u32 %v361, 16
      %v483 = vpack.i.b16 %v482, %v481
      %v486 = vpack.i.b16 %v393, %v377
      %v487 = vshrl.u32 %v377, 16
      %v488 = vshrl.u32 %v393, 16
      %v489 = vpack.i.b16 %v488, %v487
      %v492 = vunpack.c.l.s4 1983009808
      %v493 = vunpack.c.0.s8 %v492
      %v494 = vperm.slane %v396, %v493
      %v497 = vunpack.c.l.s4 1983009808
      %v498 = vunpack.c.0.s8 %v497
      %v499 = vperm.slane %v402, %v498
      %v500 = vrot.slane %v499, 4
      %vm501 = vcmask 1047556
      %v502 = vsel %vm501, %v500, %v494
      %v503 = vrot.slane %v494, 4
      %v504 = vsel %vm501, %v499, %v503
      %v506 = vunpack.c.l.s4 1934713408
      %v507 = vunpack.c.0.s8 %v506
      %v508 = vperm.slane %v502, %v507
      %v510 = vunpack.c.l.s4 1934713408
      %v511 = vunpack.c.0.s8 %v510
      %v512 = vperm.slane %v504, %v511
      %v513 = vrot.slane %v508, 4
      %v514 = vsel %vm501, 0, %v513
      %v515 = vrot.slane %v512, 4
      %v516 = vsel %vm501, 0, %v515
      %v519 = vunpack.c.l.s4 1983009808
      %v520 = vunpack.c.0.s8 %v519
      %v521 = vperm.slane %v399, %v520
      %v524 = vunpack.c.l.s4 1983009808
      %v525 = vunpack.c.0.s8 %v524
      %v526 = vperm.slane %v405, %v525
      %v527 = vrot.slane %v526, 4
      %v528 = vsel %vm501, %v527, %v521
      %v529 = vrot.slane %v521, 4
      %v530 = vsel %vm501, %v526, %v529
      %v532 = vunpack.c.l.s4 1934713408
      %v533 = vunpack.c.0.s8 %v532
      %v534 = vperm.slane %v528, %v533
      %v536 = vunpack.c.l.s4 1934713408
      %v537 = vunpack.c.0.s8 %v536
      %v538 = vperm.slane %v530, %v537
      %v539 = vrot.slane %v534, 4
      %v540 = vsel %vm501, 0, %v539
      %v541 = vrot.slane %v538, 4
      %v542 = vsel %vm501, 0, %v541
      %v545 = vunpack.c.l.s4 1983009808
      %v546 = vunpack.c.0.s8 %v545
      %v547 = vperm.slane %v408, %v546
      %v550 = vunpack.c.l.s4 1983009808
      %v551 = vunpack.c.0.s8 %v550
      %v552 = vperm.slane %v414, %v551
      %v553 = vrot.slane %v552, 4
      %v554 = vsel %vm501, %v553, %v547
      %v555 = vrot.slane %v547, 4
      %v556 = vsel %vm501, %v552, %v555
      %v558 = vunpack.c.l.s4 1934713408
      %v559 = vunpack.c.0.s8 %v558
      %v560 = vperm.slane %v554, %v559
      %v562 = vunpack.c.l.s4 1934713408
      %v563 = vunpack.c.0.s8 %v562
      %v564 = vperm.slane %v556, %v563
      %v565 = vrot.slane %v560, 4
      %v566 = vsel %vm501, 0, %v565
      %v567 = vrot.slane %v564, 4
      %v568 = vsel %vm501, 0, %v567
      %v571 = vunpack.c.l.s4 1983009808
      %v572 = vunpack.c.0.s8 %v571
      %v573 = vperm.slane %v411, %v572
      %v576 = vunpack.c.l.s4 1983009808
      %v577 = vunpack.c.0.s8 %v576
      %v578 = vperm.slane %v417, %v577
      %v579 = vrot.slane %v578, 4
      %v580 = vsel %vm501, %v579, %v573
      %v581 = vrot.slane %v573, 4
      %v582 = vsel %vm501, %v578, %v581
      %v584 = vunpack.c.l.s4 1934713408
      %v585 = vunpack.c.0.s8 %v584
      %v586 = vperm.slane %v580, %v585
      %v588 = vunpack.c.l.s4 1934713408
      %v589 = vunpack.c.0.s8 %v588
      %v590 = vperm.slane %v582, %v589
      %v591 = vrot.slane %v586, 4
      %v592 = vsel %vm501, 0, %v591
      %v593 = vrot.slane %v590, 4
      %v594 = vsel %vm501, 0, %v593
      %v597 = vunpack.c.l.s4 1983009808
      %v598 = vunpack.c.0.s8 %v597
      %v599 = vperm.slane %v420, %v598
      %v602 = vunpack.c.l.s4 1983009808
      %v603 = vunpack.c.0.s8 %v602
      %v604 = vperm.slane %v426, %v603
      %v605 = vrot.slane %v604, 4
      %v606 = vsel %vm501, %v605, %v599
      %v607 = vrot.slane %v599, 4
      %v608 = vsel %vm501, %v604, %v607
      %v610 = vunpack.c.l.s4 1934713408
      %v611 = vunpack.c.0.s8 %v610
      %v612 = vperm.slane %v606, %v611
      %v614 = vunpack.c.l.s4 1934713408
      %v615 = vunpack.c.0.s8 %v614
      %v616 = vperm.slane %v608, %v615
      %v617 = vrot.slane %v612, 4
      %v618 = vsel %vm501, 0, %v617
      %v619 = vrot.slane %v616, 4
      %v620 = vsel %vm501, 0, %v619
      %v623 = vunpack.c.l.s4 1983009808
      %v624 = vunpack.c.0.s8 %v623
      %v625 = vperm.slane %v423, %v624
      %v628 = vunpack.c.l.s4 1983009808
      %v629 = vunpack.c.0.s8 %v628
      %v630 = vperm.slane %v429, %v629
      %v631 = vrot.slane %v630, 4
      %v632 = vsel %vm501, %v631, %v625
      %v633 = vrot.slane %v625, 4
      %v634 = vsel %vm501, %v630, %v633
      %v636 = vunpack.c.l.s4 1934713408
      %v637 = vunpack.c.0.s8 %v636
      %v638 = vperm.slane %v632, %v637
      %v640 = vunpack.c.l.s4 1934713408
      %v641 = vunpack.c.0.s8 %v640
      %v642 = vperm.slane %v634, %v641
      %v643 = vrot.slane %v638, 4
      %v644 = vsel %vm501, 0, %v643
      %v645 = vrot.slane %v642, 4
      %v646 = vsel %vm501, 0, %v645
      %v649 = vunpack.c.l.s4 1983009808
      %v650 = vunpack.c.0.s8 %v649
      %v651 = vperm.slane %v432, %v650
      %v654 = vunpack.c.l.s4 1983009808
      %v655 = vunpack.c.0.s8 %v654
      %v656 = vperm.slane %v438, %v655
      %v657 = vrot.slane %v656, 4
      %v658 = vsel %vm501, %v657, %v651
      %v659 = vrot.slane %v651, 4
      %v660 = vsel %vm501, %v656, %v659
      %v662 = vunpack.c.l.s4 1934713408
      %v663 = vunpack.c.0.s8 %v662
      %v664 = vperm.slane %v658, %v663
      %v666 = vunpack.c.l.s4 1934713408
      %v667 = vunpack.c.0.s8 %v666
      %v668 = vperm.slane %v660, %v667
      %v669 = vrot.slane %v664, 4
      %v670 = vsel %vm501, 0, %v669
      %v671 = vrot.slane %v668, 4
      %v672 = vsel %vm501, 0, %v671
      %v675 = vunpack.c.l.s4 1983009808
      %v676 = vunpack.c.0.s8 %v675
      %v677 = vperm.slane %v435, %v676
      %v680 = vunpack.c.l.s4 1983009808
      %v681 = vunpack.c.0.s8 %v680
      %v682 = vperm.slane %v441, %v681
      %v683 = vrot.slane %v682, 4
      %v684 = vsel %vm501, %v683, %v677
      %v685 = vrot.slane %v677, 4
      %v686 = vsel %vm501, %v682, %v685
      %v688 = vunpack.c.l.s4 1934713408
      %v689 = vunpack.c.0.s8 %v688
      %v690 = vperm.slane %v684, %v689
      %v692 = vunpack.c.l.s4 1934713408
      %v693 = vunpack.c.0.s8 %v692
      %v694 = vperm.slane %v686, %v693
      %v695 = vrot.slane %v690, 4
      %v696 = vsel %vm501, 0, %v695
      %v697 = vrot.slane %v694, 4
      %v698 = vsel %vm501, 0, %v697
      %v701 = vunpack.c.l.s4 1983009808
      %v702 = vunpack.c.0.s8 %v701
      %v703 = vperm.slane %v444, %v702
      %v706 = vunpack.c.l.s4 1983009808
      %v707 = vunpack.c.0.s8 %v706
      %v708 = vperm.slane %v450, %v707
      %v709 = vrot.slane %v708, 4
      %v710 = vsel %vm501, %v709, %v703
      %v711 = vrot.slane %v703, 4
      %v712 = vsel %vm501, %v708, %v711
      %v714 = vunpack.c.l.s4 1934713408
      %v715 = vunpack.c.0.s8 %v714
      %v716 = vperm.slane %v710, %v715
      %v718 = vunpack.c.l.s4 1934713408
      %v719 = vunpack.c.0.s8 %v718
      %v720 = vperm.slane %v712, %v719
      %v721 = vrot.slane %v716, 4
      %v722 = vsel %vm501, 0, %v721
      %v723 = vrot.slane %v720, 4
      %v724 = vsel %vm501, 0, %v723
      %v727 = vunpack.c.l.s4 1983009808
      %v728 = vunpack.c.0.s8 %v727
      %v729 = vperm.slane %v447, %v728
      %v732 = vunpack.c.l.s4 1983009808
      %v733 = vunpack.c.0.s8 %v732
      %v734 = vperm.slane %v453, %v733
      %v735 = vrot.slane %v734, 4
      %v736 = vsel %vm501, %v735, %v729
      %v737 = vrot.slane %v729, 4
      %v738 = vsel %vm501, %v734, %v737
      %v740 = vunpack.c.l.s4 1934713408
      %v741 = vunpack.c.0.s8 %v740
      %v742 = vperm.slane %v736, %v741
      %v744 = vunpack.c.l.s4 1934713408
      %v745 = vunpack.c.0.s8 %v744
      %v746 = vperm.slane %v738, %v745
      %v747 = vrot.slane %v742, 4
      %v748 = vsel %vm501, 0, %v747
      %v749 = vrot.slane %v746, 4
      %v750 = vsel %vm501, 0, %v749
      %v753 = vunpack.c.l.s4 1983009808
      %v754 = vunpack.c.0.s8 %v753
      %v755 = vperm.slane %v456, %v754
      %v758 = vunpack.c.l.s4 1983009808
      %v759 = vunpack.c.0.s8 %v758
      %v760 = vperm.slane %v462, %v759
      %v761 = vrot.slane %v760, 4
      %v762 = vsel %vm501, %v761, %v755
      %v763 = vrot.slane %v755, 4
      %v764 = vsel %vm501, %v760, %v763
      %v766 = vunpack.c.l.s4 1934713408
      %v767 = vunpack.c.0.s8 %v766
      %v768 = vperm.slane %v762, %v767
      %v770 = vunpack.c.l.s4 1934713408
      %v771 = vunpack.c.0.s8 %v770
      %v772 = vperm.slane %v764, %v771
      %v773 = vrot.slane %v768, 4
      %v774 = vsel %vm501, 0, %v773
      %v775 = vrot.slane %v772, 4
      %v776 = vsel %vm501, 0, %v775
      %v779 = vunpack.c.l.s4 1983009808
      %v780 = vunpack.c.0.s8 %v779
      %v781 = vperm.slane %v459, %v780
      %v784 = vunpack.c.l.s4 1983009808
      %v785 = vunpack.c.0.s8 %v784
      %v786 = vperm.slane %v465, %v785
      %v787 = vrot.slane %v786, 4
      %v788 = vsel %vm501, %v787, %v781
      %v789 = vrot.slane %v781, 4
      %v790 = vsel %vm501, %v786, %v789
      %v792 = vunpack.c.l.s4 1934713408
      %v793 = vunpack.c.0.s8 %v792
      %v794 = vperm.slane %v788, %v793
      %v796 = vunpack.c.l.s4 1934713408
      %v797 = vunpack.c.0.s8 %v796
      %v798 = vperm.slane %v790, %v797
      %v799 = vrot.slane %v794, 4
      %v800 = vsel %vm501, 0, %v799
      %v801 = vrot.slane %v798, 4
      %v802 = vsel %vm501, 0, %v801
      %v805 = vunpack.c.l.s4 1983009808
      %v806 = vunpack.c.0.s8 %v805
      %v807 = vperm.slane %v468, %v806
      %v810 = vunpack.c.l.s4 1983009808
      %v811 = vunpack.c.0.s8 %v810
      %v812 = vperm.slane %v474, %v811
      %v813 = vrot.slane %v812, 4
      %v814 = vsel %vm501, %v813, %v807
      %v815 = vrot.slane %v807, 4
      %v816 = vsel %vm501, %v812, %v815
      %v818 = vunpack.c.l.s4 1934713408
      %v819 = vunpack.c.0.s8 %v818
      %v820 = vperm.slane %v814, %v819
      %v822 = vunpack.c.l.s4 1934713408
      %v823 = vunpack.c.0.s8 %v822
      %v824 = vperm.slane %v816, %v823
      %v825 = vrot.slane %v820, 4
      %v826 = vsel %vm501, 0, %v825
      %v827 = vrot.slane %v824, 4
      %v828 = vsel %vm501, 0, %v827
      %v831 = vunpack.c.l.s4 1983009808
      %v832 = vunpack.c.0.s8 %v831
      %v833 = vperm.slane %v471, %v832
      %v836 = vunpack.c.l.s4 1983009808
      %v837 = vunpack.c.0.s8 %v836
      %v838 = vperm.slane %v477, %v837
      %v839 = vrot.slane %v838, 4
      %v840 = vsel %vm501, %v839, %v833
      %v841 = vrot.slane %v833, 4
      %v842 = vsel %vm501, %v838, %v841
      %v844 = vunpack.c.l.s4 1934713408
      %v845 = vunpack.c.0.s8 %v844
      %v846 = vperm.slane %v840, %v845
      %v848 = vunpack.c.l.s4 1934713408
      %v849 = vunpack.c.0.s8 %v848
      %v850 = vperm.slane %v842, %v849
      %v851 = vrot.slane %v846, 4
      %v852 = vsel %vm501, 0, %v851
      %v853 = vrot.slane %v850, 4
      %v854 = vsel %vm501, 0, %v853
      %v857 = vunpack.c.l.s4 1983009808
      %v858 = vunpack.c.0.s8 %v857
      %v859 = vperm.slane %v480, %v858
      %v862 = vunpack.c.l.s4 1983009808
      %v863 = vunpack.c.0.s8 %v862
      %v864 = vperm.slane %v486, %v863
      %v865 = vrot.slane %v864, 4
      %v866 = vsel %vm501, %v865, %v859
      %v867 = vrot.slane %v859, 4
      %v868 = vsel %vm501, %v864, %v867
      %v870 = vunpack.c.l.s4 1934713408
      %v871 = vunpack.c.0.s8 %v870
      %v872 = vperm.slane %v866, %v871
      %v874 = vunpack.c.l.s4 1934713408
      %v875 = vunpack.c.0.s8 %v874
      %v876 = vperm.slane %v868, %v875
      %v877 = vrot.slane %v872, 4
      %v878 = vsel %vm501, 0, %v877
      %v879 = vrot.slane %v876, 4
      %v880 = vsel %vm501, 0, %v879
      %v883 = vunpack.c.l.s4 1983009808
      %v884 = vunpack.c.0.s8 %v883
      %v885 = vperm.slane %v483, %v884
      %v888 = vunpack.c.l.s4 1983009808
      %v889 = vunpack.c.0.s8 %v888
      %v890 = vperm.slane %v489, %v889
      %v891 = vrot.slane %v890, 4
      %v892 = vsel %vm501, %v891, %v885
      %v893 = vrot.slane %v885, 4
      %v894 = vsel %vm501, %v890, %v893
      %v896 = vunpack.c.l.s4 1934713408
      %v897 = vunpack.c.0.s8 %v896
      %v898 = vperm.slane %v892, %v897
      %v900 = vunpack.c.l.s4 1934713408
      %v901 = vunpack.c.0.s8 %v900
      %v902 = vperm.slane %v894, %v901
      %v903 = vrot.slane %v898, 4
      %v904 = vsel %vm501, 0, %v903
      %v905 = vrot.slane %v902, 4
      %v906 = vsel %vm501, 0, %v905
      %v907 = vsel %vm501, %v515, %v508
      %v909 = vunpack.c.l.s4 1983009808
      %v910 = vunpack.c.0.s8 %v909
      %v911 = vperm.slane %v907, %v910
      %v912 = vrot.slane %v516, 4
      %v913 = vsel %vm501, %v912, %v514
      %v915 = vunpack.c.l.s4 1983009808
      %v916 = vunpack.c.0.s8 %v915
      %v917 = vperm.slane %v913, %v916
      %v918 = vrot.slane %v917, 4
      %v919 = vsel %vm501, %v918, %v911
      %v921 = vunpack.c.l.s4 1934713408
      %v922 = vunpack.c.0.s8 %v921
      %v923 = vperm.slane %v919, %v922
      %v924 = vrot.slane %v923, 4
      %v925 = vsel %vm501, 0, %v924
      %v926 = vsel %vm501, %v541, %v534
      %v928 = vunpack.c.l.s4 1983009808
      %v929 = vunpack.c.0.s8 %v928
      %v930 = vperm.slane %v926, %v929
      %v931 = vrot.slane %v542, 4
      %v932 = vsel %vm501, %v931, %v540
      %v934 = vunpack.c.l.s4 1983009808
      %v935 = vunpack.c.0.s8 %v934
      %v936 = vperm.slane %v932, %v935
      %v937 = vrot.slane %v936, 4
      %v938 = vsel %vm501, %v937, %v930
      %v940 = vunpack.c.l.s4 1934713408
      %v941 = vunpack.c.0.s8 %v940
      %v942 = vperm.slane %v938, %v941
      %v943 = vrot.slane %v942, 4
      %v944 = vsel %vm501, 0, %v943
      %v945 = vsel %vm501, %v567, %v560
      %v947 = vunpack.c.l.s4 1983009808
      %v948 = vunpack.c.0.s8 %v947
      %v949 = vperm.slane %v945, %v948
      %v950 = vrot.slane %v568, 4
      %v951 = vsel %vm501, %v950, %v566
      %v953 = vunpack.c.l.s4 1983009808
      %v954 = vunpack.c.0.s8 %v953
      %v955 = vperm.slane %v951, %v954
      %v956 = vrot.slane %v955, 4
      %v957 = vsel %vm501, %v956, %v949
      %v959 = vunpack.c.l.s4 1934713408
      %v960 = vunpack.c.0.s8 %v959
      %v961 = vperm.slane %v957, %v960
      %v962 = vrot.slane %v961, 4
      %v963 = vsel %vm501, 0, %v962
      %v964 = vsel %vm501, %v593, %v586
      %v966 = vunpack.c.l.s4 1983009808
      %v967 = vunpack.c.0.s8 %v966
      %v968 = vperm.slane %v964, %v967
      %v969 = vrot.slane %v594, 4
      %v970 = vsel %vm501, %v969, %v592
      %v972 = vunpack.c.l.s4 1983009808
      %v973 = vunpack.c.0.s8 %v972
      %v974 = vperm.slane %v970, %v973
      %v975 = vrot.slane %v974, 4
      %v976 = vsel %vm501, %v975, %v968
      %v978 = vunpack.c.l.s4 1934713408
      %v979 = vunpack.c.0.s8 %v978
      %v980 = vperm.slane %v976, %v979
      %v981 = vrot.slane %v980, 4
      %v982 = vsel %vm501, 0, %v981
      %v983 = vsel %vm501, %v619, %v612
      %v985 = vunpack.c.l.s4 1983009808
      %v986 = vunpack.c.0.s8 %v985
      %v987 = vperm.slane %v983, %v986
      %v988 = vrot.slane %v620, 4
      %v989 = vsel %vm501, %v988, %v618
      %v991 = vunpack.c.l.s4 1983009808
      %v992 = vunpack.c.0.s8 %v991
      %v993 = vperm.slane %v989, %v992
      %v994 = vrot.slane %v993, 4
      %v995 = vsel %vm501, %v994, %v987
      %v997 = vunpack.c.l.s4 1934713408
      %v998 = vunpack.c.0.s8 %v997
      %v999 = vperm.slane %v995, %v998
      %v1000 = vrot.slane %v999, 4
      %v1001 = vsel %vm501, 0, %v1000
      %v1002 = vsel %vm501, %v645, %v638
      %v1004 = vunpack.c.l.s4 1983009808
      %v1005 = vunpack.c.0.s8 %v1004
      %v1006 = vperm.slane %v1002, %v1005
      %v1007 = vrot.slane %v646, 4
      %v1008 = vsel %vm501, %v1007, %v644
      %v1010 = vunpack.c.l.s4 1983009808
      %v1011 = vunpack.c.0.s8 %v1010
      %v1012 = vperm.slane %v1008, %v1011
      %v1013 = vrot.slane %v1012, 4
      %v1014 = vsel %vm501, %v1013, %v1006
      %v1016 = vunpack.c.l.s4 1934713408
      %v1017 = vunpack.c.0.s8 %v1016
      %v1018 = vperm.slane %v1014, %v1017
      %v1019 = vrot.slane %v1018, 4
      %v1020 = vsel %vm501, 0, %v1019
      %v1021 = vsel %vm501, %v671, %v664
      %v1023 = vunpack.c.l.s4 1983009808
      %v1024 = vunpack.c.0.s8 %v1023
      %v1025 = vperm.slane %v1021, %v1024
      %v1026 = vrot.slane %v672, 4
      %v1027 = vsel %vm501, %v1026, %v670
      %v1029 = vunpack.c.l.s4 1983009808
      %v1030 = vunpack.c.0.s8 %v1029
      %v1031 = vperm.slane %v1027, %v1030
      %v1032 = vrot.slane %v1031, 4
      %v1033 = vsel %vm501, %v1032, %v1025
      %v1035 = vunpack.c.l.s4 1934713408
      %v1036 = vunpack.c.0.s8 %v1035
      %v1037 = vperm.slane %v1033, %v1036
      %v1038 = vrot.slane %v1037, 4
      %v1039 = vsel %vm501, 0, %v1038
      %v1040 = vsel %vm501, %v697, %v690
      %v1042 = vunpack.c.l.s4 1983009808
      %v1043 = vunpack.c.0.s8 %v1042
      %v1044 = vperm.slane %v1040, %v1043
      %v1045 = vrot.slane %v698, 4
      %v1046 = vsel %vm501, %v1045, %v696
      %v1048 = vunpack.c.l.s4 1983009808
      %v1049 = vunpack.c.0.s8 %v1048
      %v1050 = vperm.slane %v1046, %v1049
      %v1051 = vrot.slane %v1050, 4
      %v1052 = vsel %vm501, %v1051, %v1044
      %v1054 = vunpack.c.l.s4 1934713408
      %v1055 = vunpack.c.0.s8 %v1054
      %v1056 = vperm.slane %v1052, %v1055
      %v1057 = vrot.slane %v1056, 4
      %v1058 = vsel %vm501, 0, %v1057
      %v1059 = vsel %vm501, %v723, %v716
      %v1061 = vunpack.c.l.s4 1983009808
      %v1062 = vunpack.c.0.s8 %v1061
      %v1063 = vperm.slane %v1059, %v1062
      %v1064 = vrot.slane %v724, 4
      %v1065 = vsel %vm501, %v1064, %v722
      %v1067 = vunpack.c.l.s4 1983009808
      %v1068 = vunpack.c.0.s8 %v1067
      %v1069 = vperm.slane %v1065, %v1068
      %v1070 = vrot.slane %v1069, 4
      %v1071 = vsel %vm501, %v1070, %v1063
      %v1073 = vunpack.c.l.s4 1934713408
      %v1074 = vunpack.c.0.s8 %v1073
      %v1075 = vperm.slane %v1071, %v1074
      %v1076 = vrot.slane %v1075, 4
      %v1077 = vsel %vm501, 0, %v1076
      %v1078 = vsel %vm501, %v749, %v742
      %v1080 = vunpack.c.l.s4 1983009808
      %v1081 = vunpack.c.0.s8 %v1080
      %v1082 = vperm.slane %v1078, %v1081
      %v1083 = vrot.slane %v750, 4
      %v1084 = vsel %vm501, %v1083, %v748
      %v1086 = vunpack.c.l.s4 1983009808
      %v1087 = vunpack.c.0.s8 %v1086
      %v1088 = vperm.slane %v1084, %v1087
      %v1089 = vrot.slane %v1088, 4
      %v1090 = vsel %vm501, %v1089, %v1082
      %v1092 = vunpack.c.l.s4 1934713408
      %v1093 = vunpack.c.0.s8 %v1092
      %v1094 = vperm.slane %v1090, %v1093
      %v1095 = vrot.slane %v1094, 4
      %v1096 = vsel %vm501, 0, %v1095
      %v1097 = vsel %vm501, %v775, %v768
      %v1099 = vunpack.c.l.s4 1983009808
      %v1100 = vunpack.c.0.s8 %v1099
      %v1101 = vperm.slane %v1097, %v1100
      %v1102 = vrot.slane %v776, 4
      %v1103 = vsel %vm501, %v1102, %v774
      %v1105 = vunpack.c.l.s4 1983009808
      %v1106 = vunpack.c.0.s8 %v1105
      %v1107 = vperm.slane %v1103, %v1106
      %v1108 = vrot.slane %v1107, 4
      %v1109 = vsel %vm501, %v1108, %v1101
      %v1111 = vunpack.c.l.s4 1934713408
      %v1112 = vunpack.c.0.s8 %v1111
      %v1113 = vperm.slane %v1109, %v1112
      %v1114 = vrot.slane %v1113, 4
      %v1115 = vsel %vm501, 0, %v1114
      %v1116 = vsel %vm501, %v801, %v794
      %v1118 = vunpack.c.l.s4 1983009808
      %v1119 = vunpack.c.0.s8 %v1118
      %v1120 = vperm.slane %v1116, %v1119
      %v1121 = vrot.slane %v802, 4
      %v1122 = vsel %vm501, %v1121, %v800
      %v1124 = vunpack.c.l.s4 1983009808
      %v1125 = vunpack.c.0.s8 %v1124
      %v1126 = vperm.slane %v1122, %v1125
      %v1127 = vrot.slane %v1126, 4
      %v1128 = vsel %vm501, %v1127, %v1120
      %v1130 = vunpack.c.l.s4 1934713408
      %v1131 = vunpack.c.0.s8 %v1130
      %v1132 = vperm.slane %v1128, %v1131
      %v1133 = vrot.slane %v1132, 4
      %v1134 = vsel %vm501, 0, %v1133
      %v1135 = vsel %vm501, %v827, %v820
      %v1137 = vunpack.c.l.s4 1983009808
      %v1138 = vunpack.c.0.s8 %v1137
      %v1139 = vperm.slane %v1135, %v1138
      %v1140 = vrot.slane %v828, 4
      %v1141 = vsel %vm501, %v1140, %v826
      %v1143 = vunpack.c.l.s4 1983009808
      %v1144 = vunpack.c.0.s8 %v1143
      %v1145 = vperm.slane %v1141, %v1144
      %v1146 = vrot.slane %v1145, 4
      %v1147 = vsel %vm501, %v1146, %v1139
      %v1149 = vunpack.c.l.s4 1934713408
      %v1150 = vunpack.c.0.s8 %v1149
      %v1151 = vperm.slane %v1147, %v1150
      %v1152 = vrot.slane %v1151, 4
      %v1153 = vsel %vm501, 0, %v1152
      %v1154 = vsel %vm501, %v853, %v846
      %v1156 = vunpack.c.l.s4 1983009808
      %v1157 = vunpack.c.0.s8 %v1156
      %v1158 = vperm.slane %v1154, %v1157
      %v1159 = vrot.slane %v854, 4
      %v1160 = vsel %vm501, %v1159, %v852
      %v1162 = vunpack.c.l.s4 1983009808
      %v1163 = vunpack.c.0.s8 %v1162
      %v1164 = vperm.slane %v1160, %v1163
      %v1165 = vrot.slane %v1164, 4
      %v1166 = vsel %vm501, %v1165, %v1158
      %v1168 = vunpack.c.l.s4 1934713408
      %v1169 = vunpack.c.0.s8 %v1168
      %v1170 = vperm.slane %v1166, %v1169
      %v1171 = vrot.slane %v1170, 4
      %v1172 = vsel %vm501, 0, %v1171
      %v1173 = vsel %vm501, %v879, %v872
      %v1175 = vunpack.c.l.s4 1983009808
      %v1176 = vunpack.c.0.s8 %v1175
      %v1177 = vperm.slane %v1173, %v1176
      %v1178 = vrot.slane %v880, 4
      %v1179 = vsel %vm501, %v1178, %v878
      %v1181 = vunpack.c.l.s4 1983009808
      %v1182 = vunpack.c.0.s8 %v1181
      %v1183 = vperm.slane %v1179, %v1182
      %v1184 = vrot.slane %v1183, 4
      %v1185 = vsel %vm501, %v1184, %v1177
      %v1187 = vunpack.c.l.s4 1934713408
      %v1188 = vunpack.c.0.s8 %v1187
      %v1189 = vperm.slane %v1185, %v1188
      %v1190 = vrot.slane %v1189, 4
      %v1191 = vsel %vm501, 0, %v1190
      %v1192 = vsel %vm501, %v905, %v898
      %v1194 = vunpack.c.l.s4 1983009808
      %v1195 = vunpack.c.0.s8 %v1194
      %v1196 = vperm.slane %v1192, %v1195
      %v1197 = vrot.slane %v906, 4
      %v1198 = vsel %vm501, %v1197, %v904
      %v1200 = vunpack.c.l.s4 1983009808
      %v1201 = vunpack.c.0.s8 %v1200
      %v1202 = vperm.slane %v1198, %v1201
      %v1203 = vrot.slane %v1202, 4
      %v1204 = vsel %vm501, %v1203, %v1196
      %v1206 = vunpack.c.l.s4 1934713408
      %v1207 = vunpack.c.0.s8 %v1206
      %v1208 = vperm.slane %v1204, %v1207
      %v1209 = vrot.slane %v1208, 4
      %v1210 = vsel %vm501, 0, %v1209
      %v1213 = vpack.i.b16 %v942, %v923
      %v1214 = vshrl.u32 %v923, 16
      %v1215 = vshrl.u32 %v942, 16
      %v1216 = vpack.i.b16 %v1215, %v1214
      %v1219 = vpack.i.b16 %v944, %v925
      %v1220 = vshrl.u32 %v925, 16
      %v1221 = vshrl.u32 %v944, 16
      %v1222 = vpack.i.b16 %v1221, %v1220
      %v1225 = vpack.i.b16 %v980, %v961
      %v1226 = vshrl.u32 %v961, 16
      %v1227 = vshrl.u32 %v980, 16
      %v1228 = vpack.i.b16 %v1227, %v1226
      %v1231 = vpack.i.b16 %v982, %v963
      %v1232 = vshrl.u32 %v963, 16
      %v1233 = vshrl.u32 %v982, 16
      %v1234 = vpack.i.b16 %v1233, %v1232
      %v1237 = vpack.i.b16 %v1018, %v999
      %v1238 = vshrl.u32 %v999, 16
      %v1239 = vshrl.u32 %v1018, 16
      %v1240 = vpack.i.b16 %v1239, %v1238
      %v1243 = vpack.i.b16 %v1020, %v1001
      %v1244 = vshrl.u32 %v1001, 16
      %v1245 = vshrl.u32 %v1020, 16
      %v1246 = vpack.i.b16 %v1245, %v1244
      %v1249 = vpack.i.b16 %v1056, %v1037
      %v1250 = vshrl.u32 %v1037, 16
      %v1251 = vshrl.u32 %v1056, 16
      %v1252 = vpack.i.b16 %v1251, %v1250
      %v1255 = vpack.i.b16 %v1058, %v1039
      %v1256 = vshrl.u32 %v1039, 16
      %v1257 = vshrl.u32 %v1058, 16
      %v1258 = vpack.i.b16 %v1257, %v1256
      %v1261 = vpack.i.b16 %v1094, %v1075
      %v1262 = vshrl.u32 %v1075, 16
      %v1263 = vshrl.u32 %v1094, 16
      %v1264 = vpack.i.b16 %v1263, %v1262
      %v1267 = vpack.i.b16 %v1096, %v1077
      %v1268 = vshrl.u32 %v1077, 16
      %v1269 = vshrl.u32 %v1096, 16
      %v1270 = vpack.i.b16 %v1269, %v1268
      %v1273 = vpack.i.b16 %v1132, %v1113
      %v1274 = vshrl.u32 %v1113, 16
      %v1275 = vshrl.u32 %v1132, 16
      %v1276 = vpack.i.b16 %v1275, %v1274
      %v1279 = vpack.i.b16 %v1134, %v1115
      %v1280 = vshrl.u32 %v1115, 16
      %v1281 = vshrl.u32 %v1134, 16
      %v1282 = vpack.i.b16 %v1281, %v1280
      %v1285 = vpack.i.b16 %v1170, %v1151
      %v1286 = vshrl.u32 %v1151, 16
      %v1287 = vshrl.u32 %v1170, 16
      %v1288 = vpack.i.b16 %v1287, %v1286
      %v1291 = vpack.i.b16 %v1172, %v1153
      %v1292 = vshrl.u32 %v1153, 16
      %v1293 = vshrl.u32 %v1172, 16
      %v1294 = vpack.i.b16 %v1293, %v1292
      %v1297 = vpack.i.b16 %v1208, %v1189
      %v1298 = vshrl.u32 %v1189, 16
      %v1299 = vshrl.u32 %v1208, 16
      %v1300 = vpack.i.b16 %v1299, %v1298
      %v1303 = vpack.i.b16 %v1210, %v1191
      %v1304 = vshrl.u32 %v1191, 16
      %v1305 = vshrl.u32 %v1210, 16
      %v1306 = vpack.i.b16 %v1305, %v1304
      %1307 = vrot.lane.b32.xlu0 %v330, 96
      %v1308 = vpop.permute.xlu0 %1307
      %1309 = vrot.lane.b32.xlu0 %v331, 96
      %v1310 = vpop.permute.xlu0 %1309
      %1311 = vrot.lane.b32.xlu0 %v332, 96
      %v1312 = vpop.permute.xlu0 %1311
      %1313 = vrot.lane.b32.xlu0 %v333, 96
      %v1314 = vpop.permute.xlu0 %1313
      %1315 = vrot.lane.b32.xlu0 %v334, 96
      %v1316 = vpop.permute.xlu0 %1315
      %1317 = vrot.lane.b32.xlu0 %v335, 96
      %v1318 = vpop.permute.xlu0 %1317
      %1319 = vrot.lane.b32.xlu0 %v336, 96
      %v1320 = vpop.permute.xlu0 %1319
      %1321 = vrot.lane.b32.xlu0 %v337, 96
      %v1322 = vpop.permute.xlu0 %1321
      %1323 = vrot.lane.b32.xlu0 %v347, 96
      %v1324 = vpop.permute.xlu0 %1323
      %1325 = vrot.lane.b32.xlu0 %v349, 96
      %v1326 = vpop.permute.xlu0 %1325
      %1327 = vrot.lane.b32.xlu0 %v351, 96
      %v1328 = vpop.permute.xlu0 %1327
      %1329 = vrot.lane.b32.xlu0 %v353, 96
      %v1330 = vpop.permute.xlu0 %1329
      %1331 = vrot.lane.b32.xlu0 %v355, 96
      %v1332 = vpop.permute.xlu0 %1331
      %1333 = vrot.lane.b32.xlu0 %v357, 96
      %v1334 = vpop.permute.xlu0 %1333
      %1335 = vrot.lane.b32.xlu0 %v359, 96
      %v1336 = vpop.permute.xlu0 %1335
      %1337 = vrot.lane.b32.xlu0 %v361, 96
      %v1338 = vpop.permute.xlu0 %1337
      %1339 = vrot.lane.b32.xlu0 %v363, 96
      %v1340 = vpop.permute.xlu0 %1339
      %1341 = vrot.lane.b32.xlu0 %v365, 96
      %v1342 = vpop.permute.xlu0 %1341
      %1343 = vrot.lane.b32.xlu0 %v367, 96
      %v1344 = vpop.permute.xlu0 %1343
      %1345 = vrot.lane.b32.xlu0 %v369, 96
      %v1346 = vpop.permute.xlu0 %1345
      %1347 = vrot.lane.b32.xlu0 %v371, 96
      %v1348 = vpop.permute.xlu0 %1347
      %1349 = vrot.lane.b32.xlu0 %v373, 96
      %v1350 = vpop.permute.xlu0 %1349
      %1351 = vrot.lane.b32.xlu0 %v375, 96
      %v1352 = vpop.permute.xlu0 %1351
      %1353 = vrot.lane.b32.xlu0 %v377, 96
      %v1354 = vpop.permute.xlu0 %1353
      %1355 = vrot.lane.b32.xlu0 %v379, 96
      %v1356 = vpop.permute.xlu0 %1355
      %1357 = vrot.lane.b32.xlu0 %v381, 96
      %v1358 = vpop.permute.xlu0 %1357
      %1359 = vrot.lane.b32.xlu0 %v383, 96
      %v1360 = vpop.permute.xlu0 %1359
      %1361 = vrot.lane.b32.xlu0 %v385, 96
      %v1362 = vpop.permute.xlu0 %1361
      %1363 = vrot.lane.b32.xlu0 %v387, 96
      %v1364 = vpop.permute.xlu0 %1363
      %1365 = vrot.lane.b32.xlu0 %v389, 96
      %v1366 = vpop.permute.xlu0 %1365
      %1367 = vrot.lane.b32.xlu0 %v391, 96
      %v1368 = vpop.permute.xlu0 %1367
      %1369 = vrot.lane.b32.xlu0 %v393, 96
      %v1370 = vpop.permute.xlu0 %1369
      %v1373 = vpack.i.b16 %v1324, %v1308
      %v1374 = vshrl.u32 %v1308, 16
      %v1375 = vshrl.u32 %v1324, 16
      %v1376 = vpack.i.b16 %v1375, %v1374
      %v1379 = vpack.i.b16 %v1356, %v1340
      %v1380 = vshrl.u32 %v1340, 16
      %v1381 = vshrl.u32 %v1356, 16
      %v1382 = vpack.i.b16 %v1381, %v1380
      %v1385 = vpack.i.b16 %v1326, %v1310
      %v1386 = vshrl.u32 %v1310, 16
      %v1387 = vshrl.u32 %v1326, 16
      %v1388 = vpack.i.b16 %v1387, %v1386
      %v1391 = vpack.i.b16 %v1358, %v1342
      %v1392 = vshrl.u32 %v1342, 16
      %v1393 = vshrl.u32 %v1358, 16
      %v1394 = vpack.i.b16 %v1393, %v1392
      %v1397 = vpack.i.b16 %v1328, %v1312
      %v1398 = vshrl.u32 %v1312, 16
      %v1399 = vshrl.u32 %v1328, 16
      %v1400 = vpack.i.b16 %v1399, %v1398
      %v1403 = vpack.i.b16 %v1360, %v1344
      %v1404 = vshrl.u32 %v1344, 16
      %v1405 = vshrl.u32 %v1360, 16
      %v1406 = vpack.i.b16 %v1405, %v1404
      %v1409 = vpack.i.b16 %v1330, %v1314
      %v1410 = vshrl.u32 %v1314, 16
      %v1411 = vshrl.u32 %v1330, 16
      %v1412 = vpack.i.b16 %v1411, %v1410
      %v1415 = vpack.i.b16 %v1362, %v1346
      %v1416 = vshrl.u32 %v1346, 16
      %v1417 = vshrl.u32 %v1362, 16
      %v1418 = vpack.i.b16 %v1417, %v1416
      %v1421 = vpack.i.b16 %v1332, %v1316
      %v1422 = vshrl.u32 %v1316, 16
      %v1423 = vshrl.u32 %v1332, 16
      %v1424 = vpack.i.b16 %v1423, %v1422
      %v1427 = vpack.i.b16 %v1364, %v1348
      %v1428 = vshrl.u32 %v1348, 16
      %v1429 = vshrl.u32 %v1364, 16
      %v1430 = vpack.i.b16 %v1429, %v1428
      %v1433 = vpack.i.b16 %v1334, %v1318
      %v1434 = vshrl.u32 %v1318, 16
      %v1435 = vshrl.u32 %v1334, 16
      %v1436 = vpack.i.b16 %v1435, %v1434
      %v1439 = vpack.i.b16 %v1366, %v1350
      %v1440 = vshrl.u32 %v1350, 16
      %v1441 = vshrl.u32 %v1366, 16
      %v1442 = vpack.i.b16 %v1441, %v1440
      %v1445 = vpack.i.b16 %v1336, %v1320
      %v1446 = vshrl.u32 %v1320, 16
      %v1447 = vshrl.u32 %v1336, 16
      %v1448 = vpack.i.b16 %v1447, %v1446
      %v1451 = vpack.i.b16 %v1368, %v1352
      %v1452 = vshrl.u32 %v1352, 16
      %v1453 = vshrl.u32 %v1368, 16
      %v1454 = vpack.i.b16 %v1453, %v1452
      %v1457 = vpack.i.b16 %v1338, %v1322
      %v1458 = vshrl.u32 %v1322, 16
      %v1459 = vshrl.u32 %v1338, 16
      %v1460 = vpack.i.b16 %v1459, %v1458
      %v1463 = vpack.i.b16 %v1370, %v1354
      %v1464 = vshrl.u32 %v1354, 16
      %v1465 = vshrl.u32 %v1370, 16
      %v1466 = vpack.i.b16 %v1465, %v1464
      %v1469 = vunpack.c.l.s4 1983009808
      %v1470 = vunpack.c.0.s8 %v1469
      %v1471 = vperm.slane %v1373, %v1470
      %v1474 = vunpack.c.l.s4 1983009808
      %v1475 = vunpack.c.0.s8 %v1474
      %v1476 = vperm.slane %v1379, %v1475
      %v1477 = vrot.slane %v1476, 4
      %v1478 = vsel %vm501, %v1477, %v1471
      %v1479 = vrot.slane %v1471, 4
      %v1480 = vsel %vm501, %v1476, %v1479
      %v1482 = vunpack.c.l.s4 1934713408
      %v1483 = vunpack.c.0.s8 %v1482
      %v1484 = vperm.slane %v1478, %v1483
      %v1486 = vunpack.c.l.s4 1934713408
      %v1487 = vunpack.c.0.s8 %v1486
      %v1488 = vperm.slane %v1480, %v1487
      %v1489 = vrot.slane %v1484, 4
      %v1490 = vsel %vm501, 0, %v1489
      %v1491 = vrot.slane %v1488, 4
      %v1492 = vsel %vm501, 0, %v1491
      %v1495 = vunpack.c.l.s4 1983009808
      %v1496 = vunpack.c.0.s8 %v1495
      %v1497 = vperm.slane %v1376, %v1496
      %v1500 = vunpack.c.l.s4 1983009808
      %v1501 = vunpack.c.0.s8 %v1500
      %v1502 = vperm.slane %v1382, %v1501
      %v1503 = vrot.slane %v1502, 4
      %v1504 = vsel %vm501, %v1503, %v1497
      %v1505 = vrot.slane %v1497, 4
      %v1506 = vsel %vm501, %v1502, %v1505
      %v1508 = vunpack.c.l.s4 1934713408
      %v1509 = vunpack.c.0.s8 %v1508
      %v1510 = vperm.slane %v1504, %v1509
      %v1512 = vunpack.c.l.s4 1934713408
      %v1513 = vunpack.c.0.s8 %v1512
      %v1514 = vperm.slane %v1506, %v1513
      %v1515 = vrot.slane %v1510, 4
      %v1516 = vsel %vm501, 0, %v1515
      %v1517 = vrot.slane %v1514, 4
      %v1518 = vsel %vm501, 0, %v1517
      %v1521 = vunpack.c.l.s4 1983009808
      %v1522 = vunpack.c.0.s8 %v1521
      %v1523 = vperm.slane %v1385, %v1522
      %v1526 = vunpack.c.l.s4 1983009808
      %v1527 = vunpack.c.0.s8 %v1526
      %v1528 = vperm.slane %v1391, %v1527
      %v1529 = vrot.slane %v1528, 4
      %v1530 = vsel %vm501, %v1529, %v1523
      %v1531 = vrot.slane %v1523, 4
      %v1532 = vsel %vm501, %v1528, %v1531
      %v1534 = vunpack.c.l.s4 1934713408
      %v1535 = vunpack.c.0.s8 %v1534
      %v1536 = vperm.slane %v1530, %v1535
      %v1538 = vunpack.c.l.s4 1934713408
      %v1539 = vunpack.c.0.s8 %v1538
      %v1540 = vperm.slane %v1532, %v1539
      %v1541 = vrot.slane %v1536, 4
      %v1542 = vsel %vm501, 0, %v1541
      %v1543 = vrot.slane %v1540, 4
      %v1544 = vsel %vm501, 0, %v1543
      %v1547 = vunpack.c.l.s4 1983009808
      %v1548 = vunpack.c.0.s8 %v1547
      %v1549 = vperm.slane %v1388, %v1548
      %v1552 = vunpack.c.l.s4 1983009808
      %v1553 = vunpack.c.0.s8 %v1552
      %v1554 = vperm.slane %v1394, %v1553
      %v1555 = vrot.slane %v1554, 4
      %v1556 = vsel %vm501, %v1555, %v1549
      %v1557 = vrot.slane %v1549, 4
      %v1558 = vsel %vm501, %v1554, %v1557
      %v1560 = vunpack.c.l.s4 1934713408
      %v1561 = vunpack.c.0.s8 %v1560
      %v1562 = vperm.slane %v1556, %v1561
      %v1564 = vunpack.c.l.s4 1934713408
      %v1565 = vunpack.c.0.s8 %v1564
      %v1566 = vperm.slane %v1558, %v1565
      %v1567 = vrot.slane %v1562, 4
      %v1568 = vsel %vm501, 0, %v1567
      %v1569 = vrot.slane %v1566, 4
      %v1570 = vsel %vm501, 0, %v1569
      %v1573 = vunpack.c.l.s4 1983009808
      %v1574 = vunpack.c.0.s8 %v1573
      %v1575 = vperm.slane %v1397, %v1574
      %v1578 = vunpack.c.l.s4 1983009808
      %v1579 = vunpack.c.0.s8 %v1578
      %v1580 = vperm.slane %v1403, %v1579
      %v1581 = vrot.slane %v1580, 4
      %v1582 = vsel %vm501, %v1581, %v1575
      %v1583 = vrot.slane %v1575, 4
      %v1584 = vsel %vm501, %v1580, %v1583
      %v1586 = vunpack.c.l.s4 1934713408
      %v1587 = vunpack.c.0.s8 %v1586
      %v1588 = vperm.slane %v1582, %v1587
      %v1590 = vunpack.c.l.s4 1934713408
      %v1591 = vunpack.c.0.s8 %v1590
      %v1592 = vperm.slane %v1584, %v1591
      %v1593 = vrot.slane %v1588, 4
      %v1594 = vsel %vm501, 0, %v1593
      %v1595 = vrot.slane %v1592, 4
      %v1596 = vsel %vm501, 0, %v1595
      %v1599 = vunpack.c.l.s4 1983009808
      %v1600 = vunpack.c.0.s8 %v1599
      %v1601 = vperm.slane %v1400, %v1600
      %v1604 = vunpack.c.l.s4 1983009808
      %v1605 = vunpack.c.0.s8 %v1604
      %v1606 = vperm.slane %v1406, %v1605
      %v1607 = vrot.slane %v1606, 4
      %v1608 = vsel %vm501, %v1607, %v1601
      %v1609 = vrot.slane %v1601, 4
      %v1610 = vsel %vm501, %v1606, %v1609
      %v1612 = vunpack.c.l.s4 1934713408
      %v1613 = vunpack.c.0.s8 %v1612
      %v1614 = vperm.slane %v1608, %v1613
      %v1616 = vunpack.c.l.s4 1934713408
      %v1617 = vunpack.c.0.s8 %v1616
      %v1618 = vperm.slane %v1610, %v1617
      %v1619 = vrot.slane %v1614, 4
      %v1620 = vsel %vm501, 0, %v1619
      %v1621 = vrot.slane %v1618, 4
      %v1622 = vsel %vm501, 0, %v1621
      %v1625 = vunpack.c.l.s4 1983009808
      %v1626 = vunpack.c.0.s8 %v1625
      %v1627 = vperm.slane %v1409, %v1626
      %v1630 = vunpack.c.l.s4 1983009808
      %v1631 = vunpack.c.0.s8 %v1630
      %v1632 = vperm.slane %v1415, %v1631
      %v1633 = vrot.slane %v1632, 4
      %v1634 = vsel %vm501, %v1633, %v1627
      %v1635 = vrot.slane %v1627, 4
      %v1636 = vsel %vm501, %v1632, %v1635
      %v1638 = vunpack.c.l.s4 1934713408
      %v1639 = vunpack.c.0.s8 %v1638
      %v1640 = vperm.slane %v1634, %v1639
      %v1642 = vunpack.c.l.s4 1934713408
      %v1643 = vunpack.c.0.s8 %v1642
      %v1644 = vperm.slane %v1636, %v1643
      %v1645 = vrot.slane %v1640, 4
      %v1646 = vsel %vm501, 0, %v1645
      %v1647 = vrot.slane %v1644, 4
      %v1648 = vsel %vm501, 0, %v1647
      %v1651 = vunpack.c.l.s4 1983009808
      %v1652 = vunpack.c.0.s8 %v1651
      %v1653 = vperm.slane %v1412, %v1652
      %v1656 = vunpack.c.l.s4 1983009808
      %v1657 = vunpack.c.0.s8 %v1656
      %v1658 = vperm.slane %v1418, %v1657
      %v1659 = vrot.slane %v1658, 4
      %v1660 = vsel %vm501, %v1659, %v1653
      %v1661 = vrot.slane %v1653, 4
      %v1662 = vsel %vm501, %v1658, %v1661
      %v1664 = vunpack.c.l.s4 1934713408
      %v1665 = vunpack.c.0.s8 %v1664
      %v1666 = vperm.slane %v1660, %v1665
      %v1668 = vunpack.c.l.s4 1934713408
      %v1669 = vunpack.c.0.s8 %v1668
      %v1670 = vperm.slane %v1662, %v1669
      %v1671 = vrot.slane %v1666, 4
      %v1672 = vsel %vm501, 0, %v1671
      %v1673 = vrot.slane %v1670, 4
      %v1674 = vsel %vm501, 0, %v1673
      %v1677 = vunpack.c.l.s4 1983009808
      %v1678 = vunpack.c.0.s8 %v1677
      %v1679 = vperm.slane %v1421, %v1678
      %v1682 = vunpack.c.l.s4 1983009808
      %v1683 = vunpack.c.0.s8 %v1682
      %v1684 = vperm.slane %v1427, %v1683
      %v1685 = vrot.slane %v1684, 4
      %v1686 = vsel %vm501, %v1685, %v1679
      %v1687 = vrot.slane %v1679, 4
      %v1688 = vsel %vm501, %v1684, %v1687
      %v1690 = vunpack.c.l.s4 1934713408
      %v1691 = vunpack.c.0.s8 %v1690
      %v1692 = vperm.slane %v1686, %v1691
      %v1694 = vunpack.c.l.s4 1934713408
      %v1695 = vunpack.c.0.s8 %v1694
      %v1696 = vperm.slane %v1688, %v1695
      %v1697 = vrot.slane %v1692, 4
      %v1698 = vsel %vm501, 0, %v1697
      %v1699 = vrot.slane %v1696, 4
      %v1700 = vsel %vm501, 0, %v1699
      %v1703 = vunpack.c.l.s4 1983009808
      %v1704 = vunpack.c.0.s8 %v1703
      %v1705 = vperm.slane %v1424, %v1704
      %v1708 = vunpack.c.l.s4 1983009808
      %v1709 = vunpack.c.0.s8 %v1708
      %v1710 = vperm.slane %v1430, %v1709
      %v1711 = vrot.slane %v1710, 4
      %v1712 = vsel %vm501, %v1711, %v1705
      %v1713 = vrot.slane %v1705, 4
      %v1714 = vsel %vm501, %v1710, %v1713
      %v1716 = vunpack.c.l.s4 1934713408
      %v1717 = vunpack.c.0.s8 %v1716
      %v1718 = vperm.slane %v1712, %v1717
      %v1720 = vunpack.c.l.s4 1934713408
      %v1721 = vunpack.c.0.s8 %v1720
      %v1722 = vperm.slane %v1714, %v1721
      %v1723 = vrot.slane %v1718, 4
      %v1724 = vsel %vm501, 0, %v1723
      %v1725 = vrot.slane %v1722, 4
      %v1726 = vsel %vm501, 0, %v1725
      %v1729 = vunpack.c.l.s4 1983009808
      %v1730 = vunpack.c.0.s8 %v1729
      %v1731 = vperm.slane %v1433, %v1730
      %v1734 = vunpack.c.l.s4 1983009808
      %v1735 = vunpack.c.0.s8 %v1734
      %v1736 = vperm.slane %v1439, %v1735
      %v1737 = vrot.slane %v1736, 4
      %v1738 = vsel %vm501, %v1737, %v1731
      %v1739 = vrot.slane %v1731, 4
      %v1740 = vsel %vm501, %v1736, %v1739
      %v1742 = vunpack.c.l.s4 1934713408
      %v1743 = vunpack.c.0.s8 %v1742
      %v1744 = vperm.slane %v1738, %v1743
      %v1746 = vunpack.c.l.s4 1934713408
      %v1747 = vunpack.c.0.s8 %v1746
      %v1748 = vperm.slane %v1740, %v1747
      %v1749 = vrot.slane %v1744, 4
      %v1750 = vsel %vm501, 0, %v1749
      %v1751 = vrot.slane %v1748, 4
      %v1752 = vsel %vm501, 0, %v1751
      %v1755 = vunpack.c.l.s4 1983009808
      %v1756 = vunpack.c.0.s8 %v1755
      %v1757 = vperm.slane %v1436, %v1756
      %v1760 = vunpack.c.l.s4 1983009808
      %v1761 = vunpack.c.0.s8 %v1760
      %v1762 = vperm.slane %v1442, %v1761
      %v1763 = vrot.slane %v1762, 4
      %v1764 = vsel %vm501, %v1763, %v1757
      %v1765 = vrot.slane %v1757, 4
      %v1766 = vsel %vm501, %v1762, %v1765
      %v1768 = vunpack.c.l.s4 1934713408
      %v1769 = vunpack.c.0.s8 %v1768
      %v1770 = vperm.slane %v1764, %v1769
      %v1772 = vunpack.c.l.s4 1934713408
      %v1773 = vunpack.c.0.s8 %v1772
      %v1774 = vperm.slane %v1766, %v1773
      %v1775 = vrot.slane %v1770, 4
      %v1776 = vsel %vm501, 0, %v1775
      %v1777 = vrot.slane %v1774, 4
      %v1778 = vsel %vm501, 0, %v1777
      %v1781 = vunpack.c.l.s4 1983009808
      %v1782 = vunpack.c.0.s8 %v1781
      %v1783 = vperm.slane %v1445, %v1782
      %v1786 = vunpack.c.l.s4 1983009808
      %v1787 = vunpack.c.0.s8 %v1786
      %v1788 = vperm.slane %v1451, %v1787
      %v1789 = vrot.slane %v1788, 4
      %v1790 = vsel %vm501, %v1789, %v1783
      %v1791 = vrot.slane %v1783, 4
      %v1792 = vsel %vm501, %v1788, %v1791
      %v1794 = vunpack.c.l.s4 1934713408
      %v1795 = vunpack.c.0.s8 %v1794
      %v1796 = vperm.slane %v1790, %v1795
      %v1798 = vunpack.c.l.s4 1934713408
      %v1799 = vunpack.c.0.s8 %v1798
      %v1800 = vperm.slane %v1792, %v1799
      %v1801 = vrot.slane %v1796, 4
      %v1802 = vsel %vm501, 0, %v1801
      %v1803 = vrot.slane %v1800, 4
      %v1804 = vsel %vm501, 0, %v1803
      %v1807 = vunpack.c.l.s4 1983009808
      %v1808 = vunpack.c.0.s8 %v1807
      %v1809 = vperm.slane %v1448, %v1808
      %v1812 = vunpack.c.l.s4 1983009808
      %v1813 = vunpack.c.0.s8 %v1812
      %v1814 = vperm.slane %v1454, %v1813
      %v1815 = vrot.slane %v1814, 4
      %v1816 = vsel %vm501, %v1815, %v1809
      %v1817 = vrot.slane %v1809, 4
      %v1818 = vsel %vm501, %v1814, %v1817
      %v1820 = vunpack.c.l.s4 1934713408
      %v1821 = vunpack.c.0.s8 %v1820
      %v1822 = vperm.slane %v1816, %v1821
      %v1824 = vunpack.c.l.s4 1934713408
      %v1825 = vunpack.c.0.s8 %v1824
      %v1826 = vperm.slane %v1818, %v1825
      %v1827 = vrot.slane %v1822, 4
      %v1828 = vsel %vm501, 0, %v1827
      %v1829 = vrot.slane %v1826, 4
      %v1830 = vsel %vm501, 0, %v1829
      %v1833 = vunpack.c.l.s4 1983009808
      %v1834 = vunpack.c.0.s8 %v1833
      %v1835 = vperm.slane %v1457, %v1834
      %v1838 = vunpack.c.l.s4 1983009808
      %v1839 = vunpack.c.0.s8 %v1838
      %v1840 = vperm.slane %v1463, %v1839
      %v1841 = vrot.slane %v1840, 4
      %v1842 = vsel %vm501, %v1841, %v1835
      %v1843 = vrot.slane %v1835, 4
      %v1844 = vsel %vm501, %v1840, %v1843
      %v1846 = vunpack.c.l.s4 1934713408
      %v1847 = vunpack.c.0.s8 %v1846
      %v1848 = vperm.slane %v1842, %v1847
      %v1850 = vunpack.c.l.s4 1934713408
      %v1851 = vunpack.c.0.s8 %v1850
      %v1852 = vperm.slane %v1844, %v1851
      %v1853 = vrot.slane %v1848, 4
      %v1854 = vsel %vm501, 0, %v1853
      %v1855 = vrot.slane %v1852, 4
      %v1856 = vsel %vm501, 0, %v1855
      %v1859 = vunpack.c.l.s4 1983009808
      %v1860 = vunpack.c.0.s8 %v1859
      %v1861 = vperm.slane %v1460, %v1860
      %v1864 = vunpack.c.l.s4 1983009808
      %v1865 = vunpack.c.0.s8 %v1864
      %v1866 = vperm.slane %v1466, %v1865
      %v1867 = vrot.slane %v1866, 4
      %v1868 = vsel %vm501, %v1867, %v1861
      %v1869 = vrot.slane %v1861, 4
      %v1870 = vsel %vm501, %v1866, %v1869
      %v1872 = vunpack.c.l.s4 1934713408
      %v1873 = vunpack.c.0.s8 %v1872
      %v1874 = vperm.slane %v1868, %v1873
      %v1876 = vunpack.c.l.s4 1934713408
      %v1877 = vunpack.c.0.s8 %v1876
      %v1878 = vperm.slane %v1870, %v1877
      %v1879 = vrot.slane %v1874, 4
      %v1880 = vsel %vm501, 0, %v1879
      %v1881 = vrot.slane %v1878, 4
      %v1882 = vsel %vm501, 0, %v1881
      %v1883 = vsel %vm501, %v1491, %v1484
      %v1885 = vunpack.c.l.s4 1983009808
      %v1886 = vunpack.c.0.s8 %v1885
      %v1887 = vperm.slane %v1883, %v1886
      %v1888 = vrot.slane %v1492, 4
      %v1889 = vsel %vm501, %v1888, %v1490
      %v1891 = vunpack.c.l.s4 1983009808
      %v1892 = vunpack.c.0.s8 %v1891
      %v1893 = vperm.slane %v1889, %v1892
      %v1894 = vrot.slane %v1893, 4
      %v1895 = vsel %vm501, %v1894, %v1887
      %v1897 = vunpack.c.l.s4 1934713408
      %v1898 = vunpack.c.0.s8 %v1897
      %v1899 = vperm.slane %v1895, %v1898
      %v1900 = vrot.slane %v1899, 4
      %v1901 = vsel %vm501, 0, %v1900
      %v1902 = vsel %vm501, %v1517, %v1510
      %v1904 = vunpack.c.l.s4 1983009808
      %v1905 = vunpack.c.0.s8 %v1904
      %v1906 = vperm.slane %v1902, %v1905
      %v1907 = vrot.slane %v1518, 4
      %v1908 = vsel %vm501, %v1907, %v1516
      %v1910 = vunpack.c.l.s4 1983009808
      %v1911 = vunpack.c.0.s8 %v1910
      %v1912 = vperm.slane %v1908, %v1911
      %v1913 = vrot.slane %v1912, 4
      %v1914 = vsel %vm501, %v1913, %v1906
      %v1916 = vunpack.c.l.s4 1934713408
      %v1917 = vunpack.c.0.s8 %v1916
      %v1918 = vperm.slane %v1914, %v1917
      %v1919 = vrot.slane %v1918, 4
      %v1920 = vsel %vm501, 0, %v1919
      %v1921 = vsel %vm501, %v1543, %v1536
      %v1923 = vunpack.c.l.s4 1983009808
      %v1924 = vunpack.c.0.s8 %v1923
      %v1925 = vperm.slane %v1921, %v1924
      %v1926 = vrot.slane %v1544, 4
      %v1927 = vsel %vm501, %v1926, %v1542
      %v1929 = vunpack.c.l.s4 1983009808
      %v1930 = vunpack.c.0.s8 %v1929
      %v1931 = vperm.slane %v1927, %v1930
      %v1932 = vrot.slane %v1931, 4
      %v1933 = vsel %vm501, %v1932, %v1925
      %v1935 = vunpack.c.l.s4 1934713408
      %v1936 = vunpack.c.0.s8 %v1935
      %v1937 = vperm.slane %v1933, %v1936
      %v1938 = vrot.slane %v1937, 4
      %v1939 = vsel %vm501, 0, %v1938
      %v1940 = vsel %vm501, %v1569, %v1562
      %v1942 = vunpack.c.l.s4 1983009808
      %v1943 = vunpack.c.0.s8 %v1942
      %v1944 = vperm.slane %v1940, %v1943
      %v1945 = vrot.slane %v1570, 4
      %v1946 = vsel %vm501, %v1945, %v1568
      %v1948 = vunpack.c.l.s4 1983009808
      %v1949 = vunpack.c.0.s8 %v1948
      %v1950 = vperm.slane %v1946, %v1949
      %v1951 = vrot.slane %v1950, 4
      %v1952 = vsel %vm501, %v1951, %v1944
      %v1954 = vunpack.c.l.s4 1934713408
      %v1955 = vunpack.c.0.s8 %v1954
      %v1956 = vperm.slane %v1952, %v1955
      %v1957 = vrot.slane %v1956, 4
      %v1958 = vsel %vm501, 0, %v1957
      %v1959 = vsel %vm501, %v1595, %v1588
      %v1961 = vunpack.c.l.s4 1983009808
      %v1962 = vunpack.c.0.s8 %v1961
      %v1963 = vperm.slane %v1959, %v1962
      %v1964 = vrot.slane %v1596, 4
      %v1965 = vsel %vm501, %v1964, %v1594
      %v1967 = vunpack.c.l.s4 1983009808
      %v1968 = vunpack.c.0.s8 %v1967
      %v1969 = vperm.slane %v1965, %v1968
      %v1970 = vrot.slane %v1969, 4
      %v1971 = vsel %vm501, %v1970, %v1963
      %v1973 = vunpack.c.l.s4 1934713408
      %v1974 = vunpack.c.0.s8 %v1973
      %v1975 = vperm.slane %v1971, %v1974
      %v1976 = vrot.slane %v1975, 4
      %v1977 = vsel %vm501, 0, %v1976
      %v1978 = vsel %vm501, %v1621, %v1614
      %v1980 = vunpack.c.l.s4 1983009808
      %v1981 = vunpack.c.0.s8 %v1980
      %v1982 = vperm.slane %v1978, %v1981
      %v1983 = vrot.slane %v1622, 4
      %v1984 = vsel %vm501, %v1983, %v1620
      %v1986 = vunpack.c.l.s4 1983009808
      %v1987 = vunpack.c.0.s8 %v1986
      %v1988 = vperm.slane %v1984, %v1987
      %v1989 = vrot.slane %v1988, 4
      %v1990 = vsel %vm501, %v1989, %v1982
      %v1992 = vunpack.c.l.s4 1934713408
      %v1993 = vunpack.c.0.s8 %v1992
      %v1994 = vperm.slane %v1990, %v1993
      %v1995 = vrot.slane %v1994, 4
      %v1996 = vsel %vm501, 0, %v1995
      %v1997 = vsel %vm501, %v1647, %v1640
      %v1999 = vunpack.c.l.s4 1983009808
      %v2000 = vunpack.c.0.s8 %v1999
      %v2001 = vperm.slane %v1997, %v2000
      %v2002 = vrot.slane %v1648, 4
      %v2003 = vsel %vm501, %v2002, %v1646
      %v2005 = vunpack.c.l.s4 1983009808
      %v2006 = vunpack.c.0.s8 %v2005
      %v2007 = vperm.slane %v2003, %v2006
      %v2008 = vrot.slane %v2007, 4
      %v2009 = vsel %vm501, %v2008, %v2001
      %v2011 = vunpack.c.l.s4 1934713408
      %v2012 = vunpack.c.0.s8 %v2011
      %v2013 = vperm.slane %v2009, %v2012
      %v2014 = vrot.slane %v2013, 4
      %v2015 = vsel %vm501, 0, %v2014
      %v2016 = vsel %vm501, %v1673, %v1666
      %v2018 = vunpack.c.l.s4 1983009808
      %v2019 = vunpack.c.0.s8 %v2018
      %v2020 = vperm.slane %v2016, %v2019
      %v2021 = vrot.slane %v1674, 4
      %v2022 = vsel %vm501, %v2021, %v1672
      %v2024 = vunpack.c.l.s4 1983009808
      %v2025 = vunpack.c.0.s8 %v2024
      %v2026 = vperm.slane %v2022, %v2025
      %v2027 = vrot.slane %v2026, 4
      %v2028 = vsel %vm501, %v2027, %v2020
      %v2030 = vunpack.c.l.s4 1934713408
      %v2031 = vunpack.c.0.s8 %v2030
      %v2032 = vperm.slane %v2028, %v2031
      %v2033 = vrot.slane %v2032, 4
      %v2034 = vsel %vm501, 0, %v2033
      %v2035 = vsel %vm501, %v1699, %v1692
      %v2037 = vunpack.c.l.s4 1983009808
      %v2038 = vunpack.c.0.s8 %v2037
      %v2039 = vperm.slane %v2035, %v2038
      %v2040 = vrot.slane %v1700, 4
      %v2041 = vsel %vm501, %v2040, %v1698
      %v2043 = vunpack.c.l.s4 1983009808
      %v2044 = vunpack.c.0.s8 %v2043
      %v2045 = vperm.slane %v2041, %v2044
      %v2046 = vrot.slane %v2045, 4
      %v2047 = vsel %vm501, %v2046, %v2039
      %v2049 = vunpack.c.l.s4 1934713408
      %v2050 = vunpack.c.0.s8 %v2049
      %v2051 = vperm.slane %v2047, %v2050
      %v2052 = vrot.slane %v2051, 4
      %v2053 = vsel %vm501, 0, %v2052
      %v2054 = vsel %vm501, %v1725, %v1718
      %v2056 = vunpack.c.l.s4 1983009808
      %v2057 = vunpack.c.0.s8 %v2056
      %v2058 = vperm.slane %v2054, %v2057
      %v2059 = vrot.slane %v1726, 4
      %v2060 = vsel %vm501, %v2059, %v1724
      %v2062 = vunpack.c.l.s4 1983009808
      %v2063 = vunpack.c.0.s8 %v2062
      %v2064 = vperm.slane %v2060, %v2063
      %v2065 = vrot.slane %v2064, 4
      %v2066 = vsel %vm501, %v2065, %v2058
      %v2068 = vunpack.c.l.s4 1934713408
      %v2069 = vunpack.c.0.s8 %v2068
      %v2070 = vperm.slane %v2066, %v2069
      %v2071 = vrot.slane %v2070, 4
      %v2072 = vsel %vm501, 0, %v2071
      %v2073 = vsel %vm501, %v1751, %v1744
      %v2075 = vunpack.c.l.s4 1983009808
      %v2076 = vunpack.c.0.s8 %v2075
      %v2077 = vperm.slane %v2073, %v2076
      %v2078 = vrot.slane %v1752, 4
      %v2079 = vsel %vm501, %v2078, %v1750
      %v2081 = vunpack.c.l.s4 1983009808
      %v2082 = vunpack.c.0.s8 %v2081
      %v2083 = vperm.slane %v2079, %v2082
      %v2084 = vrot.slane %v2083, 4
      %v2085 = vsel %vm501, %v2084, %v2077
      %v2087 = vunpack.c.l.s4 1934713408
      %v2088 = vunpack.c.0.s8 %v2087
      %v2089 = vperm.slane %v2085, %v2088
      %v2090 = vrot.slane %v2089, 4
      %v2091 = vsel %vm501, 0, %v2090
      %v2092 = vsel %vm501, %v1777, %v1770
      %v2094 = vunpack.c.l.s4 1983009808
      %v2095 = vunpack.c.0.s8 %v2094
      %v2096 = vperm.slane %v2092, %v2095
      %v2097 = vrot.slane %v1778, 4
      %v2098 = vsel %vm501, %v2097, %v1776
      %v2100 = vunpack.c.l.s4 1983009808
      %v2101 = vunpack.c.0.s8 %v2100
      %v2102 = vperm.slane %v2098, %v2101
      %v2103 = vrot.slane %v2102, 4
      %v2104 = vsel %vm501, %v2103, %v2096
      %v2106 = vunpack.c.l.s4 1934713408
      %v2107 = vunpack.c.0.s8 %v2106
      %v2108 = vperm.slane %v2104, %v2107
      %v2109 = vrot.slane %v2108, 4
      %v2110 = vsel %vm501, 0, %v2109
      %v2111 = vsel %vm501, %v1803, %v1796
      %v2113 = vunpack.c.l.s4 1983009808
      %v2114 = vunpack.c.0.s8 %v2113
      %v2115 = vperm.slane %v2111, %v2114
      %v2116 = vrot.slane %v1804, 4
      %v2117 = vsel %vm501, %v2116, %v1802
      %v2119 = vunpack.c.l.s4 1983009808
      %v2120 = vunpack.c.0.s8 %v2119
      %v2121 = vperm.slane %v2117, %v2120
      %v2122 = vrot.slane %v2121, 4
      %v2123 = vsel %vm501, %v2122, %v2115
      %v2125 = vunpack.c.l.s4 1934713408
      %v2126 = vunpack.c.0.s8 %v2125
      %v2127 = vperm.slane %v2123, %v2126
      %v2128 = vrot.slane %v2127, 4
      %v2129 = vsel %vm501, 0, %v2128
      %v2130 = vsel %vm501, %v1829, %v1822
      %v2132 = vunpack.c.l.s4 1983009808
      %v2133 = vunpack.c.0.s8 %v2132
      %v2134 = vperm.slane %v2130, %v2133
      %v2135 = vrot.slane %v1830, 4
      %v2136 = vsel %vm501, %v2135, %v1828
      %v2138 = vunpack.c.l.s4 1983009808
      %v2139 = vunpack.c.0.s8 %v2138
      %v2140 = vperm.slane %v2136, %v2139
      %v2141 = vrot.slane %v2140, 4
      %v2142 = vsel %vm501, %v2141, %v2134
      %v2144 = vunpack.c.l.s4 1934713408
      %v2145 = vunpack.c.0.s8 %v2144
      %v2146 = vperm.slane %v2142, %v2145
      %v2147 = vrot.slane %v2146, 4
      %v2148 = vsel %vm501, 0, %v2147
      %v2149 = vsel %vm501, %v1855, %v1848
      %v2151 = vunpack.c.l.s4 1983009808
      %v2152 = vunpack.c.0.s8 %v2151
      %v2153 = vperm.slane %v2149, %v2152
      %v2154 = vrot.slane %v1856, 4
      %v2155 = vsel %vm501, %v2154, %v1854
      %v2157 = vunpack.c.l.s4 1983009808
      %v2158 = vunpack.c.0.s8 %v2157
      %v2159 = vperm.slane %v2155, %v2158
      %v2160 = vrot.slane %v2159, 4
      %v2161 = vsel %vm501, %v2160, %v2153
      %v2163 = vunpack.c.l.s4 1934713408
      %v2164 = vunpack.c.0.s8 %v2163
      %v2165 = vperm.slane %v2161, %v2164
      %v2166 = vrot.slane %v2165, 4
      %v2167 = vsel %vm501, 0, %v2166
      %v2168 = vsel %vm501, %v1881, %v1874
      %v2170 = vunpack.c.l.s4 1983009808
      %v2171 = vunpack.c.0.s8 %v2170
      %v2172 = vperm.slane %v2168, %v2171
      %v2173 = vrot.slane %v1882, 4
      %v2174 = vsel %vm501, %v2173, %v1880
      %v2176 = vunpack.c.l.s4 1983009808
      %v2177 = vunpack.c.0.s8 %v2176
      %v2178 = vperm.slane %v2174, %v2177
      %v2179 = vrot.slane %v2178, 4
      %v2180 = vsel %vm501, %v2179, %v2172
      %v2182 = vunpack.c.l.s4 1934713408
      %v2183 = vunpack.c.0.s8 %v2182
      %v2184 = vperm.slane %v2180, %v2183
      %v2185 = vrot.slane %v2184, 4
      %v2186 = vsel %vm501, 0, %v2185
      %v2189 = vpack.i.b16 %v1918, %v1899
      %v2190 = vshrl.u32 %v1899, 16
      %v2191 = vshrl.u32 %v1918, 16
      %v2192 = vpack.i.b16 %v2191, %v2190
      %v2195 = vpack.i.b16 %v1920, %v1901
      %v2196 = vshrl.u32 %v1901, 16
      %v2197 = vshrl.u32 %v1920, 16
      %v2198 = vpack.i.b16 %v2197, %v2196
      %v2201 = vpack.i.b16 %v1956, %v1937
      %v2202 = vshrl.u32 %v1937, 16
      %v2203 = vshrl.u32 %v1956, 16
      %v2204 = vpack.i.b16 %v2203, %v2202
      %v2207 = vpack.i.b16 %v1958, %v1939
      %v2208 = vshrl.u32 %v1939, 16
      %v2209 = vshrl.u32 %v1958, 16
      %v2210 = vpack.i.b16 %v2209, %v2208
      %v2213 = vpack.i.b16 %v1994, %v1975
      %v2214 = vshrl.u32 %v1975, 16
      %v2215 = vshrl.u32 %v1994, 16
      %v2216 = vpack.i.b16 %v2215, %v2214
      %v2219 = vpack.i.b16 %v1996, %v1977
      %v2220 = vshrl.u32 %v1977, 16
      %v2221 = vshrl.u32 %v1996, 16
      %v2222 = vpack.i.b16 %v2221, %v2220
      %v2225 = vpack.i.b16 %v2032, %v2013
      %v2226 = vshrl.u32 %v2013, 16
      %v2227 = vshrl.u32 %v2032, 16
      %v2228 = vpack.i.b16 %v2227, %v2226
      %v2231 = vpack.i.b16 %v2034, %v2015
      %v2232 = vshrl.u32 %v2015, 16
      %v2233 = vshrl.u32 %v2034, 16
      %v2234 = vpack.i.b16 %v2233, %v2232
      %v2237 = vpack.i.b16 %v2070, %v2051
      %v2238 = vshrl.u32 %v2051, 16
      %v2239 = vshrl.u32 %v2070, 16
      %v2240 = vpack.i.b16 %v2239, %v2238
      %v2243 = vpack.i.b16 %v2072, %v2053
      %v2244 = vshrl.u32 %v2053, 16
      %v2245 = vshrl.u32 %v2072, 16
      %v2246 = vpack.i.b16 %v2245, %v2244
      %v2249 = vpack.i.b16 %v2108, %v2089
      %v2250 = vshrl.u32 %v2089, 16
      %v2251 = vshrl.u32 %v2108, 16
      %v2252 = vpack.i.b16 %v2251, %v2250
      %v2255 = vpack.i.b16 %v2110, %v2091
      %v2256 = vshrl.u32 %v2091, 16
      %v2257 = vshrl.u32 %v2110, 16
      %v2258 = vpack.i.b16 %v2257, %v2256
      %v2261 = vpack.i.b16 %v2146, %v2127
      %v2262 = vshrl.u32 %v2127, 16
      %v2263 = vshrl.u32 %v2146, 16
      %v2264 = vpack.i.b16 %v2263, %v2262
      %v2267 = vpack.i.b16 %v2148, %v2129
      %v2268 = vshrl.u32 %v2129, 16
      %v2269 = vshrl.u32 %v2148, 16
      %v2270 = vpack.i.b16 %v2269, %v2268
      %v2273 = vpack.i.b16 %v2184, %v2165
      %v2274 = vshrl.u32 %v2165, 16
      %v2275 = vshrl.u32 %v2184, 16
      %v2276 = vpack.i.b16 %v2275, %v2274
      %v2279 = vpack.i.b16 %v2186, %v2167
      %v2280 = vshrl.u32 %v2167, 16
      %v2281 = vshrl.u32 %v2186, 16
      %v2282 = vpack.i.b16 %v2281, %v2280
      %2283 = vrot.lane.b32.xlu0 %v330, 64
      %v2284 = vpop.permute.xlu0 %2283
      %2285 = vrot.lane.b32.xlu0 %v331, 64
      %v2286 = vpop.permute.xlu0 %2285
      %2287 = vrot.lane.b32.xlu0 %v332, 64
      %v2288 = vpop.permute.xlu0 %2287
      %2289 = vrot.lane.b32.xlu0 %v333, 64
      %v2290 = vpop.permute.xlu0 %2289
      %2291 = vrot.lane.b32.xlu0 %v334, 64
      %v2292 = vpop.permute.xlu0 %2291
      %2293 = vrot.lane.b32.xlu0 %v335, 64
      %v2294 = vpop.permute.xlu0 %2293
      %2295 = vrot.lane.b32.xlu0 %v336, 64
      %v2296 = vpop.permute.xlu0 %2295
      %2297 = vrot.lane.b32.xlu0 %v337, 64
      %v2298 = vpop.permute.xlu0 %2297
      %2299 = vrot.lane.b32.xlu0 %v347, 64
      %v2300 = vpop.permute.xlu0 %2299
      %2301 = vrot.lane.b32.xlu0 %v349, 64
      %v2302 = vpop.permute.xlu0 %2301
      %2303 = vrot.lane.b32.xlu0 %v351, 64
      %v2304 = vpop.permute.xlu0 %2303
      %2305 = vrot.lane.b32.xlu0 %v353, 64
      %v2306 = vpop.permute.xlu0 %2305
      %2307 = vrot.lane.b32.xlu0 %v355, 64
      %v2308 = vpop.permute.xlu0 %2307
      %2309 = vrot.lane.b32.xlu0 %v357, 64
      %v2310 = vpop.permute.xlu0 %2309
      %2311 = vrot.lane.b32.xlu0 %v359, 64
      %v2312 = vpop.permute.xlu0 %2311
      %2313 = vrot.lane.b32.xlu0 %v361, 64
      %v2314 = vpop.permute.xlu0 %2313
      %2315 = vrot.lane.b32.xlu0 %v363, 64
      %v2316 = vpop.permute.xlu0 %2315
      %2317 = vrot.lane.b32.xlu0 %v365, 64
      %v2318 = vpop.permute.xlu0 %2317
      %2319 = vrot.lane.b32.xlu0 %v367, 64
      %v2320 = vpop.permute.xlu0 %2319
      %2321 = vrot.lane.b32.xlu0 %v369, 64
      %v2322 = vpop.permute.xlu0 %2321
      %2323 = vrot.lane.b32.xlu0 %v371, 64
      %v2324 = vpop.permute.xlu0 %2323
      %2325 = vrot.lane.b32.xlu0 %v373, 64
      %v2326 = vpop.permute.xlu0 %2325
      %2327 = vrot.lane.b32.xlu0 %v375, 64
      %v2328 = vpop.permute.xlu0 %2327
      %2329 = vrot.lane.b32.xlu0 %v377, 64
      %v2330 = vpop.permute.xlu0 %2329
      %2331 = vrot.lane.b32.xlu0 %v379, 64
      %v2332 = vpop.permute.xlu0 %2331
      %2333 = vrot.lane.b32.xlu0 %v381, 64
      %v2334 = vpop.permute.xlu0 %2333
      %2335 = vrot.lane.b32.xlu0 %v383, 64
      %v2336 = vpop.permute.xlu0 %2335
      %2337 = vrot.lane.b32.xlu0 %v385, 64
      %v2338 = vpop.permute.xlu0 %2337
      %2339 = vrot.lane.b32.xlu0 %v387, 64
      %v2340 = vpop.permute.xlu0 %2339
      %2341 = vrot.lane.b32.xlu0 %v389, 64
      %v2342 = vpop.permute.xlu0 %2341
      %2343 = vrot.lane.b32.xlu0 %v391, 64
      %v2344 = vpop.permute.xlu0 %2343
      %2345 = vrot.lane.b32.xlu0 %v393, 64
      %v2346 = vpop.permute.xlu0 %2345
      %v2349 = vpack.i.b16 %v2300, %v2284
      %v2350 = vshrl.u32 %v2284, 16
      %v2351 = vshrl.u32 %v2300, 16
      %v2352 = vpack.i.b16 %v2351, %v2350
      %v2355 = vpack.i.b16 %v2332, %v2316
      %v2356 = vshrl.u32 %v2316, 16
      %v2357 = vshrl.u32 %v2332, 16
      %v2358 = vpack.i.b16 %v2357, %v2356
      %v2361 = vpack.i.b16 %v2302, %v2286
      %v2362 = vshrl.u32 %v2286, 16
      %v2363 = vshrl.u32 %v2302, 16
      %v2364 = vpack.i.b16 %v2363, %v2362
      %v2367 = vpack.i.b16 %v2334, %v2318
      %v2368 = vshrl.u32 %v2318, 16
      %v2369 = vshrl.u32 %v2334, 16
      %v2370 = vpack.i.b16 %v2369, %v2368
      %v2373 = vpack.i.b16 %v2304, %v2288
      %v2374 = vshrl.u32 %v2288, 16
      %v2375 = vshrl.u32 %v2304, 16
      %v2376 = vpack.i.b16 %v2375, %v2374
      %v2379 = vpack.i.b16 %v2336, %v2320
      %v2380 = vshrl.u32 %v2320, 16
      %v2381 = vshrl.u32 %v2336, 16
      %v2382 = vpack.i.b16 %v2381, %v2380
      %v2385 = vpack.i.b16 %v2306, %v2290
      %v2386 = vshrl.u32 %v2290, 16
      %v2387 = vshrl.u32 %v2306, 16
      %v2388 = vpack.i.b16 %v2387, %v2386
      %v2391 = vpack.i.b16 %v2338, %v2322
      %v2392 = vshrl.u32 %v2322, 16
      %v2393 = vshrl.u32 %v2338, 16
      %v2394 = vpack.i.b16 %v2393, %v2392
      %v2397 = vpack.i.b16 %v2308, %v2292
      %v2398 = vshrl.u32 %v2292, 16
      %v2399 = vshrl.u32 %v2308, 16
      %v2400 = vpack.i.b16 %v2399, %v2398
      %v2403 = vpack.i.b16 %v2340, %v2324
      %v2404 = vshrl.u32 %v2324, 16
      %v2405 = vshrl.u32 %v2340, 16
      %v2406 = vpack.i.b16 %v2405, %v2404
      %v2409 = vpack.i.b16 %v2310, %v2294
      %v2410 = vshrl.u32 %v2294, 16
      %v2411 = vshrl.u32 %v2310, 16
      %v2412 = vpack.i.b16 %v2411, %v2410
      %v2415 = vpack.i.b16 %v2342, %v2326
      %v2416 = vshrl.u32 %v2326, 16
      %v2417 = vshrl.u32 %v2342, 16
      %v2418 = vpack.i.b16 %v2417, %v2416
      %v2421 = vpack.i.b16 %v2312, %v2296
      %v2422 = vshrl.u32 %v2296, 16
      %v2423 = vshrl.u32 %v2312, 16
      %v2424 = vpack.i.b16 %v2423, %v2422
      %v2427 = vpack.i.b16 %v2344, %v2328
      %v2428 = vshrl.u32 %v2328, 16
      %v2429 = vshrl.u32 %v2344, 16
      %v2430 = vpack.i.b16 %v2429, %v2428
      %v2433 = vpack.i.b16 %v2314, %v2298
      %v2434 = vshrl.u32 %v2298, 16
      %v2435 = vshrl.u32 %v2314, 16
      %v2436 = vpack.i.b16 %v2435, %v2434
      %v2439 = vpack.i.b16 %v2346, %v2330
      %v2440 = vshrl.u32 %v2330, 16
      %v2441 = vshrl.u32 %v2346, 16
      %v2442 = vpack.i.b16 %v2441, %v2440
      %v2445 = vunpack.c.l.s4 1983009808
      %v2446 = vunpack.c.0.s8 %v2445
      %v2447 = vperm.slane %v2349, %v2446
      %v2450 = vunpack.c.l.s4 1983009808
      %v2451 = vunpack.c.0.s8 %v2450
      %v2452 = vperm.slane %v2355, %v2451
      %v2453 = vrot.slane %v2452, 4
      %v2454 = vsel %vm501, %v2453, %v2447
      %v2455 = vrot.slane %v2447, 4
      %v2456 = vsel %vm501, %v2452, %v2455
      %v2458 = vunpack.c.l.s4 1934713408
      %v2459 = vunpack.c.0.s8 %v2458
      %v2460 = vperm.slane %v2454, %v2459
      %v2462 = vunpack.c.l.s4 1934713408
      %v2463 = vunpack.c.0.s8 %v2462
      %v2464 = vperm.slane %v2456, %v2463
      %v2465 = vrot.slane %v2460, 4
      %v2466 = vsel %vm501, 0, %v2465
      %v2467 = vrot.slane %v2464, 4
      %v2468 = vsel %vm501, 0, %v2467
      %v2471 = vunpack.c.l.s4 1983009808
      %v2472 = vunpack.c.0.s8 %v2471
      %v2473 = vperm.slane %v2352, %v2472
      %v2476 = vunpack.c.l.s4 1983009808
      %v2477 = vunpack.c.0.s8 %v2476
      %v2478 = vperm.slane %v2358, %v2477
      %v2479 = vrot.slane %v2478, 4
      %v2480 = vsel %vm501, %v2479, %v2473
      %v2481 = vrot.slane %v2473, 4
      %v2482 = vsel %vm501, %v2478, %v2481
      %v2484 = vunpack.c.l.s4 1934713408
      %v2485 = vunpack.c.0.s8 %v2484
      %v2486 = vperm.slane %v2480, %v2485
      %v2488 = vunpack.c.l.s4 1934713408
      %v2489 = vunpack.c.0.s8 %v2488
      %v2490 = vperm.slane %v2482, %v2489
      %v2491 = vrot.slane %v2486, 4
      %v2492 = vsel %vm501, 0, %v2491
      %v2493 = vrot.slane %v2490, 4
      %v2494 = vsel %vm501, 0, %v2493
      %v2497 = vunpack.c.l.s4 1983009808
      %v2498 = vunpack.c.0.s8 %v2497
      %v2499 = vperm.slane %v2361, %v2498
      %v2502 = vunpack.c.l.s4 1983009808
      %v2503 = vunpack.c.0.s8 %v2502
      %v2504 = vperm.slane %v2367, %v2503
      %v2505 = vrot.slane %v2504, 4
      %v2506 = vsel %vm501, %v2505, %v2499
      %v2507 = vrot.slane %v2499, 4
      %v2508 = vsel %vm501, %v2504, %v2507
      %v2510 = vunpack.c.l.s4 1934713408
      %v2511 = vunpack.c.0.s8 %v2510
      %v2512 = vperm.slane %v2506, %v2511
      %v2514 = vunpack.c.l.s4 1934713408
      %v2515 = vunpack.c.0.s8 %v2514
      %v2516 = vperm.slane %v2508, %v2515
      %v2517 = vrot.slane %v2512, 4
      %v2518 = vsel %vm501, 0, %v2517
      %v2519 = vrot.slane %v2516, 4
      %v2520 = vsel %vm501, 0, %v2519
      %v2523 = vunpack.c.l.s4 1983009808
      %v2524 = vunpack.c.0.s8 %v2523
      %v2525 = vperm.slane %v2364, %v2524
      %v2528 = vunpack.c.l.s4 1983009808
      %v2529 = vunpack.c.0.s8 %v2528
      %v2530 = vperm.slane %v2370, %v2529
      %v2531 = vrot.slane %v2530, 4
      %v2532 = vsel %vm501, %v2531, %v2525
      %v2533 = vrot.slane %v2525, 4
      %v2534 = vsel %vm501, %v2530, %v2533
      %v2536 = vunpack.c.l.s4 1934713408
      %v2537 = vunpack.c.0.s8 %v2536
      %v2538 = vperm.slane %v2532, %v2537
      %v2540 = vunpack.c.l.s4 1934713408
      %v2541 = vunpack.c.0.s8 %v2540
      %v2542 = vperm.slane %v2534, %v2541
      %v2543 = vrot.slane %v2538, 4
      %v2544 = vsel %vm501, 0, %v2543
      %v2545 = vrot.slane %v2542, 4
      %v2546 = vsel %vm501, 0, %v2545
      %v2549 = vunpack.c.l.s4 1983009808
      %v2550 = vunpack.c.0.s8 %v2549
      %v2551 = vperm.slane %v2373, %v2550
      %v2554 = vunpack.c.l.s4 1983009808
      %v2555 = vunpack.c.0.s8 %v2554
      %v2556 = vperm.slane %v2379, %v2555
      %v2557 = vrot.slane %v2556, 4
      %v2558 = vsel %vm501, %v2557, %v2551
      %v2559 = vrot.slane %v2551, 4
      %v2560 = vsel %vm501, %v2556, %v2559
      %v2562 = vunpack.c.l.s4 1934713408
      %v2563 = vunpack.c.0.s8 %v2562
      %v2564 = vperm.slane %v2558, %v2563
      %v2566 = vunpack.c.l.s4 1934713408
      %v2567 = vunpack.c.0.s8 %v2566
      %v2568 = vperm.slane %v2560, %v2567
      %v2569 = vrot.slane %v2564, 4
      %v2570 = vsel %vm501, 0, %v2569
      %v2571 = vrot.slane %v2568, 4
      %v2572 = vsel %vm501, 0, %v2571
      %v2575 = vunpack.c.l.s4 1983009808
      %v2576 = vunpack.c.0.s8 %v2575
      %v2577 = vperm.slane %v2376, %v2576
      %v2580 = vunpack.c.l.s4 1983009808
      %v2581 = vunpack.c.0.s8 %v2580
      %v2582 = vperm.slane %v2382, %v2581
      %v2583 = vrot.slane %v2582, 4
      %v2584 = vsel %vm501, %v2583, %v2577
      %v2585 = vrot.slane %v2577, 4
      %v2586 = vsel %vm501, %v2582, %v2585
      %v2588 = vunpack.c.l.s4 1934713408
      %v2589 = vunpack.c.0.s8 %v2588
      %v2590 = vperm.slane %v2584, %v2589
      %v2592 = vunpack.c.l.s4 1934713408
      %v2593 = vunpack.c.0.s8 %v2592
      %v2594 = vperm.slane %v2586, %v2593
      %v2595 = vrot.slane %v2590, 4
      %v2596 = vsel %vm501, 0, %v2595
      %v2597 = vrot.slane %v2594, 4
      %v2598 = vsel %vm501, 0, %v2597
      %v2601 = vunpack.c.l.s4 1983009808
      %v2602 = vunpack.c.0.s8 %v2601
      %v2603 = vperm.slane %v2385, %v2602
      %v2606 = vunpack.c.l.s4 1983009808
      %v2607 = vunpack.c.0.s8 %v2606
      %v2608 = vperm.slane %v2391, %v2607
      %v2609 = vrot.slane %v2608, 4
      %v2610 = vsel %vm501, %v2609, %v2603
      %v2611 = vrot.slane %v2603, 4
      %v2612 = vsel %vm501, %v2608, %v2611
      %v2614 = vunpack.c.l.s4 1934713408
      %v2615 = vunpack.c.0.s8 %v2614
      %v2616 = vperm.slane %v2610, %v2615
      %v2618 = vunpack.c.l.s4 1934713408
      %v2619 = vunpack.c.0.s8 %v2618
      %v2620 = vperm.slane %v2612, %v2619
      %v2621 = vrot.slane %v2616, 4
      %v2622 = vsel %vm501, 0, %v2621
      %v2623 = vrot.slane %v2620, 4
      %v2624 = vsel %vm501, 0, %v2623
      %v2627 = vunpack.c.l.s4 1983009808
      %v2628 = vunpack.c.0.s8 %v2627
      %v2629 = vperm.slane %v2388, %v2628
      %v2632 = vunpack.c.l.s4 1983009808
      %v2633 = vunpack.c.0.s8 %v2632
      %v2634 = vperm.slane %v2394, %v2633
      %v2635 = vrot.slane %v2634, 4
      %v2636 = vsel %vm501, %v2635, %v2629
      %v2637 = vrot.slane %v2629, 4
      %v2638 = vsel %vm501, %v2634, %v2637
      %v2640 = vunpack.c.l.s4 1934713408
      %v2641 = vunpack.c.0.s8 %v2640
      %v2642 = vperm.slane %v2636, %v2641
      %v2644 = vunpack.c.l.s4 1934713408
      %v2645 = vunpack.c.0.s8 %v2644
      %v2646 = vperm.slane %v2638, %v2645
      %v2647 = vrot.slane %v2642, 4
      %v2648 = vsel %vm501, 0, %v2647
      %v2649 = vrot.slane %v2646, 4
      %v2650 = vsel %vm501, 0, %v2649
      %v2653 = vunpack.c.l.s4 1983009808
      %v2654 = vunpack.c.0.s8 %v2653
      %v2655 = vperm.slane %v2397, %v2654
      %v2658 = vunpack.c.l.s4 1983009808
      %v2659 = vunpack.c.0.s8 %v2658
      %v2660 = vperm.slane %v2403, %v2659
      %v2661 = vrot.slane %v2660, 4
      %v2662 = vsel %vm501, %v2661, %v2655
      %v2663 = vrot.slane %v2655, 4
      %v2664 = vsel %vm501, %v2660, %v2663
      %v2666 = vunpack.c.l.s4 1934713408
      %v2667 = vunpack.c.0.s8 %v2666
      %v2668 = vperm.slane %v2662, %v2667
      %v2670 = vunpack.c.l.s4 1934713408
      %v2671 = vunpack.c.0.s8 %v2670
      %v2672 = vperm.slane %v2664, %v2671
      %v2673 = vrot.slane %v2668, 4
      %v2674 = vsel %vm501, 0, %v2673
      %v2675 = vrot.slane %v2672, 4
      %v2676 = vsel %vm501, 0, %v2675
      %v2679 = vunpack.c.l.s4 1983009808
      %v2680 = vunpack.c.0.s8 %v2679
      %v2681 = vperm.slane %v2400, %v2680
      %v2684 = vunpack.c.l.s4 1983009808
      %v2685 = vunpack.c.0.s8 %v2684
      %v2686 = vperm.slane %v2406, %v2685
      %v2687 = vrot.slane %v2686, 4
      %v2688 = vsel %vm501, %v2687, %v2681
      %v2689 = vrot.slane %v2681, 4
      %v2690 = vsel %vm501, %v2686, %v2689
      %v2692 = vunpack.c.l.s4 1934713408
      %v2693 = vunpack.c.0.s8 %v2692
      %v2694 = vperm.slane %v2688, %v2693
      %v2696 = vunpack.c.l.s4 1934713408
      %v2697 = vunpack.c.0.s8 %v2696
      %v2698 = vperm.slane %v2690, %v2697
      %v2699 = vrot.slane %v2694, 4
      %v2700 = vsel %vm501, 0, %v2699
      %v2701 = vrot.slane %v2698, 4
      %v2702 = vsel %vm501, 0, %v2701
      %v2705 = vunpack.c.l.s4 1983009808
      %v2706 = vunpack.c.0.s8 %v2705
      %v2707 = vperm.slane %v2409, %v2706
      %v2710 = vunpack.c.l.s4 1983009808
      %v2711 = vunpack.c.0.s8 %v2710
      %v2712 = vperm.slane %v2415, %v2711
      %v2713 = vrot.slane %v2712, 4
      %v2714 = vsel %vm501, %v2713, %v2707
      %v2715 = vrot.slane %v2707, 4
      %v2716 = vsel %vm501, %v2712, %v2715
      %v2718 = vunpack.c.l.s4 1934713408
      %v2719 = vunpack.c.0.s8 %v2718
      %v2720 = vperm.slane %v2714, %v2719
      %v2722 = vunpack.c.l.s4 1934713408
      %v2723 = vunpack.c.0.s8 %v2722
      %v2724 = vperm.slane %v2716, %v2723
      %v2725 = vrot.slane %v2720, 4
      %v2726 = vsel %vm501, 0, %v2725
      %v2727 = vrot.slane %v2724, 4
      %v2728 = vsel %vm501, 0, %v2727
      %v2731 = vunpack.c.l.s4 1983009808
      %v2732 = vunpack.c.0.s8 %v2731
      %v2733 = vperm.slane %v2412, %v2732
      %v2736 = vunpack.c.l.s4 1983009808
      %v2737 = vunpack.c.0.s8 %v2736
      %v2738 = vperm.slane %v2418, %v2737
      %v2739 = vrot.slane %v2738, 4
      %v2740 = vsel %vm501, %v2739, %v2733
      %v2741 = vrot.slane %v2733, 4
      %v2742 = vsel %vm501, %v2738, %v2741
      %v2744 = vunpack.c.l.s4 1934713408
      %v2745 = vunpack.c.0.s8 %v2744
      %v2746 = vperm.slane %v2740, %v2745
      %v2748 = vunpack.c.l.s4 1934713408
      %v2749 = vunpack.c.0.s8 %v2748
      %v2750 = vperm.slane %v2742, %v2749
      %v2751 = vrot.slane %v2746, 4
      %v2752 = vsel %vm501, 0, %v2751
      %v2753 = vrot.slane %v2750, 4
      %v2754 = vsel %vm501, 0, %v2753
      %v2757 = vunpack.c.l.s4 1983009808
      %v2758 = vunpack.c.0.s8 %v2757
      %v2759 = vperm.slane %v2421, %v2758
      %v2762 = vunpack.c.l.s4 1983009808
      %v2763 = vunpack.c.0.s8 %v2762
      %v2764 = vperm.slane %v2427, %v2763
      %v2765 = vrot.slane %v2764, 4
      %v2766 = vsel %vm501, %v2765, %v2759
      %v2767 = vrot.slane %v2759, 4
      %v2768 = vsel %vm501, %v2764, %v2767
      %v2770 = vunpack.c.l.s4 1934713408
      %v2771 = vunpack.c.0.s8 %v2770
      %v2772 = vperm.slane %v2766, %v2771
      %v2774 = vunpack.c.l.s4 1934713408
      %v2775 = vunpack.c.0.s8 %v2774
      %v2776 = vperm.slane %v2768, %v2775
      %v2777 = vrot.slane %v2772, 4
      %v2778 = vsel %vm501, 0, %v2777
      %v2779 = vrot.slane %v2776, 4
      %v2780 = vsel %vm501, 0, %v2779
      %v2783 = vunpack.c.l.s4 1983009808
      %v2784 = vunpack.c.0.s8 %v2783
      %v2785 = vperm.slane %v2424, %v2784
      %v2788 = vunpack.c.l.s4 1983009808
      %v2789 = vunpack.c.0.s8 %v2788
      %v2790 = vperm.slane %v2430, %v2789
      %v2791 = vrot.slane %v2790, 4
      %v2792 = vsel %vm501, %v2791, %v2785
      %v2793 = vrot.slane %v2785, 4
      %v2794 = vsel %vm501, %v2790, %v2793
      %v2796 = vunpack.c.l.s4 1934713408
      %v2797 = vunpack.c.0.s8 %v2796
      %v2798 = vperm.slane %v2792, %v2797
      %v2800 = vunpack.c.l.s4 1934713408
      %v2801 = vunpack.c.0.s8 %v2800
      %v2802 = vperm.slane %v2794, %v2801
      %v2803 = vrot.slane %v2798, 4
      %v2804 = vsel %vm501, 0, %v2803
      %v2805 = vrot.slane %v2802, 4
      %v2806 = vsel %vm501, 0, %v2805
      %v2809 = vunpack.c.l.s4 1983009808
      %v2810 = vunpack.c.0.s8 %v2809
      %v2811 = vperm.slane %v2433, %v2810
      %v2814 = vunpack.c.l.s4 1983009808
      %v2815 = vunpack.c.0.s8 %v2814
      %v2816 = vperm.slane %v2439, %v2815
      %v2817 = vrot.slane %v2816, 4
      %v2818 = vsel %vm501, %v2817, %v2811
      %v2819 = vrot.slane %v2811, 4
      %v2820 = vsel %vm501, %v2816, %v2819
      %v2822 = vunpack.c.l.s4 1934713408
      %v2823 = vunpack.c.0.s8 %v2822
      %v2824 = vperm.slane %v2818, %v2823
      %v2826 = vunpack.c.l.s4 1934713408
      %v2827 = vunpack.c.0.s8 %v2826
      %v2828 = vperm.slane %v2820, %v2827
      %v2829 = vrot.slane %v2824, 4
      %v2830 = vsel %vm501, 0, %v2829
      %v2831 = vrot.slane %v2828, 4
      %v2832 = vsel %vm501, 0, %v2831
      %v2835 = vunpack.c.l.s4 1983009808
      %v2836 = vunpack.c.0.s8 %v2835
      %v2837 = vperm.slane %v2436, %v2836
      %v2840 = vunpack.c.l.s4 1983009808
      %v2841 = vunpack.c.0.s8 %v2840
      %v2842 = vperm.slane %v2442, %v2841
      %v2843 = vrot.slane %v2842, 4
      %v2844 = vsel %vm501, %v2843, %v2837
      %v2845 = vrot.slane %v2837, 4
      %v2846 = vsel %vm501, %v2842, %v2845
      %v2848 = vunpack.c.l.s4 1934713408
      %v2849 = vunpack.c.0.s8 %v2848
      %v2850 = vperm.slane %v2844, %v2849
      %v2852 = vunpack.c.l.s4 1934713408
      %v2853 = vunpack.c.0.s8 %v2852
      %v2854 = vperm.slane %v2846, %v2853
      %v2855 = vrot.slane %v2850, 4
      %v2856 = vsel %vm501, 0, %v2855
      %v2857 = vrot.slane %v2854, 4
      %v2858 = vsel %vm501, 0, %v2857
      %v2859 = vsel %vm501, %v2467, %v2460
      %v2861 = vunpack.c.l.s4 1983009808
      %v2862 = vunpack.c.0.s8 %v2861
      %v2863 = vperm.slane %v2859, %v2862
      %v2864 = vrot.slane %v2468, 4
      %v2865 = vsel %vm501, %v2864, %v2466
      %v2867 = vunpack.c.l.s4 1983009808
      %v2868 = vunpack.c.0.s8 %v2867
      %v2869 = vperm.slane %v2865, %v2868
      %v2870 = vrot.slane %v2869, 4
      %v2871 = vsel %vm501, %v2870, %v2863
      %v2873 = vunpack.c.l.s4 1934713408
      %v2874 = vunpack.c.0.s8 %v2873
      %v2875 = vperm.slane %v2871, %v2874
      %v2876 = vrot.slane %v2875, 4
      %v2877 = vsel %vm501, 0, %v2876
      %v2878 = vsel %vm501, %v2493, %v2486
      %v2880 = vunpack.c.l.s4 1983009808
      %v2881 = vunpack.c.0.s8 %v2880
      %v2882 = vperm.slane %v2878, %v2881
      %v2883 = vrot.slane %v2494, 4
      %v2884 = vsel %vm501, %v2883, %v2492
      %v2886 = vunpack.c.l.s4 1983009808
      %v2887 = vunpack.c.0.s8 %v2886
      %v2888 = vperm.slane %v2884, %v2887
      %v2889 = vrot.slane %v2888, 4
      %v2890 = vsel %vm501, %v2889, %v2882
      %v2892 = vunpack.c.l.s4 1934713408
      %v2893 = vunpack.c.0.s8 %v2892
      %v2894 = vperm.slane %v2890, %v2893
      %v2895 = vrot.slane %v2894, 4
      %v2896 = vsel %vm501, 0, %v2895
      %v2897 = vsel %vm501, %v2519, %v2512
      %v2899 = vunpack.c.l.s4 1983009808
      %v2900 = vunpack.c.0.s8 %v2899
      %v2901 = vperm.slane %v2897, %v2900
      %v2902 = vrot.slane %v2520, 4
      %v2903 = vsel %vm501, %v2902, %v2518
      %v2905 = vunpack.c.l.s4 1983009808
      %v2906 = vunpack.c.0.s8 %v2905
      %v2907 = vperm.slane %v2903, %v2906
      %v2908 = vrot.slane %v2907, 4
      %v2909 = vsel %vm501, %v2908, %v2901
      %v2911 = vunpack.c.l.s4 1934713408
      %v2912 = vunpack.c.0.s8 %v2911
      %v2913 = vperm.slane %v2909, %v2912
      %v2914 = vrot.slane %v2913, 4
      %v2915 = vsel %vm501, 0, %v2914
      %v2916 = vsel %vm501, %v2545, %v2538
      %v2918 = vunpack.c.l.s4 1983009808
      %v2919 = vunpack.c.0.s8 %v2918
      %v2920 = vperm.slane %v2916, %v2919
      %v2921 = vrot.slane %v2546, 4
      %v2922 = vsel %vm501, %v2921, %v2544
      %v2924 = vunpack.c.l.s4 1983009808
      %v2925 = vunpack.c.0.s8 %v2924
      %v2926 = vperm.slane %v2922, %v2925
      %v2927 = vrot.slane %v2926, 4
      %v2928 = vsel %vm501, %v2927, %v2920
      %v2930 = vunpack.c.l.s4 1934713408
      %v2931 = vunpack.c.0.s8 %v2930
      %v2932 = vperm.slane %v2928, %v2931
      %v2933 = vrot.slane %v2932, 4
      %v2934 = vsel %vm501, 0, %v2933
      %v2935 = vsel %vm501, %v2571, %v2564
      %v2937 = vunpack.c.l.s4 1983009808
      %v2938 = vunpack.c.0.s8 %v2937
      %v2939 = vperm.slane %v2935, %v2938
      %v2940 = vrot.slane %v2572, 4
      %v2941 = vsel %vm501, %v2940, %v2570
      %v2943 = vunpack.c.l.s4 1983009808
      %v2944 = vunpack.c.0.s8 %v2943
      %v2945 = vperm.slane %v2941, %v2944
      %v2946 = vrot.slane %v2945, 4
      %v2947 = vsel %vm501, %v2946, %v2939
      %v2949 = vunpack.c.l.s4 1934713408
      %v2950 = vunpack.c.0.s8 %v2949
      %v2951 = vperm.slane %v2947, %v2950
      %v2952 = vrot.slane %v2951, 4
      %v2953 = vsel %vm501, 0, %v2952
      %v2954 = vsel %vm501, %v2597, %v2590
      %v2956 = vunpack.c.l.s4 1983009808
      %v2957 = vunpack.c.0.s8 %v2956
      %v2958 = vperm.slane %v2954, %v2957
      %v2959 = vrot.slane %v2598, 4
      %v2960 = vsel %vm501, %v2959, %v2596
      %v2962 = vunpack.c.l.s4 1983009808
      %v2963 = vunpack.c.0.s8 %v2962
      %v2964 = vperm.slane %v2960, %v2963
      %v2965 = vrot.slane %v2964, 4
      %v2966 = vsel %vm501, %v2965, %v2958
      %v2968 = vunpack.c.l.s4 1934713408
      %v2969 = vunpack.c.0.s8 %v2968
      %v2970 = vperm.slane %v2966, %v2969
      %v2971 = vrot.slane %v2970, 4
      %v2972 = vsel %vm501, 0, %v2971
      %v2973 = vsel %vm501, %v2623, %v2616
      %v2975 = vunpack.c.l.s4 1983009808
      %v2976 = vunpack.c.0.s8 %v2975
      %v2977 = vperm.slane %v2973, %v2976
      %v2978 = vrot.slane %v2624, 4
      %v2979 = vsel %vm501, %v2978, %v2622
      %v2981 = vunpack.c.l.s4 1983009808
      %v2982 = vunpack.c.0.s8 %v2981
      %v2983 = vperm.slane %v2979, %v2982
      %v2984 = vrot.slane %v2983, 4
      %v2985 = vsel %vm501, %v2984, %v2977
      %v2987 = vunpack.c.l.s4 1934713408
      %v2988 = vunpack.c.0.s8 %v2987
      %v2989 = vperm.slane %v2985, %v2988
      %v2990 = vrot.slane %v2989, 4
      %v2991 = vsel %vm501, 0, %v2990
      %v2992 = vsel %vm501, %v2649, %v2642
      %v2994 = vunpack.c.l.s4 1983009808
      %v2995 = vunpack.c.0.s8 %v2994
      %v2996 = vperm.slane %v2992, %v2995
      %v2997 = vrot.slane %v2650, 4
      %v2998 = vsel %vm501, %v2997, %v2648
      %v3000 = vunpack.c.l.s4 1983009808
      %v3001 = vunpack.c.0.s8 %v3000
      %v3002 = vperm.slane %v2998, %v3001
      %v3003 = vrot.slane %v3002, 4
      %v3004 = vsel %vm501, %v3003, %v2996
      %v3006 = vunpack.c.l.s4 1934713408
      %v3007 = vunpack.c.0.s8 %v3006
      %v3008 = vperm.slane %v3004, %v3007
      %v3009 = vrot.slane %v3008, 4
      %v3010 = vsel %vm501, 0, %v3009
      %v3011 = vsel %vm501, %v2675, %v2668
      %v3013 = vunpack.c.l.s4 1983009808
      %v3014 = vunpack.c.0.s8 %v3013
      %v3015 = vperm.slane %v3011, %v3014
      %v3016 = vrot.slane %v2676, 4
      %v3017 = vsel %vm501, %v3016, %v2674
      %v3019 = vunpack.c.l.s4 1983009808
      %v3020 = vunpack.c.0.s8 %v3019
      %v3021 = vperm.slane %v3017, %v3020
      %v3022 = vrot.slane %v3021, 4
      %v3023 = vsel %vm501, %v3022, %v3015
      %v3025 = vunpack.c.l.s4 1934713408
      %v3026 = vunpack.c.0.s8 %v3025
      %v3027 = vperm.slane %v3023, %v3026
      %v3028 = vrot.slane %v3027, 4
      %v3029 = vsel %vm501, 0, %v3028
      %v3030 = vsel %vm501, %v2701, %v2694
      %v3032 = vunpack.c.l.s4 1983009808
      %v3033 = vunpack.c.0.s8 %v3032
      %v3034 = vperm.slane %v3030, %v3033
      %v3035 = vrot.slane %v2702, 4
      %v3036 = vsel %vm501, %v3035, %v2700
      %v3038 = vunpack.c.l.s4 1983009808
      %v3039 = vunpack.c.0.s8 %v3038
      %v3040 = vperm.slane %v3036, %v3039
      %v3041 = vrot.slane %v3040, 4
      %v3042 = vsel %vm501, %v3041, %v3034
      %v3044 = vunpack.c.l.s4 1934713408
      %v3045 = vunpack.c.0.s8 %v3044
      %v3046 = vperm.slane %v3042, %v3045
      %v3047 = vrot.slane %v3046, 4
      %v3048 = vsel %vm501, 0, %v3047
      %v3049 = vsel %vm501, %v2727, %v2720
      %v3051 = vunpack.c.l.s4 1983009808
      %v3052 = vunpack.c.0.s8 %v3051
      %v3053 = vperm.slane %v3049, %v3052
      %v3054 = vrot.slane %v2728, 4
      %v3055 = vsel %vm501, %v3054, %v2726
      %v3057 = vunpack.c.l.s4 1983009808
      %v3058 = vunpack.c.0.s8 %v3057
      %v3059 = vperm.slane %v3055, %v3058
      %v3060 = vrot.slane %v3059, 4
      %v3061 = vsel %vm501, %v3060, %v3053
      %v3063 = vunpack.c.l.s4 1934713408
      %v3064 = vunpack.c.0.s8 %v3063
      %v3065 = vperm.slane %v3061, %v3064
      %v3066 = vrot.slane %v3065, 4
      %v3067 = vsel %vm501, 0, %v3066
      %v3068 = vsel %vm501, %v2753, %v2746
      %v3070 = vunpack.c.l.s4 1983009808
      %v3071 = vunpack.c.0.s8 %v3070
      %v3072 = vperm.slane %v3068, %v3071
      %v3073 = vrot.slane %v2754, 4
      %v3074 = vsel %vm501, %v3073, %v2752
      %v3076 = vunpack.c.l.s4 1983009808
      %v3077 = vunpack.c.0.s8 %v3076
      %v3078 = vperm.slane %v3074, %v3077
      %v3079 = vrot.slane %v3078, 4
      %v3080 = vsel %vm501, %v3079, %v3072
      %v3082 = vunpack.c.l.s4 1934713408
      %v3083 = vunpack.c.0.s8 %v3082
      %v3084 = vperm.slane %v3080, %v3083
      %v3085 = vrot.slane %v3084, 4
      %v3086 = vsel %vm501, 0, %v3085
      %v3087 = vsel %vm501, %v2779, %v2772
      %v3089 = vunpack.c.l.s4 1983009808
      %v3090 = vunpack.c.0.s8 %v3089
      %v3091 = vperm.slane %v3087, %v3090
      %v3092 = vrot.slane %v2780, 4
      %v3093 = vsel %vm501, %v3092, %v2778
      %v3095 = vunpack.c.l.s4 1983009808
      %v3096 = vunpack.c.0.s8 %v3095
      %v3097 = vperm.slane %v3093, %v3096
      %v3098 = vrot.slane %v3097, 4
      %v3099 = vsel %vm501, %v3098, %v3091
      %v3101 = vunpack.c.l.s4 1934713408
      %v3102 = vunpack.c.0.s8 %v3101
      %v3103 = vperm.slane %v3099, %v3102
      %v3104 = vrot.slane %v3103, 4
      %v3105 = vsel %vm501, 0, %v3104
      %v3106 = vsel %vm501, %v2805, %v2798
      %v3108 = vunpack.c.l.s4 1983009808
      %v3109 = vunpack.c.0.s8 %v3108
      %v3110 = vperm.slane %v3106, %v3109
      %v3111 = vrot.slane %v2806, 4
      %v3112 = vsel %vm501, %v3111, %v2804
      %v3114 = vunpack.c.l.s4 1983009808
      %v3115 = vunpack.c.0.s8 %v3114
      %v3116 = vperm.slane %v3112, %v3115
      %v3117 = vrot.slane %v3116, 4
      %v3118 = vsel %vm501, %v3117, %v3110
      %v3120 = vunpack.c.l.s4 1934713408
      %v3121 = vunpack.c.0.s8 %v3120
      %v3122 = vperm.slane %v3118, %v3121
      %v3123 = vrot.slane %v3122, 4
      %v3124 = vsel %vm501, 0, %v3123
      %v3125 = vsel %vm501, %v2831, %v2824
      %v3127 = vunpack.c.l.s4 1983009808
      %v3128 = vunpack.c.0.s8 %v3127
      %v3129 = vperm.slane %v3125, %v3128
      %v3130 = vrot.slane %v2832, 4
      %v3131 = vsel %vm501, %v3130, %v2830
      %v3133 = vunpack.c.l.s4 1983009808
      %v3134 = vunpack.c.0.s8 %v3133
      %v3135 = vperm.slane %v3131, %v3134
      %v3136 = vrot.slane %v3135, 4
      %v3137 = vsel %vm501, %v3136, %v3129
      %v3139 = vunpack.c.l.s4 1934713408
      %v3140 = vunpack.c.0.s8 %v3139
      %v3141 = vperm.slane %v3137, %v3140
      %v3142 = vrot.slane %v3141, 4
      %v3143 = vsel %vm501, 0, %v3142
      %v3144 = vsel %vm501, %v2857, %v2850
      %v3146 = vunpack.c.l.s4 1983009808
      %v3147 = vunpack.c.0.s8 %v3146
      %v3148 = vperm.slane %v3144, %v3147
      %v3149 = vrot.slane %v2858, 4
      %v3150 = vsel %vm501, %v3149, %v2856
      %v3152 = vunpack.c.l.s4 1983009808
      %v3153 = vunpack.c.0.s8 %v3152
      %v3154 = vperm.slane %v3150, %v3153
      %v3155 = vrot.slane %v3154, 4
      %v3156 = vsel %vm501, %v3155, %v3148
      %v3158 = vunpack.c.l.s4 1934713408
      %v3159 = vunpack.c.0.s8 %v3158
      %v3160 = vperm.slane %v3156, %v3159
      %v3161 = vrot.slane %v3160, 4
      %v3162 = vsel %vm501, 0, %v3161
      %v3165 = vpack.i.b16 %v2894, %v2875
      %v3166 = vshrl.u32 %v2875, 16
      %v3167 = vshrl.u32 %v2894, 16
      %v3168 = vpack.i.b16 %v3167, %v3166
      %v3171 = vpack.i.b16 %v2896, %v2877
      %v3172 = vshrl.u32 %v2877, 16
      %v3173 = vshrl.u32 %v2896, 16
      %v3174 = vpack.i.b16 %v3173, %v3172
      %v3177 = vpack.i.b16 %v2932, %v2913
      %v3178 = vshrl.u32 %v2913, 16
      %v3179 = vshrl.u32 %v2932, 16
      %v3180 = vpack.i.b16 %v3179, %v3178
      %v3183 = vpack.i.b16 %v2934, %v2915
      %v3184 = vshrl.u32 %v2915, 16
      %v3185 = vshrl.u32 %v2934, 16
      %v3186 = vpack.i.b16 %v3185, %v3184
      %v3189 = vpack.i.b16 %v2970, %v2951
      %v3190 = vshrl.u32 %v2951, 16
      %v3191 = vshrl.u32 %v2970, 16
      %v3192 = vpack.i.b16 %v3191, %v3190
      %v3195 = vpack.i.b16 %v2972, %v2953
      %v3196 = vshrl.u32 %v2953, 16
      %v3197 = vshrl.u32 %v2972, 16
      %v3198 = vpack.i.b16 %v3197, %v3196
      %v3201 = vpack.i.b16 %v3008, %v2989
      %v3202 = vshrl.u32 %v2989, 16
      %v3203 = vshrl.u32 %v3008, 16
      %v3204 = vpack.i.b16 %v3203, %v3202
      %v3207 = vpack.i.b16 %v3010, %v2991
      %v3208 = vshrl.u32 %v2991, 16
      %v3209 = vshrl.u32 %v3010, 16
      %v3210 = vpack.i.b16 %v3209, %v3208
      %v3213 = vpack.i.b16 %v3046, %v3027
      %v3214 = vshrl.u32 %v3027, 16
      %v3215 = vshrl.u32 %v3046, 16
      %v3216 = vpack.i.b16 %v3215, %v3214
      %v3219 = vpack.i.b16 %v3048, %v3029
      %v3220 = vshrl.u32 %v3029, 16
      %v3221 = vshrl.u32 %v3048, 16
      %v3222 = vpack.i.b16 %v3221, %v3220
      %v3225 = vpack.i.b16 %v3084, %v3065
      %v3226 = vshrl.u32 %v3065, 16
      %v3227 = vshrl.u32 %v3084, 16
      %v3228 = vpack.i.b16 %v3227, %v3226
      %v3231 = vpack.i.b16 %v3086, %v3067
      %v3232 = vshrl.u32 %v3067, 16
      %v3233 = vshrl.u32 %v3086, 16
      %v3234 = vpack.i.b16 %v3233, %v3232
      %v3237 = vpack.i.b16 %v3122, %v3103
      %v3238 = vshrl.u32 %v3103, 16
      %v3239 = vshrl.u32 %v3122, 16
      %v3240 = vpack.i.b16 %v3239, %v3238
      %v3243 = vpack.i.b16 %v3124, %v3105
      %v3244 = vshrl.u32 %v3105, 16
      %v3245 = vshrl.u32 %v3124, 16
      %v3246 = vpack.i.b16 %v3245, %v3244
      %v3249 = vpack.i.b16 %v3160, %v3141
      %v3250 = vshrl.u32 %v3141, 16
      %v3251 = vshrl.u32 %v3160, 16
      %v3252 = vpack.i.b16 %v3251, %v3250
      %v3255 = vpack.i.b16 %v3162, %v3143
      %v3256 = vshrl.u32 %v3143, 16
      %v3257 = vshrl.u32 %v3162, 16
      %v3258 = vpack.i.b16 %v3257, %v3256
      %v3259 = vunpack.c.l.b16 %v1213
      %v3260 = vunpack.c.l.b16 %v1225
      %v3261 = vpack.c.b16 %v3260, %v3259
      %v3262 = vunpack.c.l.b16 %v2189
      %v3263 = vunpack.c.l.b16 %v2201
      %v3264 = vpack.c.b16 %v3263, %v3262
      %vm3265 = vcmask 64512
      %v3267 = vsel %vm3265, %v3261, 0
      %v3270 = vsel %vm3265, %v3264, 0
      %3272 = vmatpush.bf16.xpose.msra.mxu0 0
      %3273 = vmatpush.bf16.xpose.msra.mxu0 0
      %3274 = vmatpush.bf16.xpose.msra.mxu0 0
      %3275 = vmatpush.bf16.xpose.msra.mxu0 0
      %3276 = vmatpush.bf16.xpose.msra.mxu0 0
      %3277 = vmatpush.bf16.xpose.msra.mxu0 0
      %3278 = vmatpush.bf16.xpose.msra.mxu0 0
      %3279 = vmatpush.bf16.xpose.msra.mxu0 %v3270
      %3280 = vmatmul.bf16.gmra.mxu0 %v3267
      %v3281 = vpop.f32.mrf.mxu0
      %v3282 = vadd.f32 0.0, %v3281
      %v3283 = vpop.f32.mrf.mxu0
      %v3284 = vadd.f32 0.0, %v3283
      %3285 = vdwg.mxu0
      %v3286 = vunpack.c.l.b16 %v1216
      %v3287 = vunpack.c.l.b16 %v1228
      %v3288 = vpack.c.b16 %v3287, %v3286
      %v3289 = vunpack.c.l.b16 %v2192
      %v3290 = vunpack.c.l.b16 %v2204
      %v3291 = vpack.c.b16 %v3290, %v3289
      %v3293 = vsel %vm3265, %v3288, 0
      %v3296 = vsel %vm3265, %v3291, 0
      %3298 = vmatpush.bf16.xpose.msra.mxu0 0
      %3299 = vmatpush.bf16.xpose.msra.mxu0 0
      %3300 = vmatpush.bf16.xpose.msra.mxu0 0
      %3301 = vmatpush.bf16.xpose.msra.mxu0 0
      %3302 = vmatpush.bf16.xpose.msra.mxu0 0
      %3303 = vmatpush.bf16.xpose.msra.mxu0 0
      %3304 = vmatpush.bf16.xpose.msra.mxu0 0
      %3305 = vmatpush.bf16.xpose.msra.mxu0 %v3296
      %3306 = vmatmul.bf16.gmra.mxu0 %v3293
      %v3307 = vpop.f32.mrf.mxu0
      %v3308 = vadd.f32 0.0, %v3307
      %v3309 = vpop.f32.mrf.mxu0
      %v3310 = vadd.f32 0.0, %v3309
      %3311 = vdwg.mxu0
      %v3312 = vunpack.c.l.b16 %v1219
      %v3313 = vunpack.c.l.b16 %v1231
      %v3314 = vpack.c.b16 %v3313, %v3312
      %v3315 = vunpack.c.l.b16 %v2195
      %v3316 = vunpack.c.l.b16 %v2207
      %v3317 = vpack.c.b16 %v3316, %v3315
      %v3319 = vsel %vm3265, %v3314, 0
      %v3322 = vsel %vm3265, %v3317, 0
      %3324 = vmatpush.bf16.xpose.msra.mxu0 0
      %3325 = vmatpush.bf16.xpose.msra.mxu0 0
      %3326 = vmatpush.bf16.xpose.msra.mxu0 0
      %3327 = vmatpush.bf16.xpose.msra.mxu0 0
      %3328 = vmatpush.bf16.xpose.msra.mxu0 0
      %3329 = vmatpush.bf16.xpose.msra.mxu0 0
      %3330 = vmatpush.bf16.xpose.msra.mxu0 0
      %3331 = vmatpush.bf16.xpose.msra.mxu0 %v3322
      %3332 = vmatmul.bf16.gmra.mxu0 %v3319
      %v3333 = vpop.f32.mrf.mxu0
      %v3334 = vadd.f32 0.0, %v3333
      %v3335 = vpop.f32.mrf.mxu0
      %v3336 = vadd.f32 0.0, %v3335
      %3337 = vdwg.mxu0
      %v3338 = vunpack.c.l.b16 %v1222
      %v3339 = vunpack.c.l.b16 %v1234
      %v3340 = vpack.c.b16 %v3339, %v3338
      %v3341 = vunpack.c.l.b16 %v2198
      %v3342 = vunpack.c.l.b16 %v2210
      %v3343 = vpack.c.b16 %v3342, %v3341
      %v3345 = vsel %vm3265, %v3340, 0
      %v3348 = vsel %vm3265, %v3343, 0
      %3350 = vmatpush.bf16.xpose.msra.mxu0 0
      %3351 = vmatpush.bf16.xpose.msra.mxu0 0
      %3352 = vmatpush.bf16.xpose.msra.mxu0 0
      %3353 = vmatpush.bf16.xpose.msra.mxu0 0
      %3354 = vmatpush.bf16.xpose.msra.mxu0 0
      %3355 = vmatpush.bf16.xpose.msra.mxu0 0
      %3356 = vmatpush.bf16.xpose.msra.mxu0 0
      %3357 = vmatpush.bf16.xpose.msra.mxu0 %v3348
      %3358 = vmatmul.bf16.gmra.mxu0 %v3345
      %v3359 = vpop.f32.mrf.mxu0
      %v3360 = vadd.f32 0.0, %v3359
      %v3361 = vpop.f32.mrf.mxu0
      %v3362 = vadd.f32 0.0, %v3361
      %3363 = vdwg.mxu0
      %v3364 = vunpack.c.l.b16 %v1237
      %v3365 = vunpack.c.l.b16 %v1249
      %v3366 = vpack.c.b16 %v3365, %v3364
      %v3367 = vunpack.c.l.b16 %v2213
      %v3368 = vunpack.c.l.b16 %v2225
      %v3369 = vpack.c.b16 %v3368, %v3367
      %v3371 = vsel %vm3265, %v3366, 0
      %v3374 = vsel %vm3265, %v3369, 0
      %3376 = vmatpush.bf16.xpose.msra.mxu0 0
      %3377 = vmatpush.bf16.xpose.msra.mxu0 0
      %3378 = vmatpush.bf16.xpose.msra.mxu0 0
      %3379 = vmatpush.bf16.xpose.msra.mxu0 0
      %3380 = vmatpush.bf16.xpose.msra.mxu0 0
      %3381 = vmatpush.bf16.xpose.msra.mxu0 0
      %3382 = vmatpush.bf16.xpose.msra.mxu0 0
      %3383 = vmatpush.bf16.xpose.msra.mxu0 %v3374
      %3384 = vmatmul.bf16.gmra.mxu0 %v3371
      %v3385 = vpop.f32.mrf.mxu0
      %v3386 = vadd.f32 0.0, %v3385
      %v3387 = vpop.f32.mrf.mxu0
      %v3388 = vadd.f32 0.0, %v3387
      %3389 = vdwg.mxu0
      %v3390 = vunpack.c.l.b16 %v1240
      %v3391 = vunpack.c.l.b16 %v1252
      %v3392 = vpack.c.b16 %v3391, %v3390
      %v3393 = vunpack.c.l.b16 %v2216
      %v3394 = vunpack.c.l.b16 %v2228
      %v3395 = vpack.c.b16 %v3394, %v3393
      %v3397 = vsel %vm3265, %v3392, 0
      %v3400 = vsel %vm3265, %v3395, 0
      %3402 = vmatpush.bf16.xpose.msra.mxu0 0
      %3403 = vmatpush.bf16.xpose.msra.mxu0 0
      %3404 = vmatpush.bf16.xpose.msra.mxu0 0
      %3405 = vmatpush.bf16.xpose.msra.mxu0 0
      %3406 = vmatpush.bf16.xpose.msra.mxu0 0
      %3407 = vmatpush.bf16.xpose.msra.mxu0 0
      %3408 = vmatpush.bf16.xpose.msra.mxu0 0
      %3409 = vmatpush.bf16.xpose.msra.mxu0 %v3400
      %3410 = vmatmul.bf16.gmra.mxu0 %v3397
      %v3411 = vpop.f32.mrf.mxu0
      %v3412 = vadd.f32 0.0, %v3411
      %v3413 = vpop.f32.mrf.mxu0
      %v3414 = vadd.f32 0.0, %v3413
      %3415 = vdwg.mxu0
      %v3416 = vunpack.c.l.b16 %v1243
      %v3417 = vunpack.c.l.b16 %v1255
      %v3418 = vpack.c.b16 %v3417, %v3416
      %v3419 = vunpack.c.l.b16 %v2219
      %v3420 = vunpack.c.l.b16 %v2231
      %v3421 = vpack.c.b16 %v3420, %v3419
      %v3423 = vsel %vm3265, %v3418, 0
      %v3426 = vsel %vm3265, %v3421, 0
      %3428 = vmatpush.bf16.xpose.msra.mxu0 0
      %3429 = vmatpush.bf16.xpose.msra.mxu0 0
      %3430 = vmatpush.bf16.xpose.msra.mxu0 0
      %3431 = vmatpush.bf16.xpose.msra.mxu0 0
      %3432 = vmatpush.bf16.xpose.msra.mxu0 0
      %3433 = vmatpush.bf16.xpose.msra.mxu0 0
      %3434 = vmatpush.bf16.xpose.msra.mxu0 0
      %3435 = vmatpush.bf16.xpose.msra.mxu0 %v3426
      %3436 = vmatmul.bf16.gmra.mxu0 %v3423
      %v3437 = vpop.f32.mrf.mxu0
      %v3438 = vadd.f32 0.0, %v3437
      %v3439 = vpop.f32.mrf.mxu0
      %v3440 = vadd.f32 0.0, %v3439
      %3441 = vdwg.mxu0
      %v3442 = vunpack.c.l.b16 %v1246
      %v3443 = vunpack.c.l.b16 %v1258
      %v3444 = vpack.c.b16 %v3443, %v3442
      %v3445 = vunpack.c.l.b16 %v2222
      %v3446 = vunpack.c.l.b16 %v2234
      %v3447 = vpack.c.b16 %v3446, %v3445
      %v3449 = vsel %vm3265, %v3444, 0
      %v3452 = vsel %vm3265, %v3447, 0
      %3454 = vmatpush.bf16.xpose.msra.mxu0 0
      %3455 = vmatpush.bf16.xpose.msra.mxu0 0
      %3456 = vmatpush.bf16.xpose.msra.mxu0 0
      %3457 = vmatpush.bf16.xpose.msra.mxu0 0
      %3458 = vmatpush.bf16.xpose.msra.mxu0 0
      %3459 = vmatpush.bf16.xpose.msra.mxu0 0
      %3460 = vmatpush.bf16.xpose.msra.mxu0 0
      %3461 = vmatpush.bf16.xpose.msra.mxu0 %v3452
      %3462 = vmatmul.bf16.gmra.mxu0 %v3449
      %v3463 = vpop.f32.mrf.mxu0
      %v3464 = vadd.f32 0.0, %v3463
      %v3465 = vpop.f32.mrf.mxu0
      %v3466 = vadd.f32 0.0, %v3465
      %3467 = vdwg.mxu0
      %v3468 = vunpack.c.l.b16 %v1261
      %v3469 = vunpack.c.l.b16 %v1273
      %v3470 = vpack.c.b16 %v3469, %v3468
      %v3471 = vunpack.c.l.b16 %v2237
      %v3472 = vunpack.c.l.b16 %v2249
      %v3473 = vpack.c.b16 %v3472, %v3471
      %v3475 = vsel %vm3265, %v3470, 0
      %v3478 = vsel %vm3265, %v3473, 0
      %3480 = vmatpush.bf16.xpose.msra.mxu0 0
      %3481 = vmatpush.bf16.xpose.msra.mxu0 0
      %3482 = vmatpush.bf16.xpose.msra.mxu0 0
      %3483 = vmatpush.bf16.xpose.msra.mxu0 0
      %3484 = vmatpush.bf16.xpose.msra.mxu0 0
      %3485 = vmatpush.bf16.xpose.msra.mxu0 0
      %3486 = vmatpush.bf16.xpose.msra.mxu0 0
      %3487 = vmatpush.bf16.xpose.msra.mxu0 %v3478
      %3488 = vmatmul.bf16.gmra.mxu0 %v3475
      %v3489 = vpop.f32.mrf.mxu0
      %v3490 = vadd.f32 0.0, %v3489
      %v3491 = vpop.f32.mrf.mxu0
      %v3492 = vadd.f32 0.0, %v3491
      %3493 = vdwg.mxu0
      %v3494 = vunpack.c.l.b16 %v1264
      %v3495 = vunpack.c.l.b16 %v1276
      %v3496 = vpack.c.b16 %v3495, %v3494
      %v3497 = vunpack.c.l.b16 %v2240
      %v3498 = vunpack.c.l.b16 %v2252
      %v3499 = vpack.c.b16 %v3498, %v3497
      %v3501 = vsel %vm3265, %v3496, 0
      %v3504 = vsel %vm3265, %v3499, 0
      %3506 = vmatpush.bf16.xpose.msra.mxu0 0
      %3507 = vmatpush.bf16.xpose.msra.mxu0 0
      %3508 = vmatpush.bf16.xpose.msra.mxu0 0
      %3509 = vmatpush.bf16.xpose.msra.mxu0 0
      %3510 = vmatpush.bf16.xpose.msra.mxu0 0
      %3511 = vmatpush.bf16.xpose.msra.mxu0 0
      %3512 = vmatpush.bf16.xpose.msra.mxu0 0
      %3513 = vmatpush.bf16.xpose.msra.mxu0 %v3504
      %3514 = vmatmul.bf16.gmra.mxu0 %v3501
      %v3515 = vpop.f32.mrf.mxu0
      %v3516 = vadd.f32 0.0, %v3515
      %v3517 = vpop.f32.mrf.mxu0
      %v3518 = vadd.f32 0.0, %v3517
      %3519 = vdwg.mxu0
      %v3520 = vunpack.c.l.b16 %v1267
      %v3521 = vunpack.c.l.b16 %v1279
      %v3522 = vpack.c.b16 %v3521, %v3520
      %v3523 = vunpack.c.l.b16 %v2243
      %v3524 = vunpack.c.l.b16 %v2255
      %v3525 = vpack.c.b16 %v3524, %v3523
      %v3527 = vsel %vm3265, %v3522, 0
      %v3530 = vsel %vm3265, %v3525, 0
      %3532 = vmatpush.bf16.xpose.msra.mxu0 0
      %3533 = vmatpush.bf16.xpose.msra.mxu0 0
      %3534 = vmatpush.bf16.xpose.msra.mxu0 0
      %3535 = vmatpush.bf16.xpose.msra.mxu0 0
      %3536 = vmatpush.bf16.xpose.msra.mxu0 0
      %3537 = vmatpush.bf16.xpose.msra.mxu0 0
      %3538 = vmatpush.bf16.xpose.msra.mxu0 0
      %3539 = vmatpush.bf16.xpose.msra.mxu0 %v3530
      %3540 = vmatmul.bf16.gmra.mxu0 %v3527
      %v3541 = vpop.f32.mrf.mxu0
      %v3542 = vadd.f32 0.0, %v3541
      %v3543 = vpop.f32.mrf.mxu0
      %v3544 = vadd.f32 0.0, %v3543
      %3545 = vdwg.mxu0
      %v3546 = vunpack.c.l.b16 %v1270
      %v3547 = vunpack.c.l.b16 %v1282
      %v3548 = vpack.c.b16 %v3547, %v3546
      %v3549 = vunpack.c.l.b16 %v2246
      %v3550 = vunpack.c.l.b16 %v2258
      %v3551 = vpack.c.b16 %v3550, %v3549
      %v3553 = vsel %vm3265, %v3548, 0
      %v3556 = vsel %vm3265, %v3551, 0
      %3558 = vmatpush.bf16.xpose.msra.mxu0 0
      %3559 = vmatpush.bf16.xpose.msra.mxu0 0
      %3560 = vmatpush.bf16.xpose.msra.mxu0 0
      %3561 = vmatpush.bf16.xpose.msra.mxu0 0
      %3562 = vmatpush.bf16.xpose.msra.mxu0 0
      %3563 = vmatpush.bf16.xpose.msra.mxu0 0
      %3564 = vmatpush.bf16.xpose.msra.mxu0 0
      %3565 = vmatpush.bf16.xpose.msra.mxu0 %v3556
      %3566 = vmatmul.bf16.gmra.mxu0 %v3553
      %v3567 = vpop.f32.mrf.mxu0
      %v3568 = vadd.f32 0.0, %v3567
      %v3569 = vpop.f32.mrf.mxu0
      %v3570 = vadd.f32 0.0, %v3569
      %3571 = vdwg.mxu0
      %v3572 = vunpack.c.l.b16 %v1285
      %v3573 = vunpack.c.l.b16 %v1297
      %v3574 = vpack.c.b16 %v3573, %v3572
      %v3575 = vunpack.c.l.b16 %v2261
      %v3576 = vunpack.c.l.b16 %v2273
      %v3577 = vpack.c.b16 %v3576, %v3575
      %v3579 = vsel %vm3265, %v3574, 0
      %v3582 = vsel %vm3265, %v3577, 0
      %3584 = vmatpush.bf16.xpose.msra.mxu0 0
      %3585 = vmatpush.bf16.xpose.msra.mxu0 0
      %3586 = vmatpush.bf16.xpose.msra.mxu0 0
      %3587 = vmatpush.bf16.xpose.msra.mxu0 0
      %3588 = vmatpush.bf16.xpose.msra.mxu0 0
      %3589 = vmatpush.bf16.xpose.msra.mxu0 0
      %3590 = vmatpush.bf16.xpose.msra.mxu0 0
      %3591 = vmatpush.bf16.xpose.msra.mxu0 %v3582
      %3592 = vmatmul.bf16.gmra.mxu0 %v3579
      %v3593 = vpop.f32.mrf.mxu0
      %v3594 = vadd.f32 0.0, %v3593
      %v3595 = vpop.f32.mrf.mxu0
      %v3596 = vadd.f32 0.0, %v3595
      %3597 = vdwg.mxu0
      %v3598 = vunpack.c.l.b16 %v1288
      %v3599 = vunpack.c.l.b16 %v1300
      %v3600 = vpack.c.b16 %v3599, %v3598
      %v3601 = vunpack.c.l.b16 %v2264
      %v3602 = vunpack.c.l.b16 %v2276
      %v3603 = vpack.c.b16 %v3602, %v3601
      %v3605 = vsel %vm3265, %v3600, 0
      %v3608 = vsel %vm3265, %v3603, 0
      %3610 = vmatpush.bf16.xpose.msra.mxu0 0
      %3611 = vmatpush.bf16.xpose.msra.mxu0 0
      %3612 = vmatpush.bf16.xpose.msra.mxu0 0
      %3613 = vmatpush.bf16.xpose.msra.mxu0 0
      %3614 = vmatpush.bf16.xpose.msra.mxu0 0
      %3615 = vmatpush.bf16.xpose.msra.mxu0 0
      %3616 = vmatpush.bf16.xpose.msra.mxu0 0
      %3617 = vmatpush.bf16.xpose.msra.mxu0 %v3608
      %3618 = vmatmul.bf16.gmra.mxu0 %v3605
      %v3619 = vpop.f32.mrf.mxu0
      %v3620 = vadd.f32 0.0, %v3619
      %v3621 = vpop.f32.mrf.mxu0
      %v3622 = vadd.f32 0.0, %v3621
      %3623 = vdwg.mxu0
      %v3624 = vunpack.c.l.b16 %v1291
      %v3625 = vunpack.c.l.b16 %v1303
      %v3626 = vpack.c.b16 %v3625, %v3624
      %v3627 = vunpack.c.l.b16 %v2267
      %v3628 = vunpack.c.l.b16 %v2279
      %v3629 = vpack.c.b16 %v3628, %v3627
      %v3631 = vsel %vm3265, %v3626, 0
      %v3634 = vsel %vm3265, %v3629, 0
      %3636 = vmatpush.bf16.xpose.msra.mxu0 0
      %3637 = vmatpush.bf16.xpose.msra.mxu0 0
      %3638 = vmatpush.bf16.xpose.msra.mxu0 0
      %3639 = vmatpush.bf16.xpose.msra.mxu0 0
      %3640 = vmatpush.bf16.xpose.msra.mxu0 0
      %3641 = vmatpush.bf16.xpose.msra.mxu0 0
      %3642 = vmatpush.bf16.xpose.msra.mxu0 0
      %3643 = vmatpush.bf16.xpose.msra.mxu0 %v3634
      %3644 = vmatmul.bf16.gmra.mxu0 %v3631
      %v3645 = vpop.f32.mrf.mxu0
      %v3646 = vadd.f32 0.0, %v3645
      %v3647 = vpop.f32.mrf.mxu0
      %v3648 = vadd.f32 0.0, %v3647
      %3649 = vdwg.mxu0
      %v3650 = vunpack.c.l.b16 %v1294
      %v3651 = vunpack.c.l.b16 %v1306
      %v3652 = vpack.c.b16 %v3651, %v3650
      %v3653 = vunpack.c.l.b16 %v2270
      %v3654 = vunpack.c.l.b16 %v2282
      %v3655 = vpack.c.b16 %v3654, %v3653
      %v3657 = vsel %vm3265, %v3652, 0
      %v3660 = vsel %vm3265, %v3655, 0
      %3662 = vmatpush.bf16.xpose.msra.mxu0 0
      %3663 = vmatpush.bf16.xpose.msra.mxu0 0
      %3664 = vmatpush.bf16.xpose.msra.mxu0 0
      %3665 = vmatpush.bf16.xpose.msra.mxu0 0
      %3666 = vmatpush.bf16.xpose.msra.mxu0 0
      %3667 = vmatpush.bf16.xpose.msra.mxu0 0
      %3668 = vmatpush.bf16.xpose.msra.mxu0 0
      %3669 = vmatpush.bf16.xpose.msra.mxu0 %v3660
      %3670 = vmatmul.bf16.gmra.mxu0 %v3657
      %v3671 = vpop.f32.mrf.mxu0
      %v3672 = vadd.f32 0.0, %v3671
      %v3673 = vpop.f32.mrf.mxu0
      %v3674 = vadd.f32 0.0, %v3673
      %3675 = vdwg.mxu0
      %v3676 = vld [vmem:[%s3] sm:$0xff]
      %v3677 = vld [vmem:[%s3 + $0x8] sm:$0xff]
      %v3678 = vld [vmem:[%s3 + $0x10] sm:$0xff]
      %v3679 = vld [vmem:[%s3 + $0x18] sm:$0xff]
      %v3680 = vld [vmem:[%s3 + $0x20] sm:$0xff]
      %v3681 = vld [vmem:[%s3 + $0x28] sm:$0xff]
      %v3682 = vld [vmem:[%s3 + $0x30] sm:$0xff]
      %v3683 = vld [vmem:[%s3 + $0x38] sm:$0xff]
      %v3684 = vadd.f32 %v3282, %v3676
      %v3685 = vadd.f32 %v3284, %v3677
      %v3686 = vadd.f32 %v3308, %v3678
      %v3687 = vadd.f32 %v3310, %v3679
      %v3688 = vadd.f32 %v3334, %v3680
      %v3689 = vadd.f32 %v3336, %v3681
      %v3690 = vadd.f32 %v3360, %v3682
      %v3691 = vadd.f32 %v3362, %v3683
      %v3692 = vadd.f32 %v3386, %v3676
      %v3693 = vadd.f32 %v3388, %v3677
      %v3694 = vadd.f32 %v3412, %v3678
      %v3695 = vadd.f32 %v3414, %v3679
      %v3696 = vadd.f32 %v3438, %v3680
      %v3697 = vadd.f32 %v3440, %v3681
      %v3698 = vadd.f32 %v3464, %v3682
      %v3699 = vadd.f32 %v3466, %v3683
      %v3700 = vadd.f32 %v3490, %v3676
      %v3701 = vadd.f32 %v3492, %v3677
      %v3702 = vadd.f32 %v3516, %v3678
      %v3703 = vadd.f32 %v3518, %v3679
      %v3704 = vadd.f32 %v3542, %v3680
      %v3705 = vadd.f32 %v3544, %v3681
      %v3706 = vadd.f32 %v3568, %v3682
      %v3707 = vadd.f32 %v3570, %v3683
      %v3708 = vadd.f32 %v3594, %v3676
      %v3709 = vadd.f32 %v3596, %v3677
      %v3710 = vadd.f32 %v3620, %v3678
      %v3711 = vadd.f32 %v3622, %v3679
      %v3712 = vadd.f32 %v3646, %v3680
      %v3713 = vadd.f32 %v3648, %v3681
      %v3714 = vadd.f32 %v3672, %v3682
      %v3715 = vadd.f32 %v3674, %v3683
      %vm3716 = vcmask 130048
      %v3717 = vsel %vm3716, %v3684, -inf
      %3718 = vmax.xlane.f32.xlu0 %v3717
      %v3719 = vpop.xlane.xlu0 %3718
      %v3720 = vsel %vm3716, %v3685, -inf
      %3721 = vmax.xlane.f32.xlu0 %v3720
      %v3722 = vpop.xlane.xlu0 %3721
      %v3723 = vsel %vm3716, %v3686, -inf
      %3724 = vmax.xlane.f32.xlu0 %v3723
      %v3725 = vpop.xlane.xlu0 %3724
      %v3726 = vsel %vm3716, %v3687, -inf
      %3727 = vmax.xlane.f32.xlu0 %v3726
      %v3728 = vpop.xlane.xlu0 %3727
      %v3729 = vsel %vm3716, %v3688, -inf
      %3730 = vmax.xlane.f32.xlu0 %v3729
      %v3731 = vpop.xlane.xlu0 %3730
      %v3732 = vsel %vm3716, %v3689, -inf
      %3733 = vmax.xlane.f32.xlu0 %v3732
      %v3734 = vpop.xlane.xlu0 %3733
      %v3735 = vsel %vm3716, %v3690, -inf
      %3736 = vmax.xlane.f32.xlu0 %v3735
      %v3737 = vpop.xlane.xlu0 %3736
      %v3738 = vsel %vm3716, %v3691, -inf
      %3739 = vmax.xlane.f32.xlu0 %v3738
      %v3740 = vpop.xlane.xlu0 %3739
      %v3741 = vsel %vm3716, %v3692, -inf
      %3742 = vmax.xlane.f32.xlu0 %v3741
      %v3743 = vpop.xlane.xlu0 %3742
      %v3744 = vsel %vm3716, %v3693, -inf
      %3745 = vmax.xlane.f32.xlu0 %v3744
      %v3746 = vpop.xlane.xlu0 %3745
      %v3747 = vsel %vm3716, %v3694, -inf
      %3748 = vmax.xlane.f32.xlu0 %v3747
      %v3749 = vpop.xlane.xlu0 %3748
      %v3750 = vsel %vm3716, %v3695, -inf
      %3751 = vmax.xlane.f32.xlu0 %v3750
      %v3752 = vpop.xlane.xlu0 %3751
      %v3753 = vsel %vm3716, %v3696, -inf
      %3754 = vmax.xlane.f32.xlu0 %v3753
      %v3755 = vpop.xlane.xlu0 %3754
      %v3756 = vsel %vm3716, %v3697, -inf
      %3757 = vmax.xlane.f32.xlu0 %v3756
      %v3758 = vpop.xlane.xlu0 %3757
      %v3759 = vsel %vm3716, %v3698, -inf
      %3760 = vmax.xlane.f32.xlu0 %v3759
      %v3761 = vpop.xlane.xlu0 %3760
      %v3762 = vsel %vm3716, %v3699, -inf
      %3763 = vmax.xlane.f32.xlu0 %v3762
      %v3764 = vpop.xlane.xlu0 %3763
      %v3765 = vsel %vm3716, %v3700, -inf
      %3766 = vmax.xlane.f32.xlu0 %v3765
      %v3767 = vpop.xlane.xlu0 %3766
      %v3768 = vsel %vm3716, %v3701, -inf
      %3769 = vmax.xlane.f32.xlu0 %v3768
      %v3770 = vpop.xlane.xlu0 %3769
      %v3771 = vsel %vm3716, %v3702, -inf
      %3772 = vmax.xlane.f32.xlu0 %v3771
      %v3773 = vpop.xlane.xlu0 %3772
      %v3774 = vsel %vm3716, %v3703, -inf
      %3775 = vmax.xlane.f32.xlu0 %v3774
      %v3776 = vpop.xlane.xlu0 %3775
      %v3777 = vsel %vm3716, %v3704, -inf
      %3778 = vmax.xlane.f32.xlu0 %v3777
      %v3779 = vpop.xlane.xlu0 %3778
      %v3780 = vsel %vm3716, %v3705, -inf
      %3781 = vmax.xlane.f32.xlu0 %v3780
      %v3782 = vpop.xlane.xlu0 %3781
      %v3783 = vsel %vm3716, %v3706, -inf
      %3784 = vmax.xlane.f32.xlu0 %v3783
      %v3785 = vpop.xlane.xlu0 %3784
      %v3786 = vsel %vm3716, %v3707, -inf
      %3787 = vmax.xlane.f32.xlu0 %v3786
      %v3788 = vpop.xlane.xlu0 %3787
      %v3789 = vsel %vm3716, %v3708, -inf
      %3790 = vmax.xlane.f32.xlu0 %v3789
      %v3791 = vpop.xlane.xlu0 %3790
      %v3792 = vsel %vm3716, %v3709, -inf
      %3793 = vmax.xlane.f32.xlu0 %v3792
      %v3794 = vpop.xlane.xlu0 %3793
      %v3795 = vsel %vm3716, %v3710, -inf
      %3796 = vmax.xlane.f32.xlu0 %v3795
      %v3797 = vpop.xlane.xlu0 %3796
      %v3798 = vsel %vm3716, %v3711, -inf
      %3799 = vmax.xlane.f32.xlu0 %v3798
      %v3800 = vpop.xlane.xlu0 %3799
      %v3801 = vsel %vm3716, %v3712, -inf
      %3802 = vmax.xlane.f32.xlu0 %v3801
      %v3803 = vpop.xlane.xlu0 %3802
      %v3804 = vsel %vm3716, %v3713, -inf
      %3805 = vmax.xlane.f32.xlu0 %v3804
      %v3806 = vpop.xlane.xlu0 %3805
      %v3807 = vsel %vm3716, %v3714, -inf
      %3808 = vmax.xlane.f32.xlu0 %v3807
      %v3809 = vpop.xlane.xlu0 %3808
      %v3810 = vsel %vm3716, %v3715, -inf
      %3811 = vmax.xlane.f32.xlu0 %v3810
      %v3812 = vpop.xlane.xlu0 %3811
      %v3813 = vsub.f32 %v3684, %v3719
      %v3814 = vsub.f32 %v3685, %v3722
      %v3815 = vsub.f32 %v3686, %v3725
      %v3816 = vsub.f32 %v3687, %v3728
      %v3817 = vsub.f32 %v3688, %v3731
      %v3818 = vsub.f32 %v3689, %v3734
      %v3819 = vsub.f32 %v3690, %v3737
      %v3820 = vsub.f32 %v3691, %v3740
      %v3821 = vsub.f32 %v3692, %v3743
      %v3822 = vsub.f32 %v3693, %v3746
      %v3823 = vsub.f32 %v3694, %v3749
      %v3824 = vsub.f32 %v3695, %v3752
      %v3825 = vsub.f32 %v3696, %v3755
      %v3826 = vsub.f32 %v3697, %v3758
      %v3827 = vsub.f32 %v3698, %v3761
      %v3828 = vsub.f32 %v3699, %v3764
      %v3829 = vsub.f32 %v3700, %v3767
      %v3830 = vsub.f32 %v3701, %v3770
      %v3831 = vsub.f32 %v3702, %v3773
      %v3832 = vsub.f32 %v3703, %v3776
      %v3833 = vsub.f32 %v3704, %v3779
      %v3834 = vsub.f32 %v3705, %v3782
      %v3835 = vsub.f32 %v3706, %v3785
      %v3836 = vsub.f32 %v3707, %v3788
      %v3837 = vsub.f32 %v3708, %v3791
      %v3838 = vsub.f32 %v3709, %v3794
      %v3839 = vsub.f32 %v3710, %v3797
      %v3840 = vsub.f32 %v3711, %v3800
      %v3841 = vsub.f32 %v3712, %v3803
      %v3842 = vsub.f32 %v3713, %v3806
      %v3843 = vsub.f32 %v3714, %v3809
      %v3844 = vsub.f32 %v3715, %v3812
      %v3845 = vmul.f32 %v3813, 1.442695
      %v3846 = vpow.pop %v3845
      %v3847 = vmul.f32 %v3814, 1.442695
      %v3848 = vpow.pop %v3847
      %v3849 = vmul.f32 %v3815, 1.442695
      %v3850 = vpow.pop %v3849
      %v3851 = vmul.f32 %v3816, 1.442695
      %v3852 = vpow.pop %v3851
      %v3853 = vmul.f32 %v3817, 1.442695
      %v3854 = vpow.pop %v3853
      %v3855 = vmul.f32 %v3818, 1.442695
      %v3856 = vpow.pop %v3855
      %v3857 = vmul.f32 %v3819, 1.442695
      %v3858 = vpow.pop %v3857
      %v3859 = vmul.f32 %v3820, 1.442695
      %v3860 = vpow.pop %v3859
      %v3861 = vmul.f32 %v3821, 1.442695
      %v3862 = vpow.pop %v3861
      %v3863 = vmul.f32 %v3822, 1.442695
      %v3864 = vpow.pop %v3863
      %v3865 = vmul.f32 %v3823, 1.442695
      %v3866 = vpow.pop %v3865
      %v3867 = vmul.f32 %v3824, 1.442695
      %v3868 = vpow.pop %v3867
      %v3869 = vmul.f32 %v3825, 1.442695
      %v3870 = vpow.pop %v3869
      %v3871 = vmul.f32 %v3826, 1.442695
      %v3872 = vpow.pop %v3871
      %v3873 = vmul.f32 %v3827, 1.442695
      %v3874 = vpow.pop %v3873
      %v3875 = vmul.f32 %v3828, 1.442695
      %v3876 = vpow.pop %v3875
      %v3877 = vmul.f32 %v3829, 1.442695
      %v3878 = vpow.pop %v3877
      %v3879 = vmul.f32 %v3830, 1.442695
      %v3880 = vpow.pop %v3879
      %v3881 = vmul.f32 %v3831, 1.442695
      %v3882 = vpow.pop %v3881
      %v3883 = vmul.f32 %v3832, 1.442695
      %v3884 = vpow.pop %v3883
      %v3885 = vmul.f32 %v3833, 1.442695
      %v3886 = vpow.pop %v3885
      %v3887 = vmul.f32 %v3834, 1.442695
      %v3888 = vpow.pop %v3887
      %v3889 = vmul.f32 %v3835, 1.442695
      %v3890 = vpow.pop %v3889
      %v3891 = vmul.f32 %v3836, 1.442695
      %v3892 = vpow.pop %v3891
      %v3893 = vmul.f32 %v3837, 1.442695
      %v3894 = vpow.pop %v3893
      %v3895 = vmul.f32 %v3838, 1.442695
      %v3896 = vpow.pop %v3895
      %v3897 = vmul.f32 %v3839, 1.442695
      %v3898 = vpow.pop %v3897
      %v3899 = vmul.f32 %v3840, 1.442695
      %v3900 = vpow.pop %v3899
      %v3901 = vmul.f32 %v3841, 1.442695
      %v3902 = vpow.pop %v3901
      %v3903 = vmul.f32 %v3842, 1.442695
      %v3904 = vpow.pop %v3903
      %v3905 = vmul.f32 %v3843, 1.442695
      %v3906 = vpow.pop %v3905
      %v3907 = vmul.f32 %v3844, 1.442695
      %v3908 = vpow.pop %v3907
      %v3909 = vsel %vm3716, %v3846, 0.0
      %3910 = vadd.xlane.f32.xlu0 %v3909
      %v3911 = vpop.xlane.xlu0 %3910
      %v3912 = vsel %vm3716, %v3848, 0.0
      %3913 = vadd.xlane.f32.xlu0 %v3912
      %v3914 = vpop.xlane.xlu0 %3913
      %v3915 = vsel %vm3716, %v3850, 0.0
      %3916 = vadd.xlane.f32.xlu0 %v3915
      %v3917 = vpop.xlane.xlu0 %3916
      %v3918 = vsel %vm3716, %v3852, 0.0
      %3919 = vadd.xlane.f32.xlu0 %v3918
      %v3920 = vpop.xlane.xlu0 %3919
      %v3921 = vsel %vm3716, %v3854, 0.0
      %3922 = vadd.xlane.f32.xlu0 %v3921
      %v3923 = vpop.xlane.xlu0 %3922
      %v3924 = vsel %vm3716, %v3856, 0.0
      %3925 = vadd.xlane.f32.xlu0 %v3924
      %v3926 = vpop.xlane.xlu0 %3925
      %v3927 = vsel %vm3716, %v3858, 0.0
      %3928 = vadd.xlane.f32.xlu0 %v3927
      %v3929 = vpop.xlane.xlu0 %3928
      %v3930 = vsel %vm3716, %v3860, 0.0
      %3931 = vadd.xlane.f32.xlu0 %v3930
      %v3932 = vpop.xlane.xlu0 %3931
      %v3933 = vsel %vm3716, %v3862, 0.0
      %3934 = vadd.xlane.f32.xlu0 %v3933
      %v3935 = vpop.xlane.xlu0 %3934
      %v3936 = vsel %vm3716, %v3864, 0.0
      %3937 = vadd.xlane.f32.xlu0 %v3936
      %v3938 = vpop.xlane.xlu0 %3937
      %v3939 = vsel %vm3716, %v3866, 0.0
      %3940 = vadd.xlane.f32.xlu0 %v3939
      %v3941 = vpop.xlane.xlu0 %3940
      %v3942 = vsel %vm3716, %v3868, 0.0
      %3943 = vadd.xlane.f32.xlu0 %v3942
      %v3944 = vpop.xlane.xlu0 %3943
      %v3945 = vsel %vm3716, %v3870, 0.0
      %3946 = vadd.xlane.f32.xlu0 %v3945
      %v3947 = vpop.xlane.xlu0 %3946
      %v3948 = vsel %vm3716, %v3872, 0.0
      %3949 = vadd.xlane.f32.xlu0 %v3948
      %v3950 = vpop.xlane.xlu0 %3949
      %v3951 = vsel %vm3716, %v3874, 0.0
      %3952 = vadd.xlane.f32.xlu0 %v3951
      %v3953 = vpop.xlane.xlu0 %3952
      %v3954 = vsel %vm3716, %v3876, 0.0
      %3955 = vadd.xlane.f32.xlu0 %v3954
      %v3956 = vpop.xlane.xlu0 %3955
      %v3957 = vsel %vm3716, %v3878, 0.0
      %3958 = vadd.xlane.f32.xlu0 %v3957
      %v3959 = vpop.xlane.xlu0 %3958
      %v3960 = vsel %vm3716, %v3880, 0.0
      %3961 = vadd.xlane.f32.xlu0 %v3960
      %v3962 = vpop.xlane.xlu0 %3961
      %v3963 = vsel %vm3716, %v3882, 0.0
      %3964 = vadd.xlane.f32.xlu0 %v3963
      %v3965 = vpop.xlane.xlu0 %3964
      %v3966 = vsel %vm3716, %v3884, 0.0
      %3967 = vadd.xlane.f32.xlu0 %v3966
      %v3968 = vpop.xlane.xlu0 %3967
      %v3969 = vsel %vm3716, %v3886, 0.0
      %3970 = vadd.xlane.f32.xlu0 %v3969
      %v3971 = vpop.xlane.xlu0 %3970
      %v3972 = vsel %vm3716, %v3888, 0.0
      %3973 = vadd.xlane.f32.xlu0 %v3972
      %v3974 = vpop.xlane.xlu0 %3973
      %v3975 = vsel %vm3716, %v3890, 0.0
      %3976 = vadd.xlane.f32.xlu0 %v3975
      %v3977 = vpop.xlane.xlu0 %3976
      %v3978 = vsel %vm3716, %v3892, 0.0
      %3979 = vadd.xlane.f32.xlu0 %v3978
      %v3980 = vpop.xlane.xlu0 %3979
      %v3981 = vsel %vm3716, %v3894, 0.0
      %3982 = vadd.xlane.f32.xlu0 %v3981
      %v3983 = vpop.xlane.xlu0 %3982
      %v3984 = vsel %vm3716, %v3896, 0.0
      %3985 = vadd.xlane.f32.xlu0 %v3984
      %v3986 = vpop.xlane.xlu0 %3985
      %v3987 = vsel %vm3716, %v3898, 0.0
      %3988 = vadd.xlane.f32.xlu0 %v3987
      %v3989 = vpop.xlane.xlu0 %3988
      %v3990 = vsel %vm3716, %v3900, 0.0
      %3991 = vadd.xlane.f32.xlu0 %v3990
      %v3992 = vpop.xlane.xlu0 %3991
      %v3993 = vsel %vm3716, %v3902, 0.0
      %3994 = vadd.xlane.f32.xlu0 %v3993
      %v3995 = vpop.xlane.xlu0 %3994
      %v3996 = vsel %vm3716, %v3904, 0.0
      %3997 = vadd.xlane.f32.xlu0 %v3996
      %v3998 = vpop.xlane.xlu0 %3997
      %v3999 = vsel %vm3716, %v3906, 0.0
      %4000 = vadd.xlane.f32.xlu0 %v3999
      %v4001 = vpop.xlane.xlu0 %4000
      %v4002 = vsel %vm3716, %v3908, 0.0
      %4003 = vadd.xlane.f32.xlu0 %v4002
      %v4004 = vpop.xlane.xlu0 %4003
      %v4005 = vrcp.pop %v3911
      %v4006 = vrcp.pop %v3914
      %v4007 = vrcp.pop %v3917
      %v4008 = vrcp.pop %v3920
      %v4009 = vrcp.pop %v3923
      %v4010 = vrcp.pop %v3926
      %v4011 = vrcp.pop %v3929
      %v4012 = vrcp.pop %v3932
      %v4013 = vrcp.pop %v3935
      %v4014 = vrcp.pop %v3938
      %v4015 = vrcp.pop %v3941
      %v4016 = vrcp.pop %v3944
      %v4017 = vrcp.pop %v3947
      %v4018 = vrcp.pop %v3950
      %v4019 = vrcp.pop %v3953
      %v4020 = vrcp.pop %v3956
      %v4021 = vrcp.pop %v3959
      %v4022 = vrcp.pop %v3962
      %v4023 = vrcp.pop %v3965
      %v4024 = vrcp.pop %v3968
      %v4025 = vrcp.pop %v3971
      %v4026 = vrcp.pop %v3974
      %v4027 = vrcp.pop %v3977
      %v4028 = vrcp.pop %v3980
      %v4029 = vrcp.pop %v3983
      %v4030 = vrcp.pop %v3986
      %v4031 = vrcp.pop %v3989
      %v4032 = vrcp.pop %v3992
      %v4033 = vrcp.pop %v3995
      %v4034 = vrcp.pop %v3998
      %v4035 = vrcp.pop %v4001
      %v4036 = vrcp.pop %v4004
      %v4037 = vmul.f32 %v3846, %v4005
      %v4038 = vmul.f32 %v3848, %v4006
      %v4039 = vmul.f32 %v3850, %v4007
      %v4040 = vmul.f32 %v3852, %v4008
      %v4041 = vmul.f32 %v3854, %v4009
      %v4042 = vmul.f32 %v3856, %v4010
      %v4043 = vmul.f32 %v3858, %v4011
      %v4044 = vmul.f32 %v3860, %v4012
      %v4045 = vmul.f32 %v3862, %v4013
      %v4046 = vmul.f32 %v3864, %v4014
      %v4047 = vmul.f32 %v3866, %v4015
      %v4048 = vmul.f32 %v3868, %v4016
      %v4049 = vmul.f32 %v3870, %v4017
      %v4050 = vmul.f32 %v3872, %v4018
      %v4051 = vmul.f32 %v3874, %v4019
      %v4052 = vmul.f32 %v3876, %v4020
      %v4053 = vmul.f32 %v3878, %v4021
      %v4054 = vmul.f32 %v3880, %v4022
      %v4055 = vmul.f32 %v3882, %v4023
      %v4056 = vmul.f32 %v3884, %v4024
      %v4057 = vmul.f32 %v3886, %v4025
      %v4058 = vmul.f32 %v3888, %v4026
      %v4059 = vmul.f32 %v3890, %v4027
      %v4060 = vmul.f32 %v3892, %v4028
      %v4061 = vmul.f32 %v3894, %v4029
      %v4062 = vmul.f32 %v3896, %v4030
      %v4063 = vmul.f32 %v3898, %v4031
      %v4064 = vmul.f32 %v3900, %v4032
      %v4065 = vmul.f32 %v3902, %v4033
      %v4066 = vmul.f32 %v3904, %v4034
      %v4067 = vmul.f32 %v3906, %v4035
      %v4068 = vmul.f32 %v3908, %v4036
      %v4069 = vpack.c.bf16 %v4037, %v4037
      %v4070 = vpack.c.bf16 %v4038, %v4038
      %v4071 = vpack.c.bf16 %v4039, %v4039
      %v4072 = vpack.c.bf16 %v4040, %v4040
      %v4073 = vpack.c.bf16 %v4041, %v4041
      %v4074 = vpack.c.bf16 %v4042, %v4042
      %v4075 = vpack.c.bf16 %v4043, %v4043
      %v4076 = vpack.c.bf16 %v4044, %v4044
      %v4077 = vpack.c.bf16 %v4045, %v4045
      %v4078 = vpack.c.bf16 %v4046, %v4046
      %v4079 = vpack.c.bf16 %v4047, %v4047
      %v4080 = vpack.c.bf16 %v4048, %v4048
      %v4081 = vpack.c.bf16 %v4049, %v4049
      %v4082 = vpack.c.bf16 %v4050, %v4050
      %v4083 = vpack.c.bf16 %v4051, %v4051
      %v4084 = vpack.c.bf16 %v4052, %v4052
      %v4085 = vpack.c.bf16 %v4053, %v4053
      %v4086 = vpack.c.bf16 %v4054, %v4054
      %v4087 = vpack.c.bf16 %v4055, %v4055
      %v4088 = vpack.c.bf16 %v4056, %v4056
      %v4089 = vpack.c.bf16 %v4057, %v4057
      %v4090 = vpack.c.bf16 %v4058, %v4058
      %v4091 = vpack.c.bf16 %v4059, %v4059
      %v4092 = vpack.c.bf16 %v4060, %v4060
      %v4093 = vpack.c.bf16 %v4061, %v4061
      %v4094 = vpack.c.bf16 %v4062, %v4062
      %v4095 = vpack.c.bf16 %v4063, %v4063
      %v4096 = vpack.c.bf16 %v4064, %v4064
      %v4097 = vpack.c.bf16 %v4065, %v4065
      %v4098 = vpack.c.bf16 %v4066, %v4066
      %v4099 = vpack.c.bf16 %v4067, %v4067
      %v4100 = vpack.c.bf16 %v4068, %v4068
      %v4103 = vunpack.c.l.b16 %v4069
      %v4104 = vunpack.c.l.b16 %v4070
      %v4105 = vpack.c.b16 %v4104, %v4103
      %v4106 = vunpack.c.l.b16 %v3165
      %v4107 = vunpack.c.l.b16 %v3177
      %v4108 = vpack.c.b16 %v4107, %v4106
      %v4111 = vsel %vm3716, %v4105, 0
      %4113 = vmatpush.bf16.msra.mxu0 0
      %4114 = vmatpush.bf16.msra.mxu0 0
      %4115 = vmatpush.bf16.msra.mxu0 0
      %4116 = vmatpush.bf16.msra.mxu0 0
      %4117 = vmatpush.bf16.msra.mxu0 0
      %4118 = vmatpush.bf16.msra.mxu0 0
      %4119 = vmatpush.bf16.msra.mxu0 0
      %4120 = vmatpush.bf16.msra.mxu0 %v4108
      %4121 = vmatmul.bf16.gmra.mxu0 %v4111
      %v4122 = vpop.f32.mrf.mxu0
      %v4123 = vadd.f32 0.0, %v4122
      %v4124 = vpop.f32.mrf.mxu0
      %v4125 = vadd.f32 0.0, %v4124
      %4126 = vdwg.mxu0
      %v4129 = vunpack.c.l.b16 %v4071
      %v4130 = vunpack.c.l.b16 %v4072
      %v4131 = vpack.c.b16 %v4130, %v4129
      %v4132 = vunpack.c.l.b16 %v3168
      %v4133 = vunpack.c.l.b16 %v3180
      %v4134 = vpack.c.b16 %v4133, %v4132
      %v4137 = vsel %vm3716, %v4131, 0
      %4139 = vmatpush.bf16.msra.mxu0 0
      %4140 = vmatpush.bf16.msra.mxu0 0
      %4141 = vmatpush.bf16.msra.mxu0 0
      %4142 = vmatpush.bf16.msra.mxu0 0
      %4143 = vmatpush.bf16.msra.mxu0 0
      %4144 = vmatpush.bf16.msra.mxu0 0
      %4145 = vmatpush.bf16.msra.mxu0 0
      %4146 = vmatpush.bf16.msra.mxu0 %v4134
      %4147 = vmatmul.bf16.gmra.mxu0 %v4137
      %v4148 = vpop.f32.mrf.mxu0
      %v4149 = vadd.f32 0.0, %v4148
      %v4150 = vpop.f32.mrf.mxu0
      %v4151 = vadd.f32 0.0, %v4150
      %4152 = vdwg.mxu0
      %v4155 = vunpack.c.l.b16 %v4073
      %v4156 = vunpack.c.l.b16 %v4074
      %v4157 = vpack.c.b16 %v4156, %v4155
      %v4158 = vunpack.c.l.b16 %v3171
      %v4159 = vunpack.c.l.b16 %v3183
      %v4160 = vpack.c.b16 %v4159, %v4158
      %v4163 = vsel %vm3716, %v4157, 0
      %4165 = vmatpush.bf16.msra.mxu0 0
      %4166 = vmatpush.bf16.msra.mxu0 0
      %4167 = vmatpush.bf16.msra.mxu0 0
      %4168 = vmatpush.bf16.msra.mxu0 0
      %4169 = vmatpush.bf16.msra.mxu0 0
      %4170 = vmatpush.bf16.msra.mxu0 0
      %4171 = vmatpush.bf16.msra.mxu0 0
      %4172 = vmatpush.bf16.msra.mxu0 %v4160
      %4173 = vmatmul.bf16.gmra.mxu0 %v4163
      %v4174 = vpop.f32.mrf.mxu0
      %v4175 = vadd.f32 0.0, %v4174
      %v4176 = vpop.f32.mrf.mxu0
      %v4177 = vadd.f32 0.0, %v4176
      %4178 = vdwg.mxu0
      %v4181 = vunpack.c.l.b16 %v4075
      %v4182 = vunpack.c.l.b16 %v4076
      %v4183 = vpack.c.b16 %v4182, %v4181
      %v4184 = vunpack.c.l.b16 %v3174
      %v4185 = vunpack.c.l.b16 %v3186
      %v4186 = vpack.c.b16 %v4185, %v4184
      %v4189 = vsel %vm3716, %v4183, 0
      %4191 = vmatpush.bf16.msra.mxu0 0
      %4192 = vmatpush.bf16.msra.mxu0 0
      %4193 = vmatpush.bf16.msra.mxu0 0
      %4194 = vmatpush.bf16.msra.mxu0 0
      %4195 = vmatpush.bf16.msra.mxu0 0
      %4196 = vmatpush.bf16.msra.mxu0 0
      %4197 = vmatpush.bf16.msra.mxu0 0
      %4198 = vmatpush.bf16.msra.mxu0 %v4186
      %4199 = vmatmul.bf16.gmra.mxu0 %v4189
      %v4200 = vpop.f32.mrf.mxu0
      %v4201 = vadd.f32 0.0, %v4200
      %v4202 = vpop.f32.mrf.mxu0
      %v4203 = vadd.f32 0.0, %v4202
      %4204 = vdwg.mxu0
      %v4207 = vunpack.c.l.b16 %v4077
      %v4208 = vunpack.c.l.b16 %v4078
      %v4209 = vpack.c.b16 %v4208, %v4207
      %v4210 = vunpack.c.l.b16 %v3189
      %v4211 = vunpack.c.l.b16 %v3201
      %v4212 = vpack.c.b16 %v4211, %v4210
      %v4215 = vsel %vm3716, %v4209, 0
      %4217 = vmatpush.bf16.msra.mxu0 0
      %4218 = vmatpush.bf16.msra.mxu0 0
      %4219 = vmatpush.bf16.msra.mxu0 0
      %4220 = vmatpush.bf16.msra.mxu0 0
      %4221 = vmatpush.bf16.msra.mxu0 0
      %4222 = vmatpush.bf16.msra.mxu0 0
      %4223 = vmatpush.bf16.msra.mxu0 0
      %4224 = vmatpush.bf16.msra.mxu0 %v4212
      %4225 = vmatmul.bf16.gmra.mxu0 %v4215
      %v4226 = vpop.f32.mrf.mxu0
      %v4227 = vadd.f32 0.0, %v4226
      %v4228 = vpop.f32.mrf.mxu0
      %v4229 = vadd.f32 0.0, %v4228
      %4230 = vdwg.mxu0
      %v4233 = vunpack.c.l.b16 %v4079
      %v4234 = vunpack.c.l.b16 %v4080
      %v4235 = vpack.c.b16 %v4234, %v4233
      %v4236 = vunpack.c.l.b16 %v3192
      %v4237 = vunpack.c.l.b16 %v3204
      %v4238 = vpack.c.b16 %v4237, %v4236
      %v4241 = vsel %vm3716, %v4235, 0
      %4243 = vmatpush.bf16.msra.mxu0 0
      %4244 = vmatpush.bf16.msra.mxu0 0
      %4245 = vmatpush.bf16.msra.mxu0 0
      %4246 = vmatpush.bf16.msra.mxu0 0
      %4247 = vmatpush.bf16.msra.mxu0 0
      %4248 = vmatpush.bf16.msra.mxu0 0
      %4249 = vmatpush.bf16.msra.mxu0 0
      %4250 = vmatpush.bf16.msra.mxu0 %v4238
      %4251 = vmatmul.bf16.gmra.mxu0 %v4241
      %v4252 = vpop.f32.mrf.mxu0
      %v4253 = vadd.f32 0.0, %v4252
      %v4254 = vpop.f32.mrf.mxu0
      %v4255 = vadd.f32 0.0, %v4254
      %4256 = vdwg.mxu0
      %v4259 = vunpack.c.l.b16 %v4081
      %v4260 = vunpack.c.l.b16 %v4082
      %v4261 = vpack.c.b16 %v4260, %v4259
      %v4262 = vunpack.c.l.b16 %v3195
      %v4263 = vunpack.c.l.b16 %v3207
      %v4264 = vpack.c.b16 %v4263, %v4262
      %v4267 = vsel %vm3716, %v4261, 0
      %4269 = vmatpush.bf16.msra.mxu0 0
      %4270 = vmatpush.bf16.msra.mxu0 0
      %4271 = vmatpush.bf16.msra.mxu0 0
      %4272 = vmatpush.bf16.msra.mxu0 0
      %4273 = vmatpush.bf16.msra.mxu0 0
      %4274 = vmatpush.bf16.msra.mxu0 0
      %4275 = vmatpush.bf16.msra.mxu0 0
      %4276 = vmatpush.bf16.msra.mxu0 %v4264
      %4277 = vmatmul.bf16.gmra.mxu0 %v4267
      %v4278 = vpop.f32.mrf.mxu0
      %v4279 = vadd.f32 0.0, %v4278
      %v4280 = vpop.f32.mrf.mxu0
      %v4281 = vadd.f32 0.0, %v4280
      %4282 = vdwg.mxu0
      %v4285 = vunpack.c.l.b16 %v4083
      %v4286 = vunpack.c.l.b16 %v4084
      %v4287 = vpack.c.b16 %v4286, %v4285
      %v4288 = vunpack.c.l.b16 %v3198
      %v4289 = vunpack.c.l.b16 %v3210
      %v4290 = vpack.c.b16 %v4289, %v4288
      %v4293 = vsel %vm3716, %v4287, 0
      %4295 = vmatpush.bf16.msra.mxu0 0
      %4296 = vmatpush.bf16.msra.mxu0 0
      %4297 = vmatpush.bf16.msra.mxu0 0
      %4298 = vmatpush.bf16.msra.mxu0 0
      %4299 = vmatpush.bf16.msra.mxu0 0
      %4300 = vmatpush.bf16.msra.mxu0 0
      %4301 = vmatpush.bf16.msra.mxu0 0
      %4302 = vmatpush.bf16.msra.mxu0 %v4290
      %4303 = vmatmul.bf16.gmra.mxu0 %v4293
      %v4304 = vpop.f32.mrf.mxu0
      %v4305 = vadd.f32 0.0, %v4304
      %v4306 = vpop.f32.mrf.mxu0
      %v4307 = vadd.f32 0.0, %v4306
      %4308 = vdwg.mxu0
      %v4311 = vunpack.c.l.b16 %v4085
      %v4312 = vunpack.c.l.b16 %v4086
      %v4313 = vpack.c.b16 %v4312, %v4311
      %v4314 = vunpack.c.l.b16 %v3213
      %v4315 = vunpack.c.l.b16 %v3225
      %v4316 = vpack.c.b16 %v4315, %v4314
      %v4319 = vsel %vm3716, %v4313, 0
      %4321 = vmatpush.bf16.msra.mxu0 0
      %4322 = vmatpush.bf16.msra.mxu0 0
      %4323 = vmatpush.bf16.msra.mxu0 0
      %4324 = vmatpush.bf16.msra.mxu0 0
      %4325 = vmatpush.bf16.msra.mxu0 0
      %4326 = vmatpush.bf16.msra.mxu0 0
      %4327 = vmatpush.bf16.msra.mxu0 0
      %4328 = vmatpush.bf16.msra.mxu0 %v4316
      %4329 = vmatmul.bf16.gmra.mxu0 %v4319
      %v4330 = vpop.f32.mrf.mxu0
      %v4331 = vadd.f32 0.0, %v4330
      %v4332 = vpop.f32.mrf.mxu0
      %v4333 = vadd.f32 0.0, %v4332
      %4334 = vdwg.mxu0
      %v4337 = vunpack.c.l.b16 %v4087
      %v4338 = vunpack.c.l.b16 %v4088
      %v4339 = vpack.c.b16 %v4338, %v4337
      %v4340 = vunpack.c.l.b16 %v3216
      %v4341 = vunpack.c.l.b16 %v3228
      %v4342 = vpack.c.b16 %v4341, %v4340
      %v4345 = vsel %vm3716, %v4339, 0
      %4347 = vmatpush.bf16.msra.mxu0 0
      %4348 = vmatpush.bf16.msra.mxu0 0
      %4349 = vmatpush.bf16.msra.mxu0 0
      %4350 = vmatpush.bf16.msra.mxu0 0
      %4351 = vmatpush.bf16.msra.mxu0 0
      %4352 = vmatpush.bf16.msra.mxu0 0
      %4353 = vmatpush.bf16.msra.mxu0 0
      %4354 = vmatpush.bf16.msra.mxu0 %v4342
      %4355 = vmatmul.bf16.gmra.mxu0 %v4345
      %v4356 = vpop.f32.mrf.mxu0
      %v4357 = vadd.f32 0.0, %v4356
      %v4358 = vpop.f32.mrf.mxu0
      %v4359 = vadd.f32 0.0, %v4358
      %4360 = vdwg.mxu0
      %v4363 = vunpack.c.l.b16 %v4089
      %v4364 = vunpack.c.l.b16 %v4090
      %v4365 = vpack.c.b16 %v4364, %v4363
      %v4366 = vunpack.c.l.b16 %v3219
      %v4367 = vunpack.c.l.b16 %v3231
      %v4368 = vpack.c.b16 %v4367, %v4366
      %v4371 = vsel %vm3716, %v4365, 0
      %4373 = vmatpush.bf16.msra.mxu0 0
      %4374 = vmatpush.bf16.msra.mxu0 0
      %4375 = vmatpush.bf16.msra.mxu0 0
      %4376 = vmatpush.bf16.msra.mxu0 0
      %4377 = vmatpush.bf16.msra.mxu0 0
      %4378 = vmatpush.bf16.msra.mxu0 0
      %4379 = vmatpush.bf16.msra.mxu0 0
      %4380 = vmatpush.bf16.msra.mxu0 %v4368
      %4381 = vmatmul.bf16.gmra.mxu0 %v4371
      %v4382 = vpop.f32.mrf.mxu0
      %v4383 = vadd.f32 0.0, %v4382
      %v4384 = vpop.f32.mrf.mxu0
      %v4385 = vadd.f32 0.0, %v4384
      %4386 = vdwg.mxu0
      %v4389 = vunpack.c.l.b16 %v4091
      %v4390 = vunpack.c.l.b16 %v4092
      %v4391 = vpack.c.b16 %v4390, %v4389
      %v4392 = vunpack.c.l.b16 %v3222
      %v4393 = vunpack.c.l.b16 %v3234
      %v4394 = vpack.c.b16 %v4393, %v4392
      %v4397 = vsel %vm3716, %v4391, 0
      %4399 = vmatpush.bf16.msra.mxu0 0
      %4400 = vmatpush.bf16.msra.mxu0 0
      %4401 = vmatpush.bf16.msra.mxu0 0
      %4402 = vmatpush.bf16.msra.mxu0 0
      %4403 = vmatpush.bf16.msra.mxu0 0
      %4404 = vmatpush.bf16.msra.mxu0 0
      %4405 = vmatpush.bf16.msra.mxu0 0
      %4406 = vmatpush.bf16.msra.mxu0 %v4394
      %4407 = vmatmul.bf16.gmra.mxu0 %v4397
      %v4408 = vpop.f32.mrf.mxu0
      %v4409 = vadd.f32 0.0, %v4408
      %v4410 = vpop.f32.mrf.mxu0
      %v4411 = vadd.f32 0.0, %v4410
      %4412 = vdwg.mxu0
      %v4415 = vunpack.c.l.b16 %v4093
      %v4416 = vunpack.c.l.b16 %v4094
      %v4417 = vpack.c.b16 %v4416, %v4415
      %v4418 = vunpack.c.l.b16 %v3237
      %v4419 = vunpack.c.l.b16 %v3249
      %v4420 = vpack.c.b16 %v4419, %v4418
      %v4423 = vsel %vm3716, %v4417, 0
      %4425 = vmatpush.bf16.msra.mxu0 0
      %4426 = vmatpush.bf16.msra.mxu0 0
      %4427 = vmatpush.bf16.msra.mxu0 0
      %4428 = vmatpush.bf16.msra.mxu0 0
      %4429 = vmatpush.bf16.msra.mxu0 0
      %4430 = vmatpush.bf16.msra.mxu0 0
      %4431 = vmatpush.bf16.msra.mxu0 0
      %4432 = vmatpush.bf16.msra.mxu0 %v4420
      %4433 = vmatmul.bf16.gmra.mxu0 %v4423
      %v4434 = vpop.f32.mrf.mxu0
      %v4435 = vadd.f32 0.0, %v4434
      %v4436 = vpop.f32.mrf.mxu0
      %v4437 = vadd.f32 0.0, %v4436
      %4438 = vdwg.mxu0
      %v4441 = vunpack.c.l.b16 %v4095
      %v4442 = vunpack.c.l.b16 %v4096
      %v4443 = vpack.c.b16 %v4442, %v4441
      %v4444 = vunpack.c.l.b16 %v3240
      %v4445 = vunpack.c.l.b16 %v3252
      %v4446 = vpack.c.b16 %v4445, %v4444
      %v4449 = vsel %vm3716, %v4443, 0
      %4451 = vmatpush.bf16.msra.mxu0 0
      %4452 = vmatpush.bf16.msra.mxu0 0
      %4453 = vmatpush.bf16.msra.mxu0 0
      %4454 = vmatpush.bf16.msra.mxu0 0
      %4455 = vmatpush.bf16.msra.mxu0 0
      %4456 = vmatpush.bf16.msra.mxu0 0
      %4457 = vmatpush.bf16.msra.mxu0 0
      %4458 = vmatpush.bf16.msra.mxu0 %v4446
      %4459 = vmatmul.bf16.gmra.mxu0 %v4449
      %v4460 = vpop.f32.mrf.mxu0
      %v4461 = vadd.f32 0.0, %v4460
      %v4462 = vpop.f32.mrf.mxu0
      %v4463 = vadd.f32 0.0, %v4462
      %4464 = vdwg.mxu0
      %v4467 = vunpack.c.l.b16 %v4097
      %v4468 = vunpack.c.l.b16 %v4098
      %v4469 = vpack.c.b16 %v4468, %v4467
      %v4470 = vunpack.c.l.b16 %v3243
      %v4471 = vunpack.c.l.b16 %v3255
      %v4472 = vpack.c.b16 %v4471, %v4470
      %v4475 = vsel %vm3716, %v4469, 0
      %4477 = vmatpush.bf16.msra.mxu0 0
      %4478 = vmatpush.bf16.msra.mxu0 0
      %4479 = vmatpush.bf16.msra.mxu0 0
      %4480 = vmatpush.bf16.msra.mxu0 0
      %4481 = vmatpush.bf16.msra.mxu0 0
      %4482 = vmatpush.bf16.msra.mxu0 0
      %4483 = vmatpush.bf16.msra.mxu0 0
      %4484 = vmatpush.bf16.msra.mxu0 %v4472
      %4485 = vmatmul.bf16.gmra.mxu0 %v4475
      %v4486 = vpop.f32.mrf.mxu0
      %v4487 = vadd.f32 0.0, %v4486
      %v4488 = vpop.f32.mrf.mxu0
      %v4489 = vadd.f32 0.0, %v4488
      %4490 = vdwg.mxu0
      %v4493 = vunpack.c.l.b16 %v4099
      %v4494 = vunpack.c.l.b16 %v4100
      %v4495 = vpack.c.b16 %v4494, %v4493
      %v4496 = vunpack.c.l.b16 %v3246
      %v4497 = vunpack.c.l.b16 %v3258
      %v4498 = vpack.c.b16 %v4497, %v4496
      %v4501 = vsel %vm3716, %v4495, 0
      %4503 = vmatpush.bf16.msra.mxu0 0
      %4504 = vmatpush.bf16.msra.mxu0 0
      %4505 = vmatpush.bf16.msra.mxu0 0
      %4506 = vmatpush.bf16.msra.mxu0 0
      %4507 = vmatpush.bf16.msra.mxu0 0
      %4508 = vmatpush.bf16.msra.mxu0 0
      %4509 = vmatpush.bf16.msra.mxu0 0
      %4510 = vmatpush.bf16.msra.mxu0 %v4498
      %4511 = vmatmul.bf16.gmra.mxu0 %v4501
      %v4512 = vpop.f32.mrf.mxu0
      %v4513 = vadd.f32 0.0, %v4512
      %v4514 = vpop.f32.mrf.mxu0
      %v4515 = vadd.f32 0.0, %v4514
      %4516 = vdwg.mxu0
      %v4517 = vrot.slane %v4175, 4
      %vm4518 = vcmask 1047556
      %v4519 = vsel %vm4518, %v4517, %v4123
      %v4520 = vrot.slane %v4123, 4
      %v4521 = vsel %vm4518, %v4175, %v4520
      %v4523 = vunpack.c.l.s4 1983009808
      %v4524 = vunpack.c.0.s8 %v4523
      %v4525 = vperm.slane %v4519, %v4524
      %v4527 = vunpack.c.l.s4 1983009808
      %v4528 = vunpack.c.0.s8 %v4527
      %v4529 = vperm.slane %v4521, %v4528
      %v4530 = vrot.slane %v4201, 4
      %v4531 = vsel %vm4518, %v4530, %v4149
      %v4532 = vrot.slane %v4149, 4
      %v4533 = vsel %vm4518, %v4201, %v4532
      %v4535 = vunpack.c.l.s4 1983009808
      %v4536 = vunpack.c.0.s8 %v4535
      %v4537 = vperm.slane %v4531, %v4536
      %v4539 = vunpack.c.l.s4 1983009808
      %v4540 = vunpack.c.0.s8 %v4539
      %v4541 = vperm.slane %v4533, %v4540
      %v4542 = vrot.slane %v4537, 4
      %v4543 = vsel %vm4518, %v4542, %v4525
      %v4544 = vrot.slane %v4525, 4
      %v4545 = vsel %vm4518, %v4537, %v4544
      %v4547 = vunpack.c.l.s4 1934713408
      %v4548 = vunpack.c.0.s8 %v4547
      %v4549 = vperm.slane %v4543, %v4548
      %v4551 = vunpack.c.l.s4 1934713408
      %v4552 = vunpack.c.0.s8 %v4551
      %v4553 = vperm.slane %v4545, %v4552
      %v4554 = vrot.slane %v4541, 4
      %v4555 = vsel %vm4518, %v4554, %v4529
      %v4556 = vrot.slane %v4529, 4
      %v4557 = vsel %vm4518, %v4541, %v4556
      %v4559 = vunpack.c.l.s4 1934713408
      %v4560 = vunpack.c.0.s8 %v4559
      %v4561 = vperm.slane %v4555, %v4560
      %v4563 = vunpack.c.l.s4 1934713408
      %v4564 = vunpack.c.0.s8 %v4563
      %v4565 = vperm.slane %v4557, %v4564
      %v4566 = vrot.slane %v4549, 4
      %v4567 = vsel %vm4518, 0.0, %v4566
      %v4568 = vrot.slane %v4553, 4
      %v4569 = vsel %vm4518, 0.0, %v4568
      %v4570 = vrot.slane %v4561, 4
      %v4571 = vsel %vm4518, 0.0, %v4570
      %v4572 = vrot.slane %v4565, 4
      %v4573 = vsel %vm4518, 0.0, %v4572
      %v4574 = vrot.slane %v4177, 4
      %v4575 = vsel %vm4518, %v4574, %v4125
      %v4576 = vrot.slane %v4125, 4
      %v4577 = vsel %vm4518, %v4177, %v4576
      %v4579 = vunpack.c.l.s4 1983009808
      %v4580 = vunpack.c.0.s8 %v4579
      %v4581 = vperm.slane %v4575, %v4580
      %v4583 = vunpack.c.l.s4 1983009808
      %v4584 = vunpack.c.0.s8 %v4583
      %v4585 = vperm.slane %v4577, %v4584
      %v4586 = vrot.slane %v4203, 4
      %v4587 = vsel %vm4518, %v4586, %v4151
      %v4588 = vrot.slane %v4151, 4
      %v4589 = vsel %vm4518, %v4203, %v4588
      %v4591 = vunpack.c.l.s4 1983009808
      %v4592 = vunpack.c.0.s8 %v4591
      %v4593 = vperm.slane %v4587, %v4592
      %v4595 = vunpack.c.l.s4 1983009808
      %v4596 = vunpack.c.0.s8 %v4595
      %v4597 = vperm.slane %v4589, %v4596
      %v4598 = vrot.slane %v4593, 4
      %v4599 = vsel %vm4518, %v4598, %v4581
      %v4600 = vrot.slane %v4581, 4
      %v4601 = vsel %vm4518, %v4593, %v4600
      %v4603 = vunpack.c.l.s4 1934713408
      %v4604 = vunpack.c.0.s8 %v4603
      %v4605 = vperm.slane %v4599, %v4604
      %v4607 = vunpack.c.l.s4 1934713408
      %v4608 = vunpack.c.0.s8 %v4607
      %v4609 = vperm.slane %v4601, %v4608
      %v4610 = vrot.slane %v4597, 4
      %v4611 = vsel %vm4518, %v4610, %v4585
      %v4612 = vrot.slane %v4585, 4
      %v4613 = vsel %vm4518, %v4597, %v4612
      %v4615 = vunpack.c.l.s4 1934713408
      %v4616 = vunpack.c.0.s8 %v4615
      %v4617 = vperm.slane %v4611, %v4616
      %v4619 = vunpack.c.l.s4 1934713408
      %v4620 = vunpack.c.0.s8 %v4619
      %v4621 = vperm.slane %v4613, %v4620
      %v4622 = vrot.slane %v4605, 4
      %v4623 = vsel %vm4518, 0.0, %v4622
      %v4624 = vrot.slane %v4609, 4
      %v4625 = vsel %vm4518, 0.0, %v4624
      %v4626 = vrot.slane %v4617, 4
      %v4627 = vsel %vm4518, 0.0, %v4626
      %v4628 = vrot.slane %v4621, 4
      %v4629 = vsel %vm4518, 0.0, %v4628
      %v4630 = vrot.slane %v4279, 4
      %v4631 = vsel %vm4518, %v4630, %v4227
      %v4632 = vrot.slane %v4227, 4
      %v4633 = vsel %vm4518, %v4279, %v4632
      %v4635 = vunpack.c.l.s4 1983009808
      %v4636 = vunpack.c.0.s8 %v4635
      %v4637 = vperm.slane %v4631, %v4636
      %v4639 = vunpack.c.l.s4 1983009808
      %v4640 = vunpack.c.0.s8 %v4639
      %v4641 = vperm.slane %v4633, %v4640
      %v4642 = vrot.slane %v4305, 4
      %v4643 = vsel %vm4518, %v4642, %v4253
      %v4644 = vrot.slane %v4253, 4
      %v4645 = vsel %vm4518, %v4305, %v4644
      %v4647 = vunpack.c.l.s4 1983009808
      %v4648 = vunpack.c.0.s8 %v4647
      %v4649 = vperm.slane %v4643, %v4648
      %v4651 = vunpack.c.l.s4 1983009808
      %v4652 = vunpack.c.0.s8 %v4651
      %v4653 = vperm.slane %v4645, %v4652
      %v4654 = vrot.slane %v4649, 4
      %v4655 = vsel %vm4518, %v4654, %v4637
      %v4656 = vrot.slane %v4637, 4
      %v4657 = vsel %vm4518, %v4649, %v4656
      %v4659 = vunpack.c.l.s4 1934713408
      %v4660 = vunpack.c.0.s8 %v4659
      %v4661 = vperm.slane %v4655, %v4660
      %v4663 = vunpack.c.l.s4 1934713408
      %v4664 = vunpack.c.0.s8 %v4663
      %v4665 = vperm.slane %v4657, %v4664
      %v4666 = vrot.slane %v4653, 4
      %v4667 = vsel %vm4518, %v4666, %v4641
      %v4668 = vrot.slane %v4641, 4
      %v4669 = vsel %vm4518, %v4653, %v4668
      %v4671 = vunpack.c.l.s4 1934713408
      %v4672 = vunpack.c.0.s8 %v4671
      %v4673 = vperm.slane %v4667, %v4672
      %v4675 = vunpack.c.l.s4 1934713408
      %v4676 = vunpack.c.0.s8 %v4675
      %v4677 = vperm.slane %v4669, %v4676
      %v4678 = vrot.slane %v4661, 4
      %v4679 = vsel %vm4518, 0.0, %v4678
      %v4680 = vrot.slane %v4665, 4
      %v4681 = vsel %vm4518, 0.0, %v4680
      %v4682 = vrot.slane %v4673, 4
      %v4683 = vsel %vm4518, 0.0, %v4682
      %v4684 = vrot.slane %v4677, 4
      %v4685 = vsel %vm4518, 0.0, %v4684
      %v4686 = vrot.slane %v4281, 4
      %v4687 = vsel %vm4518, %v4686, %v4229
      %v4688 = vrot.slane %v4229, 4
      %v4689 = vsel %vm4518, %v4281, %v4688
      %v4691 = vunpack.c.l.s4 1983009808
      %v4692 = vunpack.c.0.s8 %v4691
      %v4693 = vperm.slane %v4687, %v4692
      %v4695 = vunpack.c.l.s4 1983009808
      %v4696 = vunpack.c.0.s8 %v4695
      %v4697 = vperm.slane %v4689, %v4696
      %v4698 = vrot.slane %v4307, 4
      %v4699 = vsel %vm4518, %v4698, %v4255
      %v4700 = vrot.slane %v4255, 4
      %v4701 = vsel %vm4518, %v4307, %v4700
      %v4703 = vunpack.c.l.s4 1983009808
      %v4704 = vunpack.c.0.s8 %v4703
      %v4705 = vperm.slane %v4699, %v4704
      %v4707 = vunpack.c.l.s4 1983009808
      %v4708 = vunpack.c.0.s8 %v4707
      %v4709 = vperm.slane %v4701, %v4708
      %v4710 = vrot.slane %v4705, 4
      %v4711 = vsel %vm4518, %v4710, %v4693
      %v4712 = vrot.slane %v4693, 4
      %v4713 = vsel %vm4518, %v4705, %v4712
      %v4715 = vunpack.c.l.s4 1934713408
      %v4716 = vunpack.c.0.s8 %v4715
      %v4717 = vperm.slane %v4711, %v4716
      %v4719 = vunpack.c.l.s4 1934713408
      %v4720 = vunpack.c.0.s8 %v4719
      %v4721 = vperm.slane %v4713, %v4720
      %v4722 = vrot.slane %v4709, 4
      %v4723 = vsel %vm4518, %v4722, %v4697
      %v4724 = vrot.slane %v4697, 4
      %v4725 = vsel %vm4518, %v4709, %v4724
      %v4727 = vunpack.c.l.s4 1934713408
      %v4728 = vunpack.c.0.s8 %v4727
      %v4729 = vperm.slane %v4723, %v4728
      %v4731 = vunpack.c.l.s4 1934713408
      %v4732 = vunpack.c.0.s8 %v4731
      %v4733 = vperm.slane %v4725, %v4732
      %v4734 = vrot.slane %v4717, 4
      %v4735 = vsel %vm4518, 0.0, %v4734
      %v4736 = vrot.slane %v4721, 4
      %v4737 = vsel %vm4518, 0.0, %v4736
      %v4738 = vrot.slane %v4729, 4
      %v4739 = vsel %vm4518, 0.0, %v4738
      %v4740 = vrot.slane %v4733, 4
      %v4741 = vsel %vm4518, 0.0, %v4740
      %v4742 = vrot.slane %v4383, 4
      %v4743 = vsel %vm4518, %v4742, %v4331
      %v4744 = vrot.slane %v4331, 4
      %v4745 = vsel %vm4518, %v4383, %v4744
      %v4747 = vunpack.c.l.s4 1983009808
      %v4748 = vunpack.c.0.s8 %v4747
      %v4749 = vperm.slane %v4743, %v4748
      %v4751 = vunpack.c.l.s4 1983009808
      %v4752 = vunpack.c.0.s8 %v4751
      %v4753 = vperm.slane %v4745, %v4752
      %v4754 = vrot.slane %v4409, 4
      %v4755 = vsel %vm4518, %v4754, %v4357
      %v4756 = vrot.slane %v4357, 4
      %v4757 = vsel %vm4518, %v4409, %v4756
      %v4759 = vunpack.c.l.s4 1983009808
      %v4760 = vunpack.c.0.s8 %v4759
      %v4761 = vperm.slane %v4755, %v4760
      %v4763 = vunpack.c.l.s4 1983009808
      %v4764 = vunpack.c.0.s8 %v4763
      %v4765 = vperm.slane %v4757, %v4764
      %v4766 = vrot.slane %v4761, 4
      %v4767 = vsel %vm4518, %v4766, %v4749
      %v4768 = vrot.slane %v4749, 4
      %v4769 = vsel %vm4518, %v4761, %v4768
      %v4771 = vunpack.c.l.s4 1934713408
      %v4772 = vunpack.c.0.s8 %v4771
      %v4773 = vperm.slane %v4767, %v4772
      %v4775 = vunpack.c.l.s4 1934713408
      %v4776 = vunpack.c.0.s8 %v4775
      %v4777 = vperm.slane %v4769, %v4776
      %v4778 = vrot.slane %v4765, 4
      %v4779 = vsel %vm4518, %v4778, %v4753
      %v4780 = vrot.slane %v4753, 4
      %v4781 = vsel %vm4518, %v4765, %v4780
      %v4783 = vunpack.c.l.s4 1934713408
      %v4784 = vunpack.c.0.s8 %v4783
      %v4785 = vperm.slane %v4779, %v4784
      %v4787 = vunpack.c.l.s4 1934713408
      %v4788 = vunpack.c.0.s8 %v4787
      %v4789 = vperm.slane %v4781, %v4788
      %v4790 = vrot.slane %v4773, 4
      %v4791 = vsel %vm4518, 0.0, %v4790
      %v4792 = vrot.slane %v4777, 4
      %v4793 = vsel %vm4518, 0.0, %v4792
      %v4794 = vrot.slane %v4785, 4
      %v4795 = vsel %vm4518, 0.0, %v4794
      %v4796 = vrot.slane %v4789, 4
      %v4797 = vsel %vm4518, 0.0, %v4796
      %v4798 = vrot.slane %v4385, 4
      %v4799 = vsel %vm4518, %v4798, %v4333
      %v4800 = vrot.slane %v4333, 4
      %v4801 = vsel %vm4518, %v4385, %v4800
      %v4803 = vunpack.c.l.s4 1983009808
      %v4804 = vunpack.c.0.s8 %v4803
      %v4805 = vperm.slane %v4799, %v4804
      %v4807 = vunpack.c.l.s4 1983009808
      %v4808 = vunpack.c.0.s8 %v4807
      %v4809 = vperm.slane %v4801, %v4808
      %v4810 = vrot.slane %v4411, 4
      %v4811 = vsel %vm4518, %v4810, %v4359
      %v4812 = vrot.slane %v4359, 4
      %v4813 = vsel %vm4518, %v4411, %v4812
      %v4815 = vunpack.c.l.s4 1983009808
      %v4816 = vunpack.c.0.s8 %v4815
      %v4817 = vperm.slane %v4811, %v4816
      %v4819 = vunpack.c.l.s4 1983009808
      %v4820 = vunpack.c.0.s8 %v4819
      %v4821 = vperm.slane %v4813, %v4820
      %v4822 = vrot.slane %v4817, 4
      %v4823 = vsel %vm4518, %v4822, %v4805
      %v4824 = vrot.slane %v4805, 4
      %v4825 = vsel %vm4518, %v4817, %v4824
      %v4827 = vunpack.c.l.s4 1934713408
      %v4828 = vunpack.c.0.s8 %v4827
      %v4829 = vperm.slane %v4823, %v4828
      %v4831 = vunpack.c.l.s4 1934713408
      %v4832 = vunpack.c.0.s8 %v4831
      %v4833 = vperm.slane %v4825, %v4832
      %v4834 = vrot.slane %v4821, 4
      %v4835 = vsel %vm4518, %v4834, %v4809
      %v4836 = vrot.slane %v4809, 4
      %v4837 = vsel %vm4518, %v4821, %v4836
      %v4839 = vunpack.c.l.s4 1934713408
      %v4840 = vunpack.c.0.s8 %v4839
      %v4841 = vperm.slane %v4835, %v4840
      %v4843 = vunpack.c.l.s4 1934713408
      %v4844 = vunpack.c.0.s8 %v4843
      %v4845 = vperm.slane %v4837, %v4844
      %v4846 = vrot.slane %v4829, 4
      %v4847 = vsel %vm4518, 0.0, %v4846
      %v4848 = vrot.slane %v4833, 4
      %v4849 = vsel %vm4518, 0.0, %v4848
      %v4850 = vrot.slane %v4841, 4
      %v4851 = vsel %vm4518, 0.0, %v4850
      %v4852 = vrot.slane %v4845, 4
      %v4853 = vsel %vm4518, 0.0, %v4852
      %v4854 = vrot.slane %v4487, 4
      %v4855 = vsel %vm4518, %v4854, %v4435
      %v4856 = vrot.slane %v4435, 4
      %v4857 = vsel %vm4518, %v4487, %v4856
      %v4859 = vunpack.c.l.s4 1983009808
      %v4860 = vunpack.c.0.s8 %v4859
      %v4861 = vperm.slane %v4855, %v4860
      %v4863 = vunpack.c.l.s4 1983009808
      %v4864 = vunpack.c.0.s8 %v4863
      %v4865 = vperm.slane %v4857, %v4864
      %v4866 = vrot.slane %v4513, 4
      %v4867 = vsel %vm4518, %v4866, %v4461
      %v4868 = vrot.slane %v4461, 4
      %v4869 = vsel %vm4518, %v4513, %v4868
      %v4871 = vunpack.c.l.s4 1983009808
      %v4872 = vunpack.c.0.s8 %v4871
      %v4873 = vperm.slane %v4867, %v4872
      %v4875 = vunpack.c.l.s4 1983009808
      %v4876 = vunpack.c.0.s8 %v4875
      %v4877 = vperm.slane %v4869, %v4876
      %v4878 = vrot.slane %v4873, 4
      %v4879 = vsel %vm4518, %v4878, %v4861
      %v4880 = vrot.slane %v4861, 4
      %v4881 = vsel %vm4518, %v4873, %v4880
      %v4883 = vunpack.c.l.s4 1934713408
      %v4884 = vunpack.c.0.s8 %v4883
      %v4885 = vperm.slane %v4879, %v4884
      %v4887 = vunpack.c.l.s4 1934713408
      %v4888 = vunpack.c.0.s8 %v4887
      %v4889 = vperm.slane %v4881, %v4888
      %v4890 = vrot.slane %v4877, 4
      %v4891 = vsel %vm4518, %v4890, %v4865
      %v4892 = vrot.slane %v4865, 4
      %v4893 = vsel %vm4518, %v4877, %v4892
      %v4895 = vunpack.c.l.s4 1934713408
      %v4896 = vunpack.c.0.s8 %v4895
      %v4897 = vperm.slane %v4891, %v4896
      %v4899 = vunpack.c.l.s4 1934713408
      %v4900 = vunpack.c.0.s8 %v4899
      %v4901 = vperm.slane %v4893, %v4900
      %v4902 = vrot.slane %v4885, 4
      %v4903 = vsel %vm4518, 0.0, %v4902
      %v4904 = vrot.slane %v4889, 4
      %v4905 = vsel %vm4518, 0.0, %v4904
      %v4906 = vrot.slane %v4897, 4
      %v4907 = vsel %vm4518, 0.0, %v4906
      %v4908 = vrot.slane %v4901, 4
      %v4909 = vsel %vm4518, 0.0, %v4908
      %v4910 = vrot.slane %v4489, 4
      %v4911 = vsel %vm4518, %v4910, %v4437
      %v4912 = vrot.slane %v4437, 4
      %v4913 = vsel %vm4518, %v4489, %v4912
      %v4915 = vunpack.c.l.s4 1983009808
      %v4916 = vunpack.c.0.s8 %v4915
      %v4917 = vperm.slane %v4911, %v4916
      %v4919 = vunpack.c.l.s4 1983009808
      %v4920 = vunpack.c.0.s8 %v4919
      %v4921 = vperm.slane %v4913, %v4920
      %v4922 = vrot.slane %v4515, 4
      %v4923 = vsel %vm4518, %v4922, %v4463
      %v4924 = vrot.slane %v4463, 4
      %v4925 = vsel %vm4518, %v4515, %v4924
      %v4927 = vunpack.c.l.s4 1983009808
      %v4928 = vunpack.c.0.s8 %v4927
      %v4929 = vperm.slane %v4923, %v4928
      %v4931 = vunpack.c.l.s4 1983009808
      %v4932 = vunpack.c.0.s8 %v4931
      %v4933 = vperm.slane %v4925, %v4932
      %v4934 = vrot.slane %v4929, 4
      %v4935 = vsel %vm4518, %v4934, %v4917
      %v4936 = vrot.slane %v4917, 4
      %v4937 = vsel %vm4518, %v4929, %v4936
      %v4939 = vunpack.c.l.s4 1934713408
      %v4940 = vunpack.c.0.s8 %v4939
      %v4941 = vperm.slane %v4935, %v4940
      %v4943 = vunpack.c.l.s4 1934713408
      %v4944 = vunpack.c.0.s8 %v4943
      %v4945 = vperm.slane %v4937, %v4944
      %v4946 = vrot.slane %v4933, 4
      %v4947 = vsel %vm4518, %v4946, %v4921
      %v4948 = vrot.slane %v4921, 4
      %v4949 = vsel %vm4518, %v4933, %v4948
      %v4951 = vunpack.c.l.s4 1934713408
      %v4952 = vunpack.c.0.s8 %v4951
      %v4953 = vperm.slane %v4947, %v4952
      %v4955 = vunpack.c.l.s4 1934713408
      %v4956 = vunpack.c.0.s8 %v4955
      %v4957 = vperm.slane %v4949, %v4956
      %v4958 = vrot.slane %v4941, 4
      %v4959 = vsel %vm4518, 0.0, %v4958
      %v4960 = vrot.slane %v4945, 4
      %v4961 = vsel %vm4518, 0.0, %v4960
      %v4962 = vrot.slane %v4953, 4
      %v4963 = vsel %vm4518, 0.0, %v4962
      %v4964 = vrot.slane %v4957, 4
      %v4965 = vsel %vm4518, 0.0, %v4964
      %v4966 = vsel %vm4518, %v4568, %v4549
      %v4968 = vunpack.c.l.s4 1983009808
      %v4969 = vunpack.c.0.s8 %v4968
      %v4970 = vperm.slane %v4966, %v4969
      %v4971 = vrot.slane %v4569, 4
      %v4972 = vsel %vm4518, %v4971, %v4567
      %v4974 = vunpack.c.l.s4 1983009808
      %v4975 = vunpack.c.0.s8 %v4974
      %v4976 = vperm.slane %v4972, %v4975
      %v4977 = vsel %vm4518, %v4572, %v4561
      %v4979 = vunpack.c.l.s4 1983009808
      %v4980 = vunpack.c.0.s8 %v4979
      %v4981 = vperm.slane %v4977, %v4980
      %v4982 = vrot.slane %v4573, 4
      %v4983 = vsel %vm4518, %v4982, %v4571
      %v4985 = vunpack.c.l.s4 1983009808
      %v4986 = vunpack.c.0.s8 %v4985
      %v4987 = vperm.slane %v4983, %v4986
      %v4988 = vrot.slane %v4976, 4
      %v4989 = vsel %vm4518, %v4988, %v4970
      %v4990 = vrot.slane %v4970, 4
      %v4991 = vsel %vm4518, %v4976, %v4990
      %v4993 = vunpack.c.l.s4 1934713408
      %v4994 = vunpack.c.0.s8 %v4993
      %v4995 = vperm.slane %v4989, %v4994
      %v4997 = vunpack.c.l.s4 1934713408
      %v4998 = vunpack.c.0.s8 %v4997
      %v4999 = vperm.slane %v4991, %v4998
      %v5000 = vrot.slane %v4987, 4
      %v5001 = vsel %vm4518, %v5000, %v4981
      %v5002 = vrot.slane %v4981, 4
      %v5003 = vsel %vm4518, %v4987, %v5002
      %v5005 = vunpack.c.l.s4 1934713408
      %v5006 = vunpack.c.0.s8 %v5005
      %v5007 = vperm.slane %v5001, %v5006
      %v5009 = vunpack.c.l.s4 1934713408
      %v5010 = vunpack.c.0.s8 %v5009
      %v5011 = vperm.slane %v5003, %v5010
      %v5012 = vrot.slane %v5007, 4
      %v5013 = vsel %vm4518, %v5012, %v4995
      %v5014 = vrot.slane %v4995, 4
      %v5015 = vsel %vm4518, %v5007, %v5014
      %v5016 = vrot.slane %v5011, 4
      %v5017 = vsel %vm4518, %v5016, %v4999
      %v5018 = vrot.slane %v4999, 4
      %v5019 = vsel %vm4518, %v5011, %v5018
      %v5020 = vsel %vm4518, %v4624, %v4605
      %v5022 = vunpack.c.l.s4 1983009808
      %v5023 = vunpack.c.0.s8 %v5022
      %v5024 = vperm.slane %v5020, %v5023
      %v5025 = vrot.slane %v4625, 4
      %v5026 = vsel %vm4518, %v5025, %v4623
      %v5028 = vunpack.c.l.s4 1983009808
      %v5029 = vunpack.c.0.s8 %v5028
      %v5030 = vperm.slane %v5026, %v5029
      %v5031 = vsel %vm4518, %v4628, %v4617
      %v5033 = vunpack.c.l.s4 1983009808
      %v5034 = vunpack.c.0.s8 %v5033
      %v5035 = vperm.slane %v5031, %v5034
      %v5036 = vrot.slane %v4629, 4
      %v5037 = vsel %vm4518, %v5036, %v4627
      %v5039 = vunpack.c.l.s4 1983009808
      %v5040 = vunpack.c.0.s8 %v5039
      %v5041 = vperm.slane %v5037, %v5040
      %v5042 = vrot.slane %v5030, 4
      %v5043 = vsel %vm4518, %v5042, %v5024
      %v5044 = vrot.slane %v5024, 4
      %v5045 = vsel %vm4518, %v5030, %v5044
      %v5047 = vunpack.c.l.s4 1934713408
      %v5048 = vunpack.c.0.s8 %v5047
      %v5049 = vperm.slane %v5043, %v5048
      %v5051 = vunpack.c.l.s4 1934713408
      %v5052 = vunpack.c.0.s8 %v5051
      %v5053 = vperm.slane %v5045, %v5052
      %v5054 = vrot.slane %v5041, 4
      %v5055 = vsel %vm4518, %v5054, %v5035
      %v5056 = vrot.slane %v5035, 4
      %v5057 = vsel %vm4518, %v5041, %v5056
      %v5059 = vunpack.c.l.s4 1934713408
      %v5060 = vunpack.c.0.s8 %v5059
      %v5061 = vperm.slane %v5055, %v5060
      %v5063 = vunpack.c.l.s4 1934713408
      %v5064 = vunpack.c.0.s8 %v5063
      %v5065 = vperm.slane %v5057, %v5064
      %v5066 = vrot.slane %v5061, 4
      %v5067 = vsel %vm4518, %v5066, %v5049
      %v5068 = vrot.slane %v5049, 4
      %v5069 = vsel %vm4518, %v5061, %v5068
      %v5070 = vrot.slane %v5065, 4
      %v5071 = vsel %vm4518, %v5070, %v5053
      %v5072 = vrot.slane %v5053, 4
      %v5073 = vsel %vm4518, %v5065, %v5072
      %v5074 = vsel %vm4518, %v4680, %v4661
      %v5076 = vunpack.c.l.s4 1983009808
      %v5077 = vunpack.c.0.s8 %v5076
      %v5078 = vperm.slane %v5074, %v5077
      %v5079 = vrot.slane %v4681, 4
      %v5080 = vsel %vm4518, %v5079, %v4679
      %v5082 = vunpack.c.l.s4 1983009808
      %v5083 = vunpack.c.0.s8 %v5082
      %v5084 = vperm.slane %v5080, %v5083
      %v5085 = vsel %vm4518, %v4684, %v4673
      %v5087 = vunpack.c.l.s4 1983009808
      %v5088 = vunpack.c.0.s8 %v5087
      %v5089 = vperm.slane %v5085, %v5088
      %v5090 = vrot.slane %v4685, 4
      %v5091 = vsel %vm4518, %v5090, %v4683
      %v5093 = vunpack.c.l.s4 1983009808
      %v5094 = vunpack.c.0.s8 %v5093
      %v5095 = vperm.slane %v5091, %v5094
      %v5096 = vrot.slane %v5084, 4
      %v5097 = vsel %vm4518, %v5096, %v5078
      %v5098 = vrot.slane %v5078, 4
      %v5099 = vsel %vm4518, %v5084, %v5098
      %v5101 = vunpack.c.l.s4 1934713408
      %v5102 = vunpack.c.0.s8 %v5101
      %v5103 = vperm.slane %v5097, %v5102
      %v5105 = vunpack.c.l.s4 1934713408
      %v5106 = vunpack.c.0.s8 %v5105
      %v5107 = vperm.slane %v5099, %v5106
      %v5108 = vrot.slane %v5095, 4
      %v5109 = vsel %vm4518, %v5108, %v5089
      %v5110 = vrot.slane %v5089, 4
      %v5111 = vsel %vm4518, %v5095, %v5110
      %v5113 = vunpack.c.l.s4 1934713408
      %v5114 = vunpack.c.0.s8 %v5113
      %v5115 = vperm.slane %v5109, %v5114
      %v5117 = vunpack.c.l.s4 1934713408
      %v5118 = vunpack.c.0.s8 %v5117
      %v5119 = vperm.slane %v5111, %v5118
      %v5120 = vrot.slane %v5115, 4
      %v5121 = vsel %vm4518, %v5120, %v5103
      %v5122 = vrot.slane %v5103, 4
      %v5123 = vsel %vm4518, %v5115, %v5122
      %v5124 = vrot.slane %v5119, 4
      %v5125 = vsel %vm4518, %v5124, %v5107
      %v5126 = vrot.slane %v5107, 4
      %v5127 = vsel %vm4518, %v5119, %v5126
      %v5128 = vsel %vm4518, %v4736, %v4717
      %v5130 = vunpack.c.l.s4 1983009808
      %v5131 = vunpack.c.0.s8 %v5130
      %v5132 = vperm.slane %v5128, %v5131
      %v5133 = vrot.slane %v4737, 4
      %v5134 = vsel %vm4518, %v5133, %v4735
      %v5136 = vunpack.c.l.s4 1983009808
      %v5137 = vunpack.c.0.s8 %v5136
      %v5138 = vperm.slane %v5134, %v5137
      %v5139 = vsel %vm4518, %v4740, %v4729
      %v5141 = vunpack.c.l.s4 1983009808
      %v5142 = vunpack.c.0.s8 %v5141
      %v5143 = vperm.slane %v5139, %v5142
      %v5144 = vrot.slane %v4741, 4
      %v5145 = vsel %vm4518, %v5144, %v4739
      %v5147 = vunpack.c.l.s4 1983009808
      %v5148 = vunpack.c.0.s8 %v5147
      %v5149 = vperm.slane %v5145, %v5148
      %v5150 = vrot.slane %v5138, 4
      %v5151 = vsel %vm4518, %v5150, %v5132
      %v5152 = vrot.slane %v5132, 4
      %v5153 = vsel %vm4518, %v5138, %v5152
      %v5155 = vunpack.c.l.s4 1934713408
      %v5156 = vunpack.c.0.s8 %v5155
      %v5157 = vperm.slane %v5151, %v5156
      %v5159 = vunpack.c.l.s4 1934713408
      %v5160 = vunpack.c.0.s8 %v5159
      %v5161 = vperm.slane %v5153, %v5160
      %v5162 = vrot.slane %v5149, 4
      %v5163 = vsel %vm4518, %v5162, %v5143
      %v5164 = vrot.slane %v5143, 4
      %v5165 = vsel %vm4518, %v5149, %v5164
      %v5167 = vunpack.c.l.s4 1934713408
      %v5168 = vunpack.c.0.s8 %v5167
      %v5169 = vperm.slane %v5163, %v5168
      %v5171 = vunpack.c.l.s4 1934713408
      %v5172 = vunpack.c.0.s8 %v5171
      %v5173 = vperm.slane %v5165, %v5172
      %v5174 = vrot.slane %v5169, 4
      %v5175 = vsel %vm4518, %v5174, %v5157
      %v5176 = vrot.slane %v5157, 4
      %v5177 = vsel %vm4518, %v5169, %v5176
      %v5178 = vrot.slane %v5173, 4
      %v5179 = vsel %vm4518, %v5178, %v5161
      %v5180 = vrot.slane %v5161, 4
      %v5181 = vsel %vm4518, %v5173, %v5180
      %v5182 = vsel %vm4518, %v4792, %v4773
      %v5184 = vunpack.c.l.s4 1983009808
      %v5185 = vunpack.c.0.s8 %v5184
      %v5186 = vperm.slane %v5182, %v5185
      %v5187 = vrot.slane %v4793, 4
      %v5188 = vsel %vm4518, %v5187, %v4791
      %v5190 = vunpack.c.l.s4 1983009808
      %v5191 = vunpack.c.0.s8 %v5190
      %v5192 = vperm.slane %v5188, %v5191
      %v5193 = vsel %vm4518, %v4796, %v4785
      %v5195 = vunpack.c.l.s4 1983009808
      %v5196 = vunpack.c.0.s8 %v5195
      %v5197 = vperm.slane %v5193, %v5196
      %v5198 = vrot.slane %v4797, 4
      %v5199 = vsel %vm4518, %v5198, %v4795
      %v5201 = vunpack.c.l.s4 1983009808
      %v5202 = vunpack.c.0.s8 %v5201
      %v5203 = vperm.slane %v5199, %v5202
      %v5204 = vrot.slane %v5192, 4
      %v5205 = vsel %vm4518, %v5204, %v5186
      %v5206 = vrot.slane %v5186, 4
      %v5207 = vsel %vm4518, %v5192, %v5206
      %v5209 = vunpack.c.l.s4 1934713408
      %v5210 = vunpack.c.0.s8 %v5209
      %v5211 = vperm.slane %v5205, %v5210
      %v5213 = vunpack.c.l.s4 1934713408
      %v5214 = vunpack.c.0.s8 %v5213
      %v5215 = vperm.slane %v5207, %v5214
      %v5216 = vrot.slane %v5203, 4
      %v5217 = vsel %vm4518, %v5216, %v5197
      %v5218 = vrot.slane %v5197, 4
      %v5219 = vsel %vm4518, %v5203, %v5218
      %v5221 = vunpack.c.l.s4 1934713408
      %v5222 = vunpack.c.0.s8 %v5221
      %v5223 = vperm.slane %v5217, %v5222
      %v5225 = vunpack.c.l.s4 1934713408
      %v5226 = vunpack.c.0.s8 %v5225
      %v5227 = vperm.slane %v5219, %v5226
      %v5228 = vrot.slane %v5223, 4
      %v5229 = vsel %vm4518, %v5228, %v5211
      %v5230 = vrot.slane %v5211, 4
      %v5231 = vsel %vm4518, %v5223, %v5230
      %v5232 = vrot.slane %v5227, 4
      %v5233 = vsel %vm4518, %v5232, %v5215
      %v5234 = vrot.slane %v5215, 4
      %v5235 = vsel %vm4518, %v5227, %v5234
      %v5236 = vsel %vm4518, %v4848, %v4829
      %v5238 = vunpack.c.l.s4 1983009808
      %v5239 = vunpack.c.0.s8 %v5238
      %v5240 = vperm.slane %v5236, %v5239
      %v5241 = vrot.slane %v4849, 4
      %v5242 = vsel %vm4518, %v5241, %v4847
      %v5244 = vunpack.c.l.s4 1983009808
      %v5245 = vunpack.c.0.s8 %v5244
      %v5246 = vperm.slane %v5242, %v5245
      %v5247 = vsel %vm4518, %v4852, %v4841
      %v5249 = vunpack.c.l.s4 1983009808
      %v5250 = vunpack.c.0.s8 %v5249
      %v5251 = vperm.slane %v5247, %v5250
      %v5252 = vrot.slane %v4853, 4
      %v5253 = vsel %vm4518, %v5252, %v4851
      %v5255 = vunpack.c.l.s4 1983009808
      %v5256 = vunpack.c.0.s8 %v5255
      %v5257 = vperm.slane %v5253, %v5256
      %v5258 = vrot.slane %v5246, 4
      %v5259 = vsel %vm4518, %v5258, %v5240
      %v5260 = vrot.slane %v5240, 4
      %v5261 = vsel %vm4518, %v5246, %v5260
      %v5263 = vunpack.c.l.s4 1934713408
      %v5264 = vunpack.c.0.s8 %v5263
      %v5265 = vperm.slane %v5259, %v5264
      %v5267 = vunpack.c.l.s4 1934713408
      %v5268 = vunpack.c.0.s8 %v5267
      %v5269 = vperm.slane %v5261, %v5268
      %v5270 = vrot.slane %v5257, 4
      %v5271 = vsel %vm4518, %v5270, %v5251
      %v5272 = vrot.slane %v5251, 4
      %v5273 = vsel %vm4518, %v5257, %v5272
      %v5275 = vunpack.c.l.s4 1934713408
      %v5276 = vunpack.c.0.s8 %v5275
      %v5277 = vperm.slane %v5271, %v5276
      %v5279 = vunpack.c.l.s4 1934713408
      %v5280 = vunpack.c.0.s8 %v5279
      %v5281 = vperm.slane %v5273, %v5280
      %v5282 = vrot.slane %v5277, 4
      %v5283 = vsel %vm4518, %v5282, %v5265
      %v5284 = vrot.slane %v5265, 4
      %v5285 = vsel %vm4518, %v5277, %v5284
      %v5286 = vrot.slane %v5281, 4
      %v5287 = vsel %vm4518, %v5286, %v5269
      %v5288 = vrot.slane %v5269, 4
      %v5289 = vsel %vm4518, %v5281, %v5288
      %v5290 = vsel %vm4518, %v4904, %v4885
      %v5292 = vunpack.c.l.s4 1983009808
      %v5293 = vunpack.c.0.s8 %v5292
      %v5294 = vperm.slane %v5290, %v5293
      %v5295 = vrot.slane %v4905, 4
      %v5296 = vsel %vm4518, %v5295, %v4903
      %v5298 = vunpack.c.l.s4 1983009808
      %v5299 = vunpack.c.0.s8 %v5298
      %v5300 = vperm.slane %v5296, %v5299
      %v5301 = vsel %vm4518, %v4908, %v4897
      %v5303 = vunpack.c.l.s4 1983009808
      %v5304 = vunpack.c.0.s8 %v5303
      %v5305 = vperm.slane %v5301, %v5304
      %v5306 = vrot.slane %v4909, 4
      %v5307 = vsel %vm4518, %v5306, %v4907
      %v5309 = vunpack.c.l.s4 1983009808
      %v5310 = vunpack.c.0.s8 %v5309
      %v5311 = vperm.slane %v5307, %v5310
      %v5312 = vrot.slane %v5300, 4
      %v5313 = vsel %vm4518, %v5312, %v5294
      %v5314 = vrot.slane %v5294, 4
      %v5315 = vsel %vm4518, %v5300, %v5314
      %v5317 = vunpack.c.l.s4 1934713408
      %v5318 = vunpack.c.0.s8 %v5317
      %v5319 = vperm.slane %v5313, %v5318
      %v5321 = vunpack.c.l.s4 1934713408
      %v5322 = vunpack.c.0.s8 %v5321
      %v5323 = vperm.slane %v5315, %v5322
      %v5324 = vrot.slane %v5311, 4
      %v5325 = vsel %vm4518, %v5324, %v5305
      %v5326 = vrot.slane %v5305, 4
      %v5327 = vsel %vm4518, %v5311, %v5326
      %v5329 = vunpack.c.l.s4 1934713408
      %v5330 = vunpack.c.0.s8 %v5329
      %v5331 = vperm.slane %v5325, %v5330
      %v5333 = vunpack.c.l.s4 1934713408
      %v5334 = vunpack.c.0.s8 %v5333
      %v5335 = vperm.slane %v5327, %v5334
      %v5336 = vrot.slane %v5331, 4
      %v5337 = vsel %vm4518, %v5336, %v5319
      %v5338 = vrot.slane %v5319, 4
      %v5339 = vsel %vm4518, %v5331, %v5338
      %v5340 = vrot.slane %v5335, 4
      %v5341 = vsel %vm4518, %v5340, %v5323
      %v5342 = vrot.slane %v5323, 4
      %v5343 = vsel %vm4518, %v5335, %v5342
      %v5344 = vsel %vm4518, %v4960, %v4941
      %v5346 = vunpack.c.l.s4 1983009808
      %v5347 = vunpack.c.0.s8 %v5346
      %v5348 = vperm.slane %v5344, %v5347
      %v5349 = vrot.slane %v4961, 4
      %v5350 = vsel %vm4518, %v5349, %v4959
      %v5352 = vunpack.c.l.s4 1983009808
      %v5353 = vunpack.c.0.s8 %v5352
      %v5354 = vperm.slane %v5350, %v5353
      %v5355 = vsel %vm4518, %v4964, %v4953
      %v5357 = vunpack.c.l.s4 1983009808
      %v5358 = vunpack.c.0.s8 %v5357
      %v5359 = vperm.slane %v5355, %v5358
      %v5360 = vrot.slane %v4965, 4
      %v5361 = vsel %vm4518, %v5360, %v4963
      %v5363 = vunpack.c.l.s4 1983009808
      %v5364 = vunpack.c.0.s8 %v5363
      %v5365 = vperm.slane %v5361, %v5364
      %v5366 = vrot.slane %v5354, 4
      %v5367 = vsel %vm4518, %v5366, %v5348
      %v5368 = vrot.slane %v5348, 4
      %v5369 = vsel %vm4518, %v5354, %v5368
      %v5371 = vunpack.c.l.s4 1934713408
      %v5372 = vunpack.c.0.s8 %v5371
      %v5373 = vperm.slane %v5367, %v5372
      %v5375 = vunpack.c.l.s4 1934713408
      %v5376 = vunpack.c.0.s8 %v5375
      %v5377 = vperm.slane %v5369, %v5376
      %v5378 = vrot.slane %v5365, 4
      %v5379 = vsel %vm4518, %v5378, %v5359
      %v5380 = vrot.slane %v5359, 4
      %v5381 = vsel %vm4518, %v5365, %v5380
      %v5383 = vunpack.c.l.s4 1934713408
      %v5384 = vunpack.c.0.s8 %v5383
      %v5385 = vperm.slane %v5379, %v5384
      %v5387 = vunpack.c.l.s4 1934713408
      %v5388 = vunpack.c.0.s8 %v5387
      %v5389 = vperm.slane %v5381, %v5388
      %v5390 = vrot.slane %v5385, 4
      %v5391 = vsel %vm4518, %v5390, %v5373
      %v5392 = vrot.slane %v5373, 4
      %v5393 = vsel %vm4518, %v5385, %v5392
      %v5394 = vrot.slane %v5389, 4
      %v5395 = vsel %vm4518, %v5394, %v5377
      %v5396 = vrot.slane %v5377, 4
      %v5397 = vsel %vm4518, %v5389, %v5396
      %5406 = vrot.lane.b32.xlu0 %v5015, 8
      %v5407 = vpop.permute.xlu0 %5406
      %5408 = vrot.lane.b32.xlu0 %v5069, 8
      %v5409 = vpop.permute.xlu0 %5408
      %5410 = vrot.lane.b32.xlu0 %v5123, 8
      %v5411 = vpop.permute.xlu0 %5410
      %5412 = vrot.lane.b32.xlu0 %v5177, 8
      %v5413 = vpop.permute.xlu0 %5412
      %5414 = vrot.lane.b32.xlu0 %v5231, 8
      %v5415 = vpop.permute.xlu0 %5414
      %5416 = vrot.lane.b32.xlu0 %v5285, 8
      %v5417 = vpop.permute.xlu0 %5416
      %5418 = vrot.lane.b32.xlu0 %v5339, 8
      %v5419 = vpop.permute.xlu0 %5418
      %5420 = vrot.lane.b32.xlu0 %v5393, 8
      %v5421 = vpop.permute.xlu0 %5420
      %5438 = vrot.lane.b32.xlu0 %v5017, 16
      %v5439 = vpop.permute.xlu0 %5438
      %5440 = vrot.lane.b32.xlu0 %v5071, 16
      %v5441 = vpop.permute.xlu0 %5440
      %5442 = vrot.lane.b32.xlu0 %v5125, 16
      %v5443 = vpop.permute.xlu0 %5442
      %5444 = vrot.lane.b32.xlu0 %v5179, 16
      %v5445 = vpop.permute.xlu0 %5444
      %5446 = vrot.lane.b32.xlu0 %v5233, 16
      %v5447 = vpop.permute.xlu0 %5446
      %5448 = vrot.lane.b32.xlu0 %v5287, 16
      %v5449 = vpop.permute.xlu0 %5448
      %5450 = vrot.lane.b32.xlu0 %v5341, 16
      %v5451 = vpop.permute.xlu0 %5450
      %5452 = vrot.lane.b32.xlu0 %v5395, 16
      %v5453 = vpop.permute.xlu0 %5452
      %5470 = vrot.lane.b32.xlu0 %v5019, 24
      %v5471 = vpop.permute.xlu0 %5470
      %5472 = vrot.lane.b32.xlu0 %v5073, 24
      %v5473 = vpop.permute.xlu0 %5472
      %5474 = vrot.lane.b32.xlu0 %v5127, 24
      %v5475 = vpop.permute.xlu0 %5474
      %5476 = vrot.lane.b32.xlu0 %v5181, 24
      %v5477 = vpop.permute.xlu0 %5476
      %5478 = vrot.lane.b32.xlu0 %v5235, 24
      %v5479 = vpop.permute.xlu0 %5478
      %5480 = vrot.lane.b32.xlu0 %v5289, 24
      %v5481 = vpop.permute.xlu0 %5480
      %5482 = vrot.lane.b32.xlu0 %v5343, 24
      %v5483 = vpop.permute.xlu0 %5482
      %5484 = vrot.lane.b32.xlu0 %v5397, 24
      %v5485 = vpop.permute.xlu0 %5484
      %v5494 = vsel %vm3265, %v5013, %v5407
      %v5495 = vsel %vm3265, %v5067, %v5409
      %v5496 = vsel %vm3265, %v5121, %v5411
      %v5497 = vsel %vm3265, %v5175, %v5413
      %v5498 = vsel %vm3265, %v5229, %v5415
      %v5499 = vsel %vm3265, %v5283, %v5417
      %v5500 = vsel %vm3265, %v5337, %v5419
      %v5501 = vsel %vm3265, %v5391, %v5421
      %v5502 = vsel %vm3716, %v5494, %v5439
      %v5503 = vsel %vm3716, %v5495, %v5441
      %v5504 = vsel %vm3716, %v5496, %v5443
      %v5505 = vsel %vm3716, %v5497, %v5445
      %v5506 = vsel %vm3716, %v5498, %v5447
      %v5507 = vsel %vm3716, %v5499, %v5449
      %v5508 = vsel %vm3716, %v5500, %v5451
      %v5509 = vsel %vm3716, %v5501, %v5453
      %vm5510 = vcmask 195584
      %v5511 = vsel %vm5510, %v5502, %v5471
      %v5512 = vsel %vm5510, %v5503, %v5473
      %v5513 = vsel %vm5510, %v5504, %v5475
      %v5514 = vsel %vm5510, %v5505, %v5477
      %v5515 = vsel %vm5510, %v5506, %v5479
      %v5516 = vsel %vm5510, %v5507, %v5481
      %v5517 = vsel %vm5510, %v5508, %v5483
      %v5518 = vsel %vm5510, %v5509, %v5485
      %v5519 = vpack.c.bf16 %v5512, %v5511
      %v5520 = vpack.c.bf16 %v5514, %v5513
      %v5521 = vpack.c.bf16 %v5516, %v5515
      %v5522 = vpack.c.bf16 %v5518, %v5517
      %v5523 = vld [vmem:[%s4] sm:$0xf]
      %v5524 = vld [vmem:[%s4 + $0x4] sm:$0xf]
      %v5525 = vld [vmem:[%s4 + $0x8] sm:$0xf]
      %v5526 = vld [vmem:[%s4 + $0xc] sm:$0xf]
      %v5527 = vld [vmem:[%s5] sm:$0x1]
      %v5529 = vperm.slane %v5527, 0
      %v5535 = vunpack.c.l.b16 %v5523
      %v5536 = vunpack.c.l.b16 %v5524
      %v5537 = vunpack.c.l.b16 %v5525
      %v5538 = vunpack.c.l.b16 %v5526
      %v5539 = vpack.c.b16 %v5536, %v5535
      %v5540 = vpack.c.b16 %v5538, %v5537
      %v5544 = vsel %vm288, %v5519, 0
      %v5547 = vsel %vm288, %v5520, 0
      %v5550 = vsel %vm288, %v5521, 0
      %v5553 = vsel %vm288, %v5522, 0
      %5555 = vmatpush.bf16.msra.mxu0 0
      %5556 = vmatpush.bf16.msra.mxu0 0
      %5557 = vmatpush.bf16.msra.mxu0 0
      %5558 = vmatpush.bf16.msra.mxu0 0
      %5559 = vmatpush.bf16.msra.mxu0 0
      %5560 = vmatpush.bf16.msra.mxu0 0
      %5561 = vmatpush.bf16.msra.mxu0 %v5540
      %5562 = vmatpush.bf16.msra.mxu0 %v5539
      %5563 = vmatmul.bf16.gmra.mxu0 %v5544
      %v5564 = vpop.f32.mrf.mxu0
      %v5565 = vadd.f32 %v5529, %v5564
      %v5566 = vpop.f32.mrf.mxu0
      %v5567 = vadd.f32 %v5529, %v5566
      %5568 = vmatmul.bf16.gmra.mxu0 %v5547
      %v5569 = vpop.f32.mrf.mxu0
      %v5570 = vadd.f32 %v5529, %v5569
      %v5571 = vpop.f32.mrf.mxu0
      %v5572 = vadd.f32 %v5529, %v5571
      %5573 = vmatmul.bf16.gmra.mxu0 %v5550
      %v5574 = vpop.f32.mrf.mxu0
      %v5575 = vadd.f32 %v5529, %v5574
      %v5576 = vpop.f32.mrf.mxu0
      %v5577 = vadd.f32 %v5529, %v5576
      %5578 = vmatmul.bf16.gmra.mxu0 %v5553
      %v5579 = vpop.f32.mrf.mxu0
      %v5580 = vadd.f32 %v5529, %v5579
      %v5581 = vpop.f32.mrf.mxu0
      %v5582 = vadd.f32 %v5529, %v5581
      %5583 = vdwg.mxu0
      %5584 = vst.msk [vmem:[%s253] sm:$0xff] %vm288, %v5565
      %5585 = vst.msk [vmem:[%s253 + $0x8] sm:$0xff] %vm288, %v5567
      %5586 = vst.msk [vmem:[%s253 + $0x10] sm:$0xff] %vm288, %v5570
      %5587 = vst.msk [vmem:[%s253 + $0x18] sm:$0xff] %vm288, %v5572
      %5588 = vst.msk [vmem:[%s253 + $0x20] sm:$0xff] %vm288, %v5575
      %5589 = vst.msk [vmem:[%s253 + $0x28] sm:$0xff] %vm288, %v5577
      %5590 = vst.msk [vmem:[%s253 + $0x30] sm:$0xff] %vm288, %v5580
      %5591 = vst.msk [vmem:[%s253 + $0x38] sm:$0xff] %vm288, %v5582
      %s5592 = smul.u32 8, %s17
      %p5593 = scmp.lt.s32.totalorder %s5592, 15
      %s5594 = scalar_select %p5593, %s5592, 15
      %s5595 = smul.addr %s5594, 8
      %s5596 = scalar_lea.vmem %s6, %s5595
      // Predicated region
      $region45: #{tpu_custom_call.1} parent=43 // pred_check
        %p5597 = pneg %p166
      $region46: #{tpu_custom_call.1} parent=43 // pred_check_branch
        %5599 = sbr.rel (%p5597) target = $region48
      $region47: #{tpu_custom_call.1} parent=43 // pred_region
        %s5600 = smul.u32 8, %s17
      $region48: #{tpu_custom_call.1} parent=43 // pred_fallthru
        _
    $region44: #{tpu_custom_call.1} parent=5 // pred_fallthru
      _
    %p5601 = scmp.le.s32.totalorder 2, %s12
    // Predicated region
    $region49: #{tpu_custom_call.1} parent=5 // pred_check
      %p5602 = pneg %p5601
    $region50: #{tpu_custom_call.1} parent=5 // pred_check_branch
      %5604 = sbr.rel (%p5602) target = $region52
    $region51: #{tpu_custom_call.1} parent=5 // pred_region
      %s5605 = ssub.s32 %s12, 2
      // Predicated region
      $region53: #{tpu_custom_call.1} parent=51 // pred_check
        %p5606 = pneg %p172
      $region54: #{tpu_custom_call.1} parent=51 // pred_check_branch
        %5608 = sbr.rel (%p5606) target = $region56
      $region55: #{tpu_custom_call.1} parent=51 // pred_region
        %s5609 = smul.u32 8, %s18
        %p5610 = scmp.lt.s32.totalorder %s5609, 15
        %s5611 = scalar_select %p5610, %s5609, 15
        %s5612 = smul.addr %s5611, 8
        %s5613 = scalar_lea.vmem %s6, %s5612
      $region56: #{tpu_custom_call.1} parent=51 // pred_fallthru
        _
    $region52: #{tpu_custom_call.1} parent=5 // pred_fallthru
      _
  $region6: #{tpu_custom_call.1} parent=0 // loop_footer
    %s16 = sadd.s32 1, %s12
  $region7: #{tpu_custom_call.1} parent=0 // loop_footer_branch
    %11 = sbr.rel target = $region3
  $region8: #{tpu_custom_call.1} parent=0 // loop_exit
    _

</llo_original>
